<compile_context>
chip_gen: v7x
topology: tpu7x:2x2x1
jax: 0.10.0
libtpu: 0.0.40
codegen_flags: <defaults>
</compile_context>

<pallas_src>
import jax
import jax.numpy as jnp
from jax.experimental import pallas as pl
from jax.experimental.pallas import tpu as pltpu


# ---------------------------------------------------------------------------
# Pallas kernels
# ---------------------------------------------------------------------------
def _layer_kernel_zc(t_ref, w_ref, b_ref, zw_ref, zb_ref, feat_ref, z_ref):
    """One (batch, M-tile, N-tile) grid step: conv3x3 + bias + SiLU + zeroconv.

    t_ref:    [1, TM, 9*Cin] bf16  im2col'd input rows (flat M = Ho*W8)
    w_ref:    [9*Cin, TN]    bf16  conv weight tile
    b_ref:    [1, TN]        f32   conv bias tile
    zw_ref:   [TN, Cout]     bf16  zeroconv weight rows for this N tile
    zb_ref:   [1, Cout]      f32   zeroconv bias (grid-invariant)
    feat_ref: [1, TM, TN]    bf16  SiLU(conv) output tile
    z_ref:    [1, TM, Cout]  f32   zeroconv output; its block index ignores the
                                   n axis, so it stays resident and accumulates
                                   across Cout tiles.
    """
    n = pl.program_id(2)
    acc = jnp.dot(t_ref[0], w_ref[...], preferred_element_type=jnp.float32)
    acc = acc + b_ref[...]                       # bias broadcast [1, TN]
    feat = acc * jax.nn.sigmoid(acc)             # SiLU (EUP)
    feat_bf = feat.astype(feat_ref.dtype)
    feat_ref[0] = feat_bf
    zpart = jnp.dot(feat_bf, zw_ref[...], preferred_element_type=jnp.float32)

    @pl.when(n == 0)
    def _():
        z_ref[0] = zb_ref[...] + zpart

    @pl.when(n != 0)
    def _():
        z_ref[0] = z_ref[0] + zpart


def _layer_kernel_nozc(t_ref, w_ref, b_ref, feat_ref):
    """Conv3x3 + bias + SiLU only (used when the 1x1 zeroconv is known-zero)."""
    acc = jnp.dot(t_ref[0], w_ref[...], preferred_element_type=jnp.float32)
    acc = acc + b_ref[...]
    feat_ref[0] = (acc * jax.nn.sigmoid(acc)).astype(feat_ref.dtype)


# ---------------------------------------------------------------------------
# XLA glue: im2col tap packing + weight packing + tiling helpers
# ---------------------------------------------------------------------------
def _round_up(x, m):
    return ((x + m - 1) // m) * m


def _pick_tile(total, target, quantum):
    """Largest divisor of `total` that is <= target and a multiple of quantum;
    falls back to `total` (no tiling) when none exists."""
    if total <= target:
        return total
    t = (min(target, total) // quantum) * quantum
    while t >= quantum:
        if total % t == 0:
            return t
        t -= quantum
    return total


def _build_taps(x_nhwc, stride):
    """Pack all 9 taps of a (3x3, pad=1, stride) conv onto the channel axis.

    Returns taps [B, Ho*W8, 9*Cin] bf16 with channel order (kh*3 + kw)*Cin + c,
    W8 = Wo rounded up to 16 so the flat M axis stays sublane-tile aligned.
    """
    B, H, W, C = x_nhwc.shape
    ho = (H - 1) // stride + 1
    wo = (W - 1) // stride + 1
    w8 = _round_up(wo, 16)
    xp = jnp.pad(x_nhwc, ((0, 0), (1, 1), (1, 1), (0, 0)))
    cols = []
    for kh in range(3):
        for kw in range(3):
            cols.append(jax.lax.slice(
                xp, (0, kh, kw, 0),
                (B, kh + stride * (ho - 1) + 1, kw + stride * (wo - 1) + 1, C),
                (1, stride, stride, 1)))                    # [B, Ho, Wo, C]
    taps = jnp.concatenate(cols, axis=-1)                   # [B, Ho, Wo, 9C]
    taps = jnp.pad(taps, ((0, 0), (0, 0), (0, w8 - wo), (0, 0)))
    taps = taps.reshape(B, ho * w8, 9 * C).astype(jnp.bfloat16)
    return taps, ho, wo, w8


def _pack_conv_weight(w_oihw):
    """OIHW [Cout, Cin, 3, 3] -> [9*Cin, Cout] bf16, (kh, kw, cin) row order."""
    cout, cin = int(w_oihw.shape[0]), int(w_oihw.shape[1])
    return (jnp.transpose(w_oihw, (2, 3, 1, 0))
            .reshape(9 * cin, cout).astype(jnp.bfloat16))


def _vmem_estimate(tm, tn, k, cout, with_zeroconv):
    """Conservative per-grid-step VMEM footprint (double-buffered blocks +
    large compute temporaries)."""
    bf, f4 = 2, 4
    est = 2 * tm * k * bf            # taps block
    est += 2 * k * tn * bf           # conv weight block
    est += 2 * tn * f4               # conv bias
    est += 2 * tm * tn * bf          # feat output block
    est += 4 * tm * tn * f4          # acc / SiLU / cast temporaries
    if with_zeroconv:
        est += 2 * tn * cout * bf    # zeroconv weight block
        est += 2 * cout * f4         # zeroconv bias
        est += 2 * tm * cout * f4    # resident z accumulator block
        est += tm * cout * f4        # zpart temporary
    return est


def _compiler_params(est_bytes, semantics):
    kwargs = dict(dimension_semantics=semantics)
    # Raise the scoped-VMEM limit only when the per-step footprint actually
    # needs it (never at the small test shapes).
    if est_bytes > (14 << 20):
        kwargs["vmem_limit_bytes"] = int(min(max(est_bytes + (8 << 20), 32 << 20),
                                             64 << 20))
    return pltpu.CompilerParams(**kwargs)


# ---------------------------------------------------------------------------
# One encoder layer = one fused pallas_call.
# ---------------------------------------------------------------------------
def encoder_layer(x_nhwc, w_oihw, bias, zw_mat, zb, stride, *, with_zeroconv=True):
    B, H, W, cin = x_nhwc.shape
    cout = int(w_oihw.shape[0])
    taps, ho, wo, w8 = _build_taps(x_nhwc, stride)          # [B, M, K] bf16
    k9 = 9 * cin
    m_total = ho * w8
    wk = _pack_conv_weight(w_oihw)                          # [K, Cout] bf16
    b2 = bias.reshape(1, cout).astype(jnp.float32)

    # Cout tile: multiples of 128 (lane / MXU friendly) or the full extent.
    tn = _pick_tile(cout, 256, 128)
    # Row tile over the flat M axis; force >= 2 tiles when B == 1 so both
    # TensorCores get work on v7x.
    tm_target = 512 if B > 1 else max(16, min(512, m_total // 2))
    tm = _pick_tile(m_total, tm_target, 16)
    # Shrink the M tile until the per-step footprint fits a ~24 MiB budget.
    while (_vmem_estimate(tm, tn, k9, cout, with_zeroconv) > (24 << 20)
           and tm > 32 and tm % 32 == 0):
        tm //= 2
    assert m_total % tm == 0 and cout % tn == 0
    nm, nn = m_total // tm, cout // tn
    est = _vmem_estimate(tm, tn, k9, cout, with_zeroconv)

    if with_zeroconv:
        zwb = zw_mat.astype(jnp.bfloat16)
        zb2 = zb.reshape(1, cout).astype(jnp.float32)
        feat, z = pl.pallas_call(
            _layer_kernel_zc,
            out_shape=(jax.ShapeDtypeStruct((B, m_total, cout), jnp.bfloat16),
                       jax.ShapeDtypeStruct((B, m_total, cout), jnp.float32)),
            grid=(B, nm, nn),
            in_specs=[
                pl.BlockSpec((1, tm, k9), lambda b, m, n: (b, m, 0)),
                pl.BlockSpec((k9, tn), lambda b, m, n: (0, n)),
                pl.BlockSpec((1, tn), lambda b, m, n: (0, n)),
                pl.BlockSpec((tn, cout), lambda b, m, n: (n, 0)),
                pl.BlockSpec((1, cout), lambda b, m, n: (0, 0)),
            ],
            out_specs=(
                pl.BlockSpec((1, tm, tn), lambda b, m, n: (b, m, n)),
                pl.BlockSpec((1, tm, cout), lambda b, m, n: (b, m, 0)),
            ),
            compiler_params=_compiler_params(
                est, ("parallel", "parallel", "arbitrary")),
        )(taps, wk, b2, zwb, zb2)
        z_nhwc = z.reshape(B, ho, w8, cout)[:, :, :wo, :]
    else:
        feat = pl.pallas_call(
            _layer_kernel_nozc,
            out_shape=jax.ShapeDtypeStruct((B, m_total, cout), jnp.bfloat16),
            grid=(B, nm, nn),
            in_specs=[
                pl.BlockSpec((1, tm, k9), lambda b, m, n: (b, m, 0)),
                pl.BlockSpec((k9, tn), lambda b, m, n: (0, n)),
                pl.BlockSpec((1, tn), lambda b, m, n: (0, n)),
            ],
            out_specs=pl.BlockSpec((1, tm, tn), lambda b, m, n: (b, m, n)),
            compiler_params=_compiler_params(
                est, ("parallel", "parallel", "parallel")),
        )(taps, wk, b2)
        # zeroconv weight is all-zero -> its output is just the bias.
        z_nhwc = jnp.broadcast_to(
            zb.astype(jnp.float32).reshape(1, 1, 1, cout), (B, ho, wo, cout))

    # TODO(synk): emit the next layer's tap layout directly from the kernel
    # epilogue (zeroing the W8 pad columns in-kernel) to drop this XLA im2col
    # glue between layers on bandwidth-bound chips.
    feat_nhwc = feat.reshape(B, ho, w8, cout)[:, :, :wo, :]
    return feat_nhwc, z_nhwc


# ---------------------------------------------------------------------------
# Module forward (mirrors DepthFeatureEncoder.forward).
# params: list of (conv_w OIHW, conv_b, zeroconv_w [cin, cout], zeroconv_b, stride)
# ---------------------------------------------------------------------------
def depth_feature_encoder_forward_with_features(params, first_frame, *,
                                                zeroconv_is_zero=False):
    x = jnp.transpose(first_frame, (0, 2, 3, 1)).astype(jnp.float32)  # NCHW->NHWC
    feats, deep = [], []
    for (w, b, zw, zb, stride) in params:
        x, z = encoder_layer(x, w, b, zw, zb, stride,
                             with_zeroconv=not zeroconv_is_zero)
        feats.append(jnp.transpose(x, (0, 3, 1, 2)))
        deep.append(jnp.transpose(z, (0, 3, 1, 2)))
    return feats, deep


def depth_feature_encoder_forward(params, first_frame, *, zeroconv_is_zero=False):
    """Returns deep_features (list of zeroconv outputs), matching the module."""
    # TODO(synk): use_zeroconv=False (nn.Identity) would return the SiLU feature
    # list instead; only the default zeroconv path is wired here.
    _, deep = depth_feature_encoder_forward_with_features(
        params, first_frame, zeroconv_is_zero=zeroconv_is_zero)
    return deep


# ---------------------------------------------------------------------------
# Pure-XLA reference (correctness check only).
# ---------------------------------------------------------------------------
def _ref_forward_with_features(params, first_frame):
    x = jnp.transpose(first_frame, (0, 2, 3, 1))
    feats, deep = [], []
    for (w, b, zw, zb, stride) in params:
        w_hwio = jnp.transpose(w, (2, 3, 1, 0))
        x = jax.lax.conv_general_dilated(
            x, w_hwio, (stride, stride), ((1, 1), (1, 1)),
            dimension_numbers=("NHWC", "HWIO", "NHWC"),
            precision=jax.lax.Precision.HIGHEST)
        x = x + b
        x = x * jax.nn.sigmoid(x)
        z = jnp.einsum("bhwc,cd->bhwd", x, zw,
                       precision=jax.lax.Precision.HIGHEST) + zb
        feats.append(jnp.transpose(x, (0, 3, 1, 2)))
        deep.append(jnp.transpose(z, (0, 3, 1, 2)))
    return feats, deep


# ---------------------------------------------------------------------------
# Parameter init (nn.Conv2d fan-in uniform; zeroconvs zeroed as in zero_module).
# ---------------------------------------------------------------------------
def init_params(key, c_in, channels, downsamples, random_zeroconv=False):
    layers = []
    for ch, down in zip(channels, downsamples):
        key, k1, k2, k3, k4 = jax.random.split(key, 5)
        bound = 1.0 / (9 * c_in) ** 0.5
        w = jax.random.uniform(k1, (ch, c_in, 3, 3), jnp.float32, -bound, bound)
        b = jax.random.uniform(k2, (ch,), jnp.float32, -bound, bound)
        if random_zeroconv:   # only to make the numeric test non-trivial
            zbound = 1.0 / ch ** 0.5
            zw = jax.random.uniform(k3, (ch, ch), jnp.float32, -zbound, zbound)
            zb = jax.random.uniform(k4, (ch,), jnp.float32, -zbound, zbound)
        else:                 # zero_module(nn.Conv2d(ch, ch, 1))
            zw = jnp.zeros((ch, ch), jnp.float32)
            zb = jnp.zeros((ch,), jnp.float32)
        layers.append((w, b, zw, zb, 2 if down else 1))
        c_in = ch
    return layers


if __name__ == "__main__":
    key = jax.random.PRNGKey(0)
    kp, kx = jax.random.split(key)

    # Small shapes consistent with the module (real defaults: c_in=320,
    # channels=[320, 640, 1280], downsamples all True).
    B, C_IN, H, W = 2, 16, 16, 16
    channels = (32, 64, 128)
    downsamples = (True, True, True)

    first_frame = jax.random.normal(kx, (B, C_IN, H, W), jnp.float32)

    # --- numerical check with random (non-zero) zeroconv weights so the fused
    #     1x1 path (with Cout-axis accumulation) is exercised meaningfully.
    test_params = init_params(kp, C_IN, channels, downsamples, random_zeroconv=True)
    pallas_fwd = jax.jit(
        lambda x: depth_feature_encoder_forward_with_features(test_params, x))
    feats, deep = pallas_fwd(first_frame)
    jax.block_until_ready((feats, deep))

    r_feats, r_deep = _ref_forward_with_features(test_params, first_frame)
    for got, ref in zip(list(feats) + list(deep), list(r_feats) + list(r_deep)):
        err = float(jnp.max(jnp.abs(got.astype(jnp.float32) - ref)))
        scale = float(jnp.max(jnp.abs(ref))) + 1.0
        assert err <= 4e-2 * scale, f"mismatch: max abs err {err} (scale {scale})"

    # --- module-faithful run: zero_module'd 1x1 convs. The gated path skips
    #     the zeroconv matmul/writeback (deep features are exactly zero).
    params = init_params(kp, C_IN, channels, downsamples, random_zeroconv=False)
    deep_features = jax.jit(
        lambda x: depth_feature_encoder_forward(params, x, zeroconv_is_zero=True)
    )(first_frame)
    jax.block_until_ready(deep_features)

    h, w = H, W
    for z, ch in zip(deep_features, channels):
        h, w = h // 2, w // 2
        assert z.shape == (B, ch, h, w), z.shape
        assert float(jnp.max(jnp.abs(z))) < 1e-6

    print("KERNEL_OK")
</pallas_src>

<mosaic_0001>
module attributes {stable_mosaic.version = 11 : i64} {
  func.func @_layer_kernel_zc(%arg0: i32, %arg1: i32, %arg2: i32, %arg3: memref<1x128x144xbf16, #tpu.memory_space<vmem>>, %arg4: memref<144x32xbf16, #tpu.memory_space<vmem>>, %arg5: memref<1x32xf32, #tpu.memory_space<vmem>>, %arg6: memref<32x32xbf16, #tpu.memory_space<vmem>>, %arg7: memref<1x32xf32, #tpu.memory_space<vmem>>, %arg8: memref<1x128x32xbf16, #tpu.memory_space<vmem>>, %arg9: memref<1x128x32xf32, #tpu.memory_space<vmem>>) attributes {dimension_semantics = [#tpu.dimension_semantics<parallel>, #tpu.dimension_semantics<parallel>, #tpu.dimension_semantics<arbitrary>], iteration_bounds = array<i64: 2, 1, 1>, scalar_prefetch = 0 : i64, scratch_operands = 0 : i64, tpu.core_type = #tpu.core_type<tc>, window_params = [{transform_indices = @transform_0, window_bounds = array<i64: 1, 128, 144>}, {transform_indices = @transform_1, window_bounds = array<i64: 144, 32>}, {transform_indices = @transform_2, window_bounds = array<i64: 1, 32>}, {transform_indices = @transform_3, window_bounds = array<i64: 32, 32>}, {pipeline_mode = #tpu.pipeline_mode<synchronous>, transform_indices = @transform_4, window_bounds = array<i64: 1, 32>}, {transform_indices = @transform_5, window_bounds = array<i64: 1, 128, 32>}, {transform_indices = @transform_6, window_bounds = array<i64: 1, 128, 32>}]} {
    %c0 = arith.constant 0 : index
    %c0_0 = arith.constant 0 : index
    %c0_1 = arith.constant 0 : index
    %0 = vector.load %arg3[%c0, %c0_0, %c0_1] : memref<1x128x144xbf16, #tpu.memory_space<vmem>>, vector<1x128x144xbf16>
    %1 = vector.shape_cast %0 : vector<1x128x144xbf16> to vector<128x144xbf16>
    %c0_2 = arith.constant 0 : index
    %c0_3 = arith.constant 0 : index
    %2 = vector.load %arg4[%c0_2, %c0_3] : memref<144x32xbf16, #tpu.memory_space<vmem>>, vector<144x32xbf16>
    %cst = arith.constant dense<0.000000e+00> : vector<128x32xf32>
    %3 = tpu.matmul %1, %2, %cst {dimension_numbers = #tpu.dot_dimension_numbers<[1], [0], [0], [1], [0, 0, 1, 1], [], []>} : vector<128x144xbf16>, vector<144x32xbf16>, vector<128x32xf32> -> vector<128x32xf32>
    %c0_4 = arith.constant 0 : index
    %c0_5 = arith.constant 0 : index
    %4 = vector.load %arg5[%c0_4, %c0_5] : memref<1x32xf32, #tpu.memory_space<vmem>>, vector<1x32xf32>
    %5 = vector.broadcast %4 : vector<1x32xf32> to vector<128x32xf32>
    %6 = arith.addf %3, %5 : vector<128x32xf32>
    %7 = arith.negf %6 : vector<128x32xf32>
    %8 = math.exp %7 : vector<128x32xf32>
    %cst_6 = arith.constant 1.000000e+00 : f32
    %9 = vector.broadcast %cst_6 : f32 to vector<128x32xf32>
    %10 = arith.addf %9, %8 : vector<128x32xf32>
    %11 = arith.divf %9, %10 : vector<128x32xf32>
    %12 = arith.mulf %6, %11 : vector<128x32xf32>
    %13 = arith.truncf %12 : vector<128x32xf32> to vector<128x32xbf16>
    %c0_7 = arith.constant 0 : index
    %c0_8 = arith.constant 0 : index
    %c0_9 = arith.constant 0 : index
    %14 = vector.load %arg8[%c0_7, %c0_8, %c0_9] : memref<1x128x32xbf16, #tpu.memory_space<vmem>>, vector<1x128x32xbf16>
    %15 = vector.shape_cast %14 : vector<1x128x32xbf16> to vector<128x32xbf16>
    %16 = vector.shape_cast %13 : vector<128x32xbf16> to vector<1x128x32xbf16>
    tpu.vector_store %arg8[%c0_7, %c0_8, %c0_9], %16 {strides = array<i32>} : memref<1x128x32xbf16, #tpu.memory_space<vmem>>, vector<1x128x32xbf16>,
    %c0_10 = arith.constant 0 : index
    %c0_11 = arith.constant 0 : index
    %17 = vector.load %arg6[%c0_10, %c0_11] : memref<32x32xbf16, #tpu.memory_space<vmem>>, vector<32x32xbf16>
    %cst_12 = arith.constant dense<0.000000e+00> : vector<128x32xf32>
    %18 = tpu.matmul %13, %17, %cst_12 {dimension_numbers = #tpu.dot_dimension_numbers<[1], [0], [0], [1], [0, 0, 1, 1], [], []>} : vector<128x32xbf16>, vector<32x32xbf16>, vector<128x32xf32> -> vector<128x32xf32>
    %c0_i32 = arith.constant 0 : i32
    %19 = arith.cmpi eq, %arg2, %c0_i32 : i32
    %20 = arith.extui %19 : i1 to i32
    %c0_i32_13 = arith.constant 0 : i32
    %21 = arith.cmpi ne, %20, %c0_i32_13 : i32
    scf.if %21 {
      %c0_16 = arith.constant 0 : index
      %c0_17 = arith.constant 0 : index
      %25 = vector.load %arg7[%c0_16, %c0_17] : memref<1x32xf32, #tpu.memory_space<vmem>>, vector<1x32xf32>
      %26 = vector.broadcast %25 : vector<1x32xf32> to vector<128x32xf32>
      %27 = arith.addf %26, %18 : vector<128x32xf32>
      %c0_18 = arith.constant 0 : index
      %c0_19 = arith.constant 0 : index
      %c0_20 = arith.constant 0 : index
      %28 = vector.load %arg9[%c0_18, %c0_19, %c0_20] : memref<1x128x32xf32, #tpu.memory_space<vmem>>, vector<1x128x32xf32>
      %29 = vector.shape_cast %28 : vector<1x128x32xf32> to vector<128x32xf32>
      %30 = vector.shape_cast %27 : vector<128x32xf32> to vector<1x128x32xf32>
      tpu.vector_store %arg9[%c0_18, %c0_19, %c0_20], %30 {strides = array<i32>} : memref<1x128x32xf32, #tpu.memory_space<vmem>>, vector<1x128x32xf32>,
    } else {
    }
    %c0_i32_14 = arith.constant 0 : i32
    %22 = arith.cmpi ne, %arg2, %c0_i32_14 : i32
    %23 = arith.extui %22 : i1 to i32
    %c0_i32_15 = arith.constant 0 : i32
    %24 = arith.cmpi ne, %23, %c0_i32_15 : i32
    scf.if %24 {
      %c0_16 = arith.constant 0 : index
      %c0_17 = arith.constant 0 : index
      %c0_18 = arith.constant 0 : index
      %25 = vector.load %arg9[%c0_16, %c0_17, %c0_18] : memref<1x128x32xf32, #tpu.memory_space<vmem>>, vector<1x128x32xf32>
      %26 = vector.shape_cast %25 : vector<1x128x32xf32> to vector<128x32xf32>
      %27 = arith.addf %26, %18 : vector<128x32xf32>
      %c0_19 = arith.constant 0 : index
      %c0_20 = arith.constant 0 : index
      %c0_21 = arith.constant 0 : index
      %28 = vector.load %arg9[%c0_19, %c0_20, %c0_21] : memref<1x128x32xf32, #tpu.memory_space<vmem>>, vector<1x128x32xf32>
      %29 = vector.shape_cast %28 : vector<1x128x32xf32> to vector<128x32xf32>
      %30 = vector.shape_cast %27 : vector<128x32xf32> to vector<1x128x32xf32>
      tpu.vector_store %arg9[%c0_19, %c0_20, %c0_21], %30 {strides = array<i32>} : memref<1x128x32xf32, #tpu.memory_space<vmem>>, vector<1x128x32xf32>,
    } else {
    }
    return
  }
  func.func @transform_0(%arg0: i32, %arg1: i32, %arg2: i32) -> (i32, i32, i32) {
    %c0_i32 = arith.constant 0 : i32
    %c0_i32_0 = arith.constant 0 : i32
    return %arg0, %arg1, %c0_i32 : i32, i32, i32
  }
  func.func @transform_1(%arg0: i32, %arg1: i32, %arg2: i32) -> (i32, i32) {
    %c0_i32 = arith.constant 0 : i32
    %c0_i32_0 = arith.constant 0 : i32
    return %c0_i32, %arg2 : i32, i32
  }
  func.func @transform_2(%arg0: i32, %arg1: i32, %arg2: i32) -> (i32, i32) {
    %c0_i32 = arith.constant 0 : i32
    %c0_i32_0 = arith.constant 0 : i32
    return %c0_i32, %arg2 : i32, i32
  }
  func.func @transform_3(%arg0: i32, %arg1: i32, %arg2: i32) -> (i32, i32) {
    %c0_i32 = arith.constant 0 : i32
    %c0_i32_0 = arith.constant 0 : i32
    return %arg2, %c0_i32 : i32, i32
  }
  func.func @transform_4(%arg0: i32, %arg1: i32, %arg2: i32) -> (i32, i32) {
    %c0_i32 = arith.constant 0 : i32
    %c0_i32_0 = arith.constant 0 : i32
    %c0_i32_1 = arith.constant 0 : i32
    return %c0_i32, %c0_i32_0 : i32, i32
  }
  func.func @transform_5(%arg0: i32, %arg1: i32, %arg2: i32) -> (i32, i32, i32) {
    %c0_i32 = arith.constant 0 : i32
    return %arg0, %arg1, %arg2 : i32, i32, i32
  }
  func.func @transform_6(%arg0: i32, %arg1: i32, %arg2: i32) -> (i32, i32, i32) {
    %c0_i32 = arith.constant 0 : i32
    %c0_i32_0 = arith.constant 0 : i32
    return %arg0, %arg1, %c0_i32 : i32, i32, i32
  }
}

module attributes {stable_mosaic.version = 11 : i64} {
  func.func @_layer_kernel_zc(%arg0: i32, %arg1: i32, %arg2: i32, %arg3: memref<1x64x288xbf16, #tpu.memory_space<vmem>>, %arg4: memref<288x64xbf16, #tpu.memory_space<vmem>>, %arg5: memref<1x64xf32, #tpu.memory_space<vmem>>, %arg6: memref<64x64xbf16, #tpu.memory_space<vmem>>, %arg7: memref<1x64xf32, #tpu.memory_space<vmem>>, %arg8: memref<1x64x64xbf16, #tpu.memory_space<vmem>>, %arg9: memref<1x64x64xf32, #tpu.memory_space<vmem>>) attributes {dimension_semantics = [#tpu.dimension_semantics<parallel>, #tpu.dimension_semantics<parallel>, #tpu.dimension_semantics<arbitrary>], iteration_bounds = array<i64: 2, 1, 1>, scalar_prefetch = 0 : i64, scratch_operands = 0 : i64, tpu.core_type = #tpu.core_type<tc>, window_params = [{transform_indices = @transform_0, window_bounds = array<i64: 1, 64, 288>}, {transform_indices = @transform_1, window_bounds = array<i64: 288, 64>}, {transform_indices = @transform_2, window_bounds = array<i64: 1, 64>}, {transform_indices = @transform_3, window_bounds = array<i64: 64, 64>}, {pipeline_mode = #tpu.pipeline_mode<synchronous>, transform_indices = @transform_4, window_bounds = array<i64: 1, 64>}, {transform_indices = @transform_5, window_bounds = array<i64: 1, 64, 64>}, {transform_indices = @transform_6, window_bounds = array<i64: 1, 64, 64>}]} {
    %c0 = arith.constant 0 : index
    %c0_0 = arith.constant 0 : index
    %c0_1 = arith.constant 0 : index
    %0 = vector.load %arg3[%c0, %c0_0, %c0_1] : memref<1x64x288xbf16, #tpu.memory_space<vmem>>, vector<1x64x288xbf16>
    %1 = vector.shape_cast %0 : vector<1x64x288xbf16> to vector<64x288xbf16>
    %c0_2 = arith.constant 0 : index
    %c0_3 = arith.constant 0 : index
    %2 = vector.load %arg4[%c0_2, %c0_3] : memref<288x64xbf16, #tpu.memory_space<vmem>>, vector<288x64xbf16>
    %cst = arith.constant dense<0.000000e+00> : vector<64x64xf32>
    %3 = tpu.matmul %1, %2, %cst {dimension_numbers = #tpu.dot_dimension_numbers<[1], [0], [0], [1], [0, 0, 1, 1], [], []>} : vector<64x288xbf16>, vector<288x64xbf16>, vector<64x64xf32> -> vector<64x64xf32>
    %c0_4 = arith.constant 0 : index
    %c0_5 = arith.constant 0 : index
    %4 = vector.load %arg5[%c0_4, %c0_5] : memref<1x64xf32, #tpu.memory_space<vmem>>, vector<1x64xf32>
    %5 = vector.broadcast %4 : vector<1x64xf32> to vector<64x64xf32>
    %6 = arith.addf %3, %5 : vector<64x64xf32>
    %7 = arith.negf %6 : vector<64x64xf32>
    %8 = math.exp %7 : vector<64x64xf32>
    %cst_6 = arith.constant 1.000000e+00 : f32
    %9 = vector.broadcast %cst_6 : f32 to vector<64x64xf32>
    %10 = arith.addf %9, %8 : vector<64x64xf32>
    %11 = arith.divf %9, %10 : vector<64x64xf32>
    %12 = arith.mulf %6, %11 : vector<64x64xf32>
    %13 = arith.truncf %12 : vector<64x64xf32> to vector<64x64xbf16>
    %c0_7 = arith.constant 0 : index
    %c0_8 = arith.constant 0 : index
    %c0_9 = arith.constant 0 : index
    %14 = vector.load %arg8[%c0_7, %c0_8, %c0_9] : memref<1x64x64xbf16, #tpu.memory_space<vmem>>, vector<1x64x64xbf16>
    %15 = vector.shape_cast %14 : vector<1x64x64xbf16> to vector<64x64xbf16>
    %16 = vector.shape_cast %13 : vector<64x64xbf16> to vector<1x64x64xbf16>
    tpu.vector_store %arg8[%c0_7, %c0_8, %c0_9], %16 {strides = array<i32>} : memref<1x64x64xbf16, #tpu.memory_space<vmem>>, vector<1x64x64xbf16>,
    %c0_10 = arith.constant 0 : index
    %c0_11 = arith.constant 0 : index
    %17 = vector.load %arg6[%c0_10, %c0_11] : memref<64x64xbf16, #tpu.memory_space<vmem>>, vector<64x64xbf16>
    %cst_12 = arith.constant dense<0.000000e+00> : vector<64x64xf32>
    %18 = tpu.matmul %13, %17, %cst_12 {dimension_numbers = #tpu.dot_dimension_numbers<[1], [0], [0], [1], [0, 0, 1, 1], [], []>} : vector<64x64xbf16>, vector<64x64xbf16>, vector<64x64xf32> -> vector<64x64xf32>
    %c0_i32 = arith.constant 0 : i32
    %19 = arith.cmpi eq, %arg2, %c0_i32 : i32
    %20 = arith.extui %19 : i1 to i32
    %c0_i32_13 = arith.constant 0 : i32
    %21 = arith.cmpi ne, %20, %c0_i32_13 : i32
    scf.if %21 {
      %c0_16 = arith.constant 0 : index
      %c0_17 = arith.constant 0 : index
      %25 = vector.load %arg7[%c0_16, %c0_17] : memref<1x64xf32, #tpu.memory_space<vmem>>, vector<1x64xf32>
      %26 = vector.broadcast %25 : vector<1x64xf32> to vector<64x64xf32>
      %27 = arith.addf %26, %18 : vector<64x64xf32>
      %c0_18 = arith.constant 0 : index
      %c0_19 = arith.constant 0 : index
      %c0_20 = arith.constant 0 : index
      %28 = vector.load %arg9[%c0_18, %c0_19, %c0_20] : memref<1x64x64xf32, #tpu.memory_space<vmem>>, vector<1x64x64xf32>
      %29 = vector.shape_cast %28 : vector<1x64x64xf32> to vector<64x64xf32>
      %30 = vector.shape_cast %27 : vector<64x64xf32> to vector<1x64x64xf32>
      tpu.vector_store %arg9[%c0_18, %c0_19, %c0_20], %30 {strides = array<i32>} : memref<1x64x64xf32, #tpu.memory_space<vmem>>, vector<1x64x64xf32>,
    } else {
    }
    %c0_i32_14 = arith.constant 0 : i32
    %22 = arith.cmpi ne, %arg2, %c0_i32_14 : i32
    %23 = arith.extui %22 : i1 to i32
    %c0_i32_15 = arith.constant 0 : i32
    %24 = arith.cmpi ne, %23, %c0_i32_15 : i32
    scf.if %24 {
      %c0_16 = arith.constant 0 : index
      %c0_17 = arith.constant 0 : index
      %c0_18 = arith.constant 0 : index
      %25 = vector.load %arg9[%c0_16, %c0_17, %c0_18] : memref<1x64x64xf32, #tpu.memory_space<vmem>>, vector<1x64x64xf32>
      %26 = vector.shape_cast %25 : vector<1x64x64xf32> to vector<64x64xf32>
      %27 = arith.addf %26, %18 : vector<64x64xf32>
      %c0_19 = arith.constant 0 : index
      %c0_20 = arith.constant 0 : index
      %c0_21 = arith.constant 0 : index
      %28 = vector.load %arg9[%c0_19, %c0_20, %c0_21] : memref<1x64x64xf32, #tpu.memory_space<vmem>>, vector<1x64x64xf32>
      %29 = vector.shape_cast %28 : vector<1x64x64xf32> to vector<64x64xf32>
      %30 = vector.shape_cast %27 : vector<64x64xf32> to vector<1x64x64xf32>
      tpu.vector_store %arg9[%c0_19, %c0_20, %c0_21], %30 {strides = array<i32>} : memref<1x64x64xf32, #tpu.memory_space<vmem>>, vector<1x64x64xf32>,
    } else {
    }
    return
  }
  func.func @transform_0(%arg0: i32, %arg1: i32, %arg2: i32) -> (i32, i32, i32) {
    %c0_i32 = arith.constant 0 : i32
    %c0_i32_0 = arith.constant 0 : i32
    return %arg0, %arg1, %c0_i32 : i32, i32, i32
  }
  func.func @transform_1(%arg0: i32, %arg1: i32, %arg2: i32) -> (i32, i32) {
    %c0_i32 = arith.constant 0 : i32
    %c0_i32_0 = arith.constant 0 : i32
    return %c0_i32, %arg2 : i32, i32
  }
  func.func @transform_2(%arg0: i32, %arg1: i32, %arg2: i32) -> (i32, i32) {
    %c0_i32 = arith.constant 0 : i32
    %c0_i32_0 = arith.constant 0 : i32
    return %c0_i32, %arg2 : i32, i32
  }
  func.func @transform_3(%arg0: i32, %arg1: i32, %arg2: i32) -> (i32, i32) {
    %c0_i32 = arith.constant 0 : i32
    %c0_i32_0 = arith.constant 0 : i32
    return %arg2, %c0_i32 : i32, i32
  }
  func.func @transform_4(%arg0: i32, %arg1: i32, %arg2: i32) -> (i32, i32) {
    %c0_i32 = arith.constant 0 : i32
    %c0_i32_0 = arith.constant 0 : i32
    %c0_i32_1 = arith.constant 0 : i32
    return %c0_i32, %c0_i32_0 : i32, i32
  }
  func.func @transform_5(%arg0: i32, %arg1: i32, %arg2: i32) -> (i32, i32, i32) {
    %c0_i32 = arith.constant 0 : i32
    return %arg0, %arg1, %arg2 : i32, i32, i32
  }
  func.func @transform_6(%arg0: i32, %arg1: i32, %arg2: i32) -> (i32, i32, i32) {
    %c0_i32 = arith.constant 0 : i32
    %c0_i32_0 = arith.constant 0 : i32
    return %arg0, %arg1, %c0_i32 : i32, i32, i32
  }
}

module attributes {stable_mosaic.version = 11 : i64} {
  func.func @_layer_kernel_zc(%arg0: i32, %arg1: i32, %arg2: i32, %arg3: memref<1x32x576xbf16, #tpu.memory_space<vmem>>, %arg4: memref<576x128xbf16, #tpu.memory_space<vmem>>, %arg5: memref<1x128xf32, #tpu.memory_space<vmem>>, %arg6: memref<128x128xbf16, #tpu.memory_space<vmem>>, %arg7: memref<1x128xf32, #tpu.memory_space<vmem>>, %arg8: memref<1x32x128xbf16, #tpu.memory_space<vmem>>, %arg9: memref<1x32x128xf32, #tpu.memory_space<vmem>>) attributes {dimension_semantics = [#tpu.dimension_semantics<parallel>, #tpu.dimension_semantics<parallel>, #tpu.dimension_semantics<arbitrary>], iteration_bounds = array<i64: 2, 1, 1>, scalar_prefetch = 0 : i64, scratch_operands = 0 : i64, tpu.core_type = #tpu.core_type<tc>, window_params = [{transform_indices = @transform_0, window_bounds = array<i64: 1, 32, 576>}, {transform_indices = @transform_1, window_bounds = array<i64: 576, 128>}, {transform_indices = @transform_2, window_bounds = array<i64: 1, 128>}, {transform_indices = @transform_3, window_bounds = array<i64: 128, 128>}, {pipeline_mode = #tpu.pipeline_mode<synchronous>, transform_indices = @transform_4, window_bounds = array<i64: 1, 128>}, {transform_indices = @transform_5, window_bounds = array<i64: 1, 32, 128>}, {transform_indices = @transform_6, window_bounds = array<i64: 1, 32, 128>}]} {
    %c0 = arith.constant 0 : index
    %c0_0 = arith.constant 0 : index
    %c0_1 = arith.constant 0 : index
    %0 = vector.load %arg3[%c0, %c0_0, %c0_1] : memref<1x32x576xbf16, #tpu.memory_space<vmem>>, vector<1x32x576xbf16>
    %1 = vector.shape_cast %0 : vector<1x32x576xbf16> to vector<32x576xbf16>
    %c0_2 = arith.constant 0 : index
    %c0_3 = arith.constant 0 : index
    %2 = vector.load %arg4[%c0_2, %c0_3] : memref<576x128xbf16, #tpu.memory_space<vmem>>, vector<576x128xbf16>
    %cst = arith.constant dense<0.000000e+00> : vector<32x128xf32>
    %3 = tpu.matmul %1, %2, %cst {dimension_numbers = #tpu.dot_dimension_numbers<[1], [0], [0], [1], [0, 0, 1, 1], [], []>} : vector<32x576xbf16>, vector<576x128xbf16>, vector<32x128xf32> -> vector<32x128xf32>
    %c0_4 = arith.constant 0 : index
    %c0_5 = arith.constant 0 : index
    %4 = vector.load %arg5[%c0_4, %c0_5] : memref<1x128xf32, #tpu.memory_space<vmem>>, vector<1x128xf32>
    %5 = vector.broadcast %4 : vector<1x128xf32> to vector<32x128xf32>
    %6 = arith.addf %3, %5 : vector<32x128xf32>
    %7 = arith.negf %6 : vector<32x128xf32>
    %8 = math.exp %7 : vector<32x128xf32>
    %cst_6 = arith.constant 1.000000e+00 : f32
    %9 = vector.broadcast %cst_6 : f32 to vector<32x128xf32>
    %10 = arith.addf %9, %8 : vector<32x128xf32>
    %11 = arith.divf %9, %10 : vector<32x128xf32>
    %12 = arith.mulf %6, %11 : vector<32x128xf32>
    %13 = arith.truncf %12 : vector<32x128xf32> to vector<32x128xbf16>
    %c0_7 = arith.constant 0 : index
    %c0_8 = arith.constant 0 : index
    %c0_9 = arith.constant 0 : index
    %14 = vector.load %arg8[%c0_7, %c0_8, %c0_9] : memref<1x32x128xbf16, #tpu.memory_space<vmem>>, vector<1x32x128xbf16>
    %15 = vector.shape_cast %14 : vector<1x32x128xbf16> to vector<32x128xbf16>
    %16 = vector.shape_cast %13 : vector<32x128xbf16> to vector<1x32x128xbf16>
    tpu.vector_store %arg8[%c0_7, %c0_8, %c0_9], %16 {strides = array<i32>} : memref<1x32x128xbf16, #tpu.memory_space<vmem>>, vector<1x32x128xbf16>,
    %c0_10 = arith.constant 0 : index
    %c0_11 = arith.constant 0 : index
    %17 = vector.load %arg6[%c0_10, %c0_11] : memref<128x128xbf16, #tpu.memory_space<vmem>>, vector<128x128xbf16>
    %cst_12 = arith.constant dense<0.000000e+00> : vector<32x128xf32>
    %18 = tpu.matmul %13, %17, %cst_12 {dimension_numbers = #tpu.dot_dimension_numbers<[1], [0], [0], [1], [0, 0, 1, 1], [], []>} : vector<32x128xbf16>, vector<128x128xbf16>, vector<32x128xf32> -> vector<32x128xf32>
    %c0_i32 = arith.constant 0 : i32
    %19 = arith.cmpi eq, %arg2, %c0_i32 : i32
    %20 = arith.extui %19 : i1 to i32
    %c0_i32_13 = arith.constant 0 : i32
    %21 = arith.cmpi ne, %20, %c0_i32_13 : i32
    scf.if %21 {
      %c0_16 = arith.constant 0 : index
      %c0_17 = arith.constant 0 : index
      %25 = vector.load %arg7[%c0_16, %c0_17] : memref<1x128xf32, #tpu.memory_space<vmem>>, vector<1x128xf32>
      %26 = vector.broadcast %25 : vector<1x128xf32> to vector<32x128xf32>
      %27 = arith.addf %26, %18 : vector<32x128xf32>
      %c0_18 = arith.constant 0 : index
      %c0_19 = arith.constant 0 : index
      %c0_20 = arith.constant 0 : index
      %28 = vector.load %arg9[%c0_18, %c0_19, %c0_20] : memref<1x32x128xf32, #tpu.memory_space<vmem>>, vector<1x32x128xf32>
      %29 = vector.shape_cast %28 : vector<1x32x128xf32> to vector<32x128xf32>
      %30 = vector.shape_cast %27 : vector<32x128xf32> to vector<1x32x128xf32>
      tpu.vector_store %arg9[%c0_18, %c0_19, %c0_20], %30 {strides = array<i32>} : memref<1x32x128xf32, #tpu.memory_space<vmem>>, vector<1x32x128xf32>,
    } else {
    }
    %c0_i32_14 = arith.constant 0 : i32
    %22 = arith.cmpi ne, %arg2, %c0_i32_14 : i32
    %23 = arith.extui %22 : i1 to i32
    %c0_i32_15 = arith.constant 0 : i32
    %24 = arith.cmpi ne, %23, %c0_i32_15 : i32
    scf.if %24 {
      %c0_16 = arith.constant 0 : index
      %c0_17 = arith.constant 0 : index
      %c0_18 = arith.constant 0 : index
      %25 = vector.load %arg9[%c0_16, %c0_17, %c0_18] : memref<1x32x128xf32, #tpu.memory_space<vmem>>, vector<1x32x128xf32>
      %26 = vector.shape_cast %25 : vector<1x32x128xf32> to vector<32x128xf32>
      %27 = arith.addf %26, %18 : vector<32x128xf32>
      %c0_19 = arith.constant 0 : index
      %c0_20 = arith.constant 0 : index
      %c0_21 = arith.constant 0 : index
      %28 = vector.load %arg9[%c0_19, %c0_20, %c0_21] : memref<1x32x128xf32, #tpu.memory_space<vmem>>, vector<1x32x128xf32>
      %29 = vector.shape_cast %28 : vector<1x32x128xf32> to vector<32x128xf32>
      %30 = vector.shape_cast %27 : vector<32x128xf32> to vector<1x32x128xf32>
      tpu.vector_store %arg9[%c0_19, %c0_20, %c0_21], %30 {strides = array<i32>} : memref<1x32x128xf32, #tpu.memory_space<vmem>>, vector<1x32x128xf32>,
    } else {
    }
    return
  }
  func.func @transform_0(%arg0: i32, %arg1: i32, %arg2: i32) -> (i32, i32, i32) {
    %c0_i32 = arith.constant 0 : i32
    %c0_i32_0 = arith.constant 0 : i32
    return %arg0, %arg1, %c0_i32 : i32, i32, i32
  }
  func.func @transform_1(%arg0: i32, %arg1: i32, %arg2: i32) -> (i32, i32) {
    %c0_i32 = arith.constant 0 : i32
    %c0_i32_0 = arith.constant 0 : i32
    return %c0_i32, %arg2 : i32, i32
  }
  func.func @transform_2(%arg0: i32, %arg1: i32, %arg2: i32) -> (i32, i32) {
    %c0_i32 = arith.constant 0 : i32
    %c0_i32_0 = arith.constant 0 : i32
    return %c0_i32, %arg2 : i32, i32
  }
  func.func @transform_3(%arg0: i32, %arg1: i32, %arg2: i32) -> (i32, i32) {
    %c0_i32 = arith.constant 0 : i32
    %c0_i32_0 = arith.constant 0 : i32
    return %arg2, %c0_i32 : i32, i32
  }
  func.func @transform_4(%arg0: i32, %arg1: i32, %arg2: i32) -> (i32, i32) {
    %c0_i32 = arith.constant 0 : i32
    %c0_i32_0 = arith.constant 0 : i32
    %c0_i32_1 = arith.constant 0 : i32
    return %c0_i32, %c0_i32_0 : i32, i32
  }
  func.func @transform_5(%arg0: i32, %arg1: i32, %arg2: i32) -> (i32, i32, i32) {
    %c0_i32 = arith.constant 0 : i32
    return %arg0, %arg1, %arg2 : i32, i32, i32
  }
  func.func @transform_6(%arg0: i32, %arg1: i32, %arg2: i32) -> (i32, i32, i32) {
    %c0_i32 = arith.constant 0 : i32
    %c0_i32_0 = arith.constant 0 : i32
    return %arg0, %arg1, %c0_i32 : i32, i32, i32
  }
}

</mosaic_0001>

<llo_original>
// kernel: _lambda_.3
$region0: #{_lambda_.3}
  #allocation0 [shape = 'u32[]', space=smem, size = 0x4, offset = 0x4, fixed_abs, tag = 'smem constant byte address 0x4 - core index']
  #allocation1 [shape = 'u32[144,128]{1,0:T(1,128)}', space=vmem, size = 0x12000, scoped, tag = 'internal scratch']
  %s0 = inlined_call_operand.vmem [shape: bf16[2,128,144], index: 0, kind: input, shape index: {}]
  %s1 = inlined_call_operand.vmem [shape: bf16[144,32], index: 1, kind: input, shape index: {}]
  %s2 = inlined_call_operand.vmem [shape: f32[1,32], index: 2, kind: input, shape index: {}]
  %s3 = inlined_call_operand.vmem [shape: bf16[32,32], index: 3, kind: input, shape index: {}]
  %s4 = inlined_call_operand.vmem [shape: f32[1,32], index: 4, kind: input, shape index: {}]
  %s5 = inlined_call_operand.vmem [shape: bf16[2,128,32], index: 5, kind: output, shape index: {0}]
  %s6 = inlined_call_operand.vmem [shape: f32[2,128,32], index: 6, kind: output, shape index: {1}]
  %7 = xla_tuple %s5, %s6
  %s8 = sld [smem:[#allocation0]]
  $region69: #{_lambda_.3} parent=0
    _
  %s10 = ssub.s32 1, %s8
  %s11 = scalar_select 0, %s10, %s8
  loop: start=0, step=1, limit=4
  $region2: #{_lambda_.3} parent=0 // loop_pre_header
    _
  $region3: #{_lambda_.3} parent=0 // loop_header
    %s13 = sphi 0, %s17
    %p14 = scmp.ge.s32.totalorder %s13, 4
    %s20 = sphi 0, %s39
    %s21 = sphi 0, %s35
    %s22 = sphi 0, %s31
    %s23 = sphi 0, %s20
    %s24 = sphi 0, %s21
    %s25 = sphi 0, %s22
    %s26 = sphi 0, %s23
    %s27 = sphi 0, %s24
    %s28 = sphi 0, %s25
    %s44 = sphi 0, %s46
    %s47 = sphi 0, %s44
    %s48 = sphi 0, %s47
    %s64 = sphi 0, %s48
    %s70 = sphi 0, %s72
    %s73 = sphi 0, %s70
    %s74 = sphi 0, %s73
    %s90 = sphi 0, %s74
    %s96 = sphi 0, %s98
    %s99 = sphi 0, %s96
    %s100 = sphi 0, %s99
    %s116 = sphi 0, %s100
    %s122 = sphi 0, %s124
    %s125 = sphi 0, %s122
    %s126 = sphi 0, %s125
    %s142 = sphi 0, %s126
    %s146 = sphi 0, %s146
    %s148 = sphi 0, %s146
    %s149 = sphi 0, %s148
    %s163 = sphi 0, %s149
    %s173 = sphi 0, %s175
    %s176 = sphi 0, %s173
    %s177 = sphi 0, %s176
    %s193 = sphi 0, %s177
    %s201 = sphi 0, %s203
    %s204 = sphi 0, %s201
    %s205 = sphi 0, %s204
    %s221 = sphi 0, %s205
  $region4: #{_lambda_.3} parent=0 // loop_header_branch
    %16 = sbr.rel (%p14) target = $region8
  $region5: #{_lambda_.3} parent=0 // loop_body
    %s18 = ssub.s32 %s13, 1
    %s19 = ssub.s32 %s13, 2
    %s29 = sadd.s32 1, %s22
    %p30 = scmp.ge.s32.totalorder %s29, 1
    %s31 = scalar_select %p30, 0, %s29
    %s32 = sadd.s32 1, %s21
    %s33 = scalar_select %p30, %s32, %s21
    %p34 = scmp.ge.s32.totalorder %s33, 1
    %s35 = scalar_select %p34, 0, %s33
    %s36 = sadd.s32 1, %s20
    %s37 = scalar_select %p34, %s36, %s20
    %p38 = scmp.ge.s32.totalorder %s37, 2
    %s39 = scalar_select %p38, 0, %s37
    %s40 = ssub.s32 %s20, %s39
    %s41 = ssub.s32 %s21, %s35
    %s42 = sor.u32 %s40, %s41
    %p43 = scmp.eq.s32.totalorder %s42, 0
    %s45 = sadd.s32 %s44, 1
    %s46 = scalar_select %p43, %s44, %s45
    %p49 = pneg %p43
    %p50 = scmp.eq.s32.totalorder %s13, 1
    %p51 = por %p49, %p50
    %p52 = scmp.ne.s32.totalorder %s44, %s47
    %p53 = scmp.eq.s32.totalorder %s13, 0
    %p54 = por %p52, %p53
    %p55 = scmp.ne.s32.totalorder %s44, %s47
    %p56 = scmp.eq.s32.totalorder %s18, 1
    %p57 = por %p55, %p56
    %p58 = scmp.ne.s32.totalorder %s47, %s48
    %p59 = scmp.eq.s32.totalorder %s18, 0
    %p60 = por %p58, %p59
    %p61 = scmp.ne.s32.totalorder %s47, %s48
    %p62 = scmp.eq.s32.totalorder %s19, 1
    %p63 = por %p61, %p62
    %p65 = scmp.ne.s32.totalorder %s48, %s64
    %p66 = scmp.eq.s32.totalorder %s19, 0
    %p67 = por %p65, %p66
    %s68 = ssub.s32 %s22, %s31
    %p69 = scmp.eq.s32.totalorder %s68, 0
    %s71 = sadd.s32 %s70, 1
    %s72 = scalar_select %p69, %s70, %s71
    %p75 = pneg %p69
    %p76 = scmp.eq.s32.totalorder %s13, 1
    %p77 = por %p75, %p76
    %p78 = scmp.ne.s32.totalorder %s70, %s73
    %p79 = scmp.eq.s32.totalorder %s13, 0
    %p80 = por %p78, %p79
    %p81 = scmp.ne.s32.totalorder %s70, %s73
    %p82 = scmp.eq.s32.totalorder %s18, 1
    %p83 = por %p81, %p82
    %p84 = scmp.ne.s32.totalorder %s73, %s74
    %p85 = scmp.eq.s32.totalorder %s18, 0
    %p86 = por %p84, %p85
    %p87 = scmp.ne.s32.totalorder %s73, %s74
    %p88 = scmp.eq.s32.totalorder %s19, 1
    %p89 = por %p87, %p88
    %p91 = scmp.ne.s32.totalorder %s74, %s90
    %p92 = scmp.eq.s32.totalorder %s19, 0
    %p93 = por %p91, %p92
    %s94 = ssub.s32 %s22, %s31
    %p95 = scmp.eq.s32.totalorder %s94, 0
    %s97 = sadd.s32 %s96, 1
    %s98 = scalar_select %p95, %s96, %s97
    %p101 = pneg %p95
    %p102 = scmp.eq.s32.totalorder %s13, 1
    %p103 = por %p101, %p102
    %p104 = scmp.ne.s32.totalorder %s96, %s99
    %p105 = scmp.eq.s32.totalorder %s13, 0
    %p106 = por %p104, %p105
    %p107 = scmp.ne.s32.totalorder %s96, %s99
    %p108 = scmp.eq.s32.totalorder %s18, 1
    %p109 = por %p107, %p108
    %p110 = scmp.ne.s32.totalorder %s99, %s100
    %p111 = scmp.eq.s32.totalorder %s18, 0
    %p112 = por %p110, %p111
    %p113 = scmp.ne.s32.totalorder %s99, %s100
    %p114 = scmp.eq.s32.totalorder %s19, 1
    %p115 = por %p113, %p114
    %p117 = scmp.ne.s32.totalorder %s100, %s116
    %p118 = scmp.eq.s32.totalorder %s19, 0
    %p119 = por %p117, %p118
    %s120 = ssub.s32 %s22, %s31
    %p121 = scmp.eq.s32.totalorder %s120, 0
    %s123 = sadd.s32 %s122, 1
    %s124 = scalar_select %p121, %s122, %s123
    %p127 = pneg %p121
    %p128 = scmp.eq.s32.totalorder %s13, 1
    %p129 = por %p127, %p128
    %p130 = scmp.ne.s32.totalorder %s122, %s125
    %p131 = scmp.eq.s32.totalorder %s13, 0
    %p132 = por %p130, %p131
    %p133 = scmp.ne.s32.totalorder %s122, %s125
    %p134 = scmp.eq.s32.totalorder %s18, 1
    %p135 = por %p133, %p134
    %p136 = scmp.ne.s32.totalorder %s125, %s126
    %p137 = scmp.eq.s32.totalorder %s18, 0
    %p138 = por %p136, %p137
    %p139 = scmp.ne.s32.totalorder %s125, %s126
    %p140 = scmp.eq.s32.totalorder %s19, 1
    %p141 = por %p139, %p140
    %p143 = scmp.ne.s32.totalorder %s126, %s142
    %p144 = scmp.eq.s32.totalorder %s19, 0
    %p145 = por %p143, %p144
    %s147 = sadd.s32 %s146, 1
    %p150 = scmp.eq.s32.totalorder %s13, 1
    %p151 = scmp.ne.s32.totalorder %s146, %s148
    %p152 = scmp.eq.s32.totalorder %s13, 0
    %p153 = por %p151, %p152
    %p154 = scmp.ne.s32.totalorder %s146, %s148
    %p155 = scmp.eq.s32.totalorder %s18, 1
    %p156 = por %p154, %p155
    %p157 = scmp.ne.s32.totalorder %s148, %s149
    %p158 = scmp.eq.s32.totalorder %s18, 0
    %p159 = por %p157, %p158
    %p160 = scmp.ne.s32.totalorder %s148, %s149
    %p161 = scmp.eq.s32.totalorder %s19, 1
    %p162 = por %p160, %p161
    %p164 = scmp.ne.s32.totalorder %s149, %s163
    %p165 = scmp.eq.s32.totalorder %s19, 0
    %p166 = por %p164, %p165
    %s167 = ssub.s32 %s20, %s39
    %s168 = ssub.s32 %s21, %s35
    %s169 = sor.u32 %s167, %s168
    %s170 = ssub.s32 %s22, %s31
    %s171 = sor.u32 %s169, %s170
    %p172 = scmp.eq.s32.totalorder %s171, 0
    %s174 = sadd.s32 %s173, 1
    %s175 = scalar_select %p172, %s173, %s174
    %p178 = pneg %p172
    %p179 = scmp.eq.s32.totalorder %s13, 1
    %p180 = por %p178, %p179
    %p181 = scmp.ne.s32.totalorder %s173, %s176
    %p182 = scmp.eq.s32.totalorder %s13, 0
    %p183 = por %p181, %p182
    %p184 = scmp.ne.s32.totalorder %s173, %s176
    %p185 = scmp.eq.s32.totalorder %s18, 1
    %p186 = por %p184, %p185
    %p187 = scmp.ne.s32.totalorder %s176, %s177
    %p188 = scmp.eq.s32.totalorder %s18, 0
    %p189 = por %p187, %p188
    %p190 = scmp.ne.s32.totalorder %s176, %s177
    %p191 = scmp.eq.s32.totalorder %s19, 1
    %p192 = por %p190, %p191
    %p194 = scmp.ne.s32.totalorder %s177, %s193
    %p195 = scmp.eq.s32.totalorder %s19, 0
    %p196 = por %p194, %p195
    %s197 = ssub.s32 %s20, %s39
    %s198 = ssub.s32 %s21, %s35
    %s199 = sor.u32 %s197, %s198
    %p200 = scmp.eq.s32.totalorder %s199, 0
    %s202 = sadd.s32 %s201, 1
    %s203 = scalar_select %p200, %s201, %s202
    %p206 = pneg %p200
    %p207 = scmp.eq.s32.totalorder %s13, 1
    %p208 = por %p206, %p207
    %p209 = scmp.ne.s32.totalorder %s201, %s204
    %p210 = scmp.eq.s32.totalorder %s13, 0
    %p211 = por %p209, %p210
    %p212 = scmp.ne.s32.totalorder %s201, %s204
    %p213 = scmp.eq.s32.totalorder %s18, 1
    %p214 = por %p212, %p213
    %p215 = scmp.ne.s32.totalorder %s204, %s205
    %p216 = scmp.eq.s32.totalorder %s18, 0
    %p217 = por %p215, %p216
    %p218 = scmp.ne.s32.totalorder %s204, %s205
    %p219 = scmp.eq.s32.totalorder %s19, 1
    %p220 = por %p218, %p219
    %p222 = scmp.ne.s32.totalorder %s205, %s221
    %p223 = scmp.eq.s32.totalorder %s19, 0
    %p224 = por %p222, %p223
    %p225 = scmp.le.s32.totalorder 1, %s13
    %p226 = scmp.lt.s32.totalorder %s13, 3
    %p227 = pnand %p225, %p226
    %p228 = pneg %p227
    // Predicated region
    $region9: #{_lambda_.3} parent=5 // pred_check
      _
    $region10: #{_lambda_.3} parent=5 // pred_check_branch
      %230 = sbr.rel (%p227) target = $region12
    $region11: #{_lambda_.3} parent=5 // pred_region
      %s231 = ssub.s32 %s13, 1
      // Predicated region
      $region13: #{_lambda_.3} parent=11 // pred_check
        %p232 = pneg %p86
      $region14: #{_lambda_.3} parent=11 // pred_check_branch
        %234 = sbr.rel (%p232) target = $region16
      $region15: #{_lambda_.3} parent=11 // pred_region
        %p235 = scmp.lt.s32.totalorder %s25, 0
        %s236 = scalar_select %p235, %s25, 0
        %s237 = smul.addr %s236, 4
        %s238 = scalar_lea.vmem %s1, %s237
      $region16: #{_lambda_.3} parent=11 // pred_fallthru
        _
      // Predicated region
      $region17: #{_lambda_.3} parent=11 // pred_check
        %p239 = pneg %p112
      $region18: #{_lambda_.3} parent=11 // pred_check_branch
        %241 = sbr.rel (%p239) target = $region20
      $region19: #{_lambda_.3} parent=11 // pred_region
        %p242 = scmp.lt.s32.totalorder %s25, 0
        %s243 = scalar_select %p242, %s25, 0
        %s244 = scalar_lea.vmem %s2, %s243
      $region20: #{_lambda_.3} parent=11 // pred_fallthru
        _
      // Predicated region
      $region21: #{_lambda_.3} parent=11 // pred_check
        %p245 = pneg %p138
      $region22: #{_lambda_.3} parent=11 // pred_check_branch
        %247 = sbr.rel (%p245) target = $region24
      $region23: #{_lambda_.3} parent=11 // pred_region
        %s248 = smul.u32 4, %s25
        %p249 = scmp.lt.s32.totalorder %s248, 3
        %s250 = scalar_select %p249, %s248, 3
        %s251 = smul.addr %s250, 4
        %s252 = scalar_lea.vmem %s3, %s251
        %s253 = smul.u32 4, %s25
      $region24: #{_lambda_.3} parent=11 // pred_fallthru
        _
      // Predicated region
      $region25: #{_lambda_.3} parent=11 // pred_check
        %p254 = pneg %p159
      $region26: #{_lambda_.3} parent=11 // pred_check_branch
        %256 = sbr.rel (%p254) target = $region28
      $region27: #{_lambda_.3} parent=11 // pred_region
        _
      $region28: #{_lambda_.3} parent=11 // pred_fallthru
        _
    $region12: #{_lambda_.3} parent=5 // pred_fallthru
      _
    %p257 = scmp.lt.s32.totalorder %s13, 2
    // Predicated region
    $region29: #{_lambda_.3} parent=5 // pred_check
      %p258 = pneg %p257
    $region30: #{_lambda_.3} parent=5 // pred_check_branch
      %260 = sbr.rel (%p258) target = $region32
    $region31: #{_lambda_.3} parent=5 // pred_region
      // Predicated region
      $region33: #{_lambda_.3} parent=31 // pred_check
        %p261 = pneg %p54
      $region34: #{_lambda_.3} parent=31 // pred_check_branch
        %263 = sbr.rel (%p261) target = $region36
      $region35: #{_lambda_.3} parent=31 // pred_region
        %s264 = smul.u32 16, %s21
        %p265 = scmp.lt.s32.totalorder %s20, 1
        %s266 = scalar_select %p265, %s20, 1
        %p267 = scmp.lt.s32.totalorder %s264, 15
        %s268 = scalar_select %p267, %s264, 15
        %s269 = smul.addr %s268, 2
        %s270 = smul.addr %s266, 32
        %s271 = sadd.s32 %s269, %s270
        %s272 = smul.addr %s271, 4
        %s273 = scalar_lea.vmem %s0, %s272
        %s274 = smul.u32 16, %s21
      $region36: #{_lambda_.3} parent=31 // pred_fallthru
        _
    $region32: #{_lambda_.3} parent=5 // pred_fallthru
      _
    %p275 = scmp.le.s32.totalorder 1, %s13
    %p276 = scmp.lt.s32.totalorder %s13, 3
    %p277 = pnand %p275, %p276
    %p278 = pneg %p277
    // Predicated region
    $region37: #{_lambda_.3} parent=5 // pred_check
      _
    $region38: #{_lambda_.3} parent=5 // pred_check_branch
      %280 = sbr.rel (%p277) target = $region40
    $region39: #{_lambda_.3} parent=5 // pred_region
      %s281 = ssub.s32 %s13, 1
      %s282 = smul.u32 16, %s24
      %p283 = scmp.lt.s32.totalorder %s23, 1
      %s284 = scalar_select %p283, %s23, 1
      %p285 = scmp.lt.s32.totalorder %s282, 15
      %s286 = scalar_select %p285, %s282, 15
      %s287 = smul.addr %s286, 2
      %s288 = smul.addr %s284, 32
      %s289 = sadd.s32 %s287, %s288
      %s290 = smul.addr %s289, 4
      %s291 = scalar_lea.vmem %s0, %s290
      %p292 = pneg %p60
      %p293 = pneg %p57
      %p294 = scmp.lt.s32.totalorder %s25, 0
      %s295 = scalar_select %p294, %s25, 0
      %s296 = smul.addr %s295, 4
      %s297 = scalar_lea.vmem %s1, %s296
      %p298 = pneg %p86
      %p299 = pneg %p83
      %p300 = scmp.lt.s32.totalorder %s25, 0
      %s301 = scalar_select %p300, %s25, 0
      %s302 = scalar_lea.vmem %s2, %s301
      %p303 = pneg %p112
      %p304 = pneg %p109
      %s305 = smul.u32 4, %s25
      %p306 = scmp.lt.s32.totalorder %s305, 3
      %s307 = scalar_select %p306, %s305, 3
      %s308 = smul.addr %s307, 4
      %s309 = scalar_lea.vmem %s3, %s308
      %p310 = pneg %p138
      %p311 = pneg %p135
      %p312 = pneg %p159
      %p313 = pneg %p156
      %p314 = pneg %p189
      %p315 = pneg %p186
      %s316 = smul.u32 16, %s24
      %p317 = scmp.lt.s32.totalorder %s23, 1
      %s318 = scalar_select %p317, %s23, 1
      %p319 = scmp.lt.s32.totalorder %s316, 15
      %s320 = scalar_select %p319, %s316, 15
      %p321 = scmp.lt.s32.totalorder %s25, 0
      %s322 = scalar_select %p321, %s25, 0
      %s323 = sadd.s32 %s322, %s320
      %s324 = smul.addr %s318, 16
      %s325 = sadd.s32 %s323, %s324
      %s326 = smul.addr %s325, 4
      %s327 = scalar_lea.vmem %s5, %s326
      %p328 = pneg %p217
      %p329 = pneg %p214
      %s330 = smul.u32 16, %s24
      %p331 = scmp.lt.s32.totalorder %s23, 1
      %s332 = scalar_select %p331, %s23, 1
      %p333 = scmp.lt.s32.totalorder %s330, 15
      %s334 = scalar_select %p333, %s330, 15
      %s335 = smul.addr %s332, 16
      %s336 = sadd.s32 %s334, %s335
      %s337 = smul.addr %s336, 8
      %s338 = scalar_lea.vmem %s6, %s337
      %s339 = smul.u32 16, %s24
      %p340 = scmp.lt.s32.totalorder %s23, 1
      %s341 = scalar_select %p340, %s23, 1
      %p342 = scmp.lt.s32.totalorder %s339, 15
      %s343 = scalar_select %p342, %s339, 15
      %s344 = smul.addr %s343, 2
      %s345 = smul.addr %s341, 32
      %s346 = sadd.s32 %s344, %s345
      %s347 = smul.addr %s346, 4
      %s348 = scalar_lea.vmem %s0, %s347
      %s349 = smul.u32 16, %s24
      %p350 = scmp.lt.s32.totalorder %s25, 0
      %s351 = scalar_select %p350, %s25, 0
      %s352 = smul.addr %s351, 4
      %s353 = scalar_lea.vmem %s1, %s352
      %p354 = scmp.lt.s32.totalorder %s25, 0
      %s355 = scalar_select %p354, %s25, 0
      %s356 = scalar_lea.vmem %s2, %s355
      %s357 = smul.u32 4, %s25
      %p358 = scmp.lt.s32.totalorder %s357, 3
      %s359 = scalar_select %p358, %s357, 3
      %s360 = smul.addr %s359, 4
      %s361 = scalar_lea.vmem %s3, %s360
      %s362 = smul.u32 4, %s25
      %s363 = smul.u32 16, %s24
      %p364 = scmp.lt.s32.totalorder %s23, 1
      %s365 = scalar_select %p364, %s23, 1
      %p366 = scmp.lt.s32.totalorder %s363, 15
      %s367 = scalar_select %p366, %s363, 15
      %p368 = scmp.lt.s32.totalorder %s25, 0
      %s369 = scalar_select %p368, %s25, 0
      %s370 = sadd.s32 %s369, %s367
      %s371 = smul.addr %s365, 16
      %s372 = sadd.s32 %s370, %s371
      %s373 = smul.addr %s372, 4
      %s374 = scalar_lea.vmem %s5, %s373
      %s375 = smul.u32 16, %s24
      %s376 = smul.u32 16, %s24
      %p377 = scmp.lt.s32.totalorder %s23, 1
      %s378 = scalar_select %p377, %s23, 1
      %p379 = scmp.lt.s32.totalorder %s376, 15
      %s380 = scalar_select %p379, %s376, 15
      %s381 = smul.addr %s378, 16
      %s382 = sadd.s32 %s380, %s381
      %s383 = smul.addr %s382, 8
      %s384 = scalar_lea.vmem %s6, %s383
      %s385 = smul.u32 16, %s24
      %v387 = vld [vmem:[%s348] sm:$0xff]
      %v388 = vld [vmem:[%s348 + $0x8] sm:$0xff]
      %v389 = vld [vmem:[%s348 + $0x10] sm:$0xff]
      %v390 = vld [vmem:[%s348 + $0x18] sm:$0xff]
      %v391 = vld [vmem:[%s348 + $0x20] sm:$0xff]
      %v392 = vld [vmem:[%s348 + $0x28] sm:$0xff]
      %v393 = vld [vmem:[%s348 + $0x30] sm:$0xff]
      %v394 = vld [vmem:[%s348 + $0x38] sm:$0xff]
      %v395 = vld [vmem:[%s348 + $0x40] sm:$0xff]
      %v396 = vld [vmem:[%s348 + $0x48] sm:$0xff]
      %v397 = vld [vmem:[%s348 + $0x50] sm:$0xff]
      %v398 = vld [vmem:[%s348 + $0x58] sm:$0xff]
      %v399 = vld [vmem:[%s348 + $0x60] sm:$0xff]
      %v400 = vld [vmem:[%s348 + $0x68] sm:$0xff]
      %v401 = vld [vmem:[%s348 + $0x70] sm:$0xff]
      %v402 = vld [vmem:[%s348 + $0x78] sm:$0xff]
      %v403 = vld [vmem:[%s353] sm:$0xf]
      %v404 = vld [vmem:[%s353 + $0x4] sm:$0xf]
      %v405 = vld [vmem:[%s353 + $0x8] sm:$0xf]
      %v406 = vld [vmem:[%s353 + $0xc] sm:$0xf]
      %v407 = vld [vmem:[%s353 + $0x10] sm:$0xf]
      %v408 = vld [vmem:[%s353 + $0x14] sm:$0xf]
      %v409 = vld [vmem:[%s353 + $0x18] sm:$0xf]
      %v410 = vld [vmem:[%s353 + $0x1c] sm:$0xf]
      %v411 = vld [vmem:[%s353 + $0x20] sm:$0xf]
      %v412 = vld [vmem:[%s353 + $0x24] sm:$0xf]
      %v413 = vld [vmem:[%s353 + $0x28] sm:$0xf]
      %v414 = vld [vmem:[%s353 + $0x2c] sm:$0xf]
      %v415 = vld [vmem:[%s353 + $0x30] sm:$0xf]
      %v416 = vld [vmem:[%s353 + $0x34] sm:$0xf]
      %v417 = vld [vmem:[%s353 + $0x38] sm:$0xf]
      %v418 = vld [vmem:[%s353 + $0x3c] sm:$0xf]
      %v419 = vld [vmem:[%s353 + $0x40] sm:$0xf]
      %v420 = vld [vmem:[%s353 + $0x44] sm:$0xf]
      %v421 = vld [vmem:[%s356] sm:$0x1]
      %v423 = vlaneseq
      %v424 = vshrl.u32 %v423, 7
      %v425 = vsub.s32 0, %v424
      %v426 = vrot.slane %v421, %v425
      %v444 = vunpack.c.l.b16 %v387
      %v445 = vunpack.c.h.b16 %v387
      %v446 = vunpack.c.l.b16 %v388
      %v447 = vunpack.c.h.b16 %v388
      %v448 = vunpack.c.l.b16 %v389
      %v449 = vunpack.c.h.b16 %v389
      %v450 = vunpack.c.l.b16 %v390
      %v451 = vunpack.c.h.b16 %v390
      %v452 = vunpack.c.l.b16 %v391
      %v453 = vunpack.c.h.b16 %v391
      %v454 = vunpack.c.l.b16 %v392
      %v455 = vunpack.c.h.b16 %v392
      %v456 = vunpack.c.l.b16 %v393
      %v457 = vunpack.c.h.b16 %v393
      %v458 = vunpack.c.l.b16 %v394
      %v459 = vunpack.c.h.b16 %v394
      %v460 = vunpack.c.l.b16 %v395
      %v461 = vunpack.c.h.b16 %v395
      %v462 = vunpack.c.l.b16 %v396
      %v463 = vunpack.c.h.b16 %v396
      %v464 = vunpack.c.l.b16 %v397
      %v465 = vunpack.c.h.b16 %v397
      %v466 = vunpack.c.l.b16 %v398
      %v467 = vunpack.c.h.b16 %v398
      %v468 = vunpack.c.l.b16 %v399
      %v469 = vunpack.c.h.b16 %v399
      %v470 = vunpack.c.l.b16 %v400
      %v471 = vunpack.c.h.b16 %v400
      %v472 = vunpack.c.l.b16 %v401
      %v473 = vunpack.c.h.b16 %v401
      %v474 = vunpack.c.l.b16 %v402
      %v475 = vunpack.c.h.b16 %v402
      %v476 = vpack.c.b16 %v446, %v444
      %v477 = vpack.c.b16 %v447, %v445
      %v478 = vpack.c.b16 %v450, %v448
      %v479 = vpack.c.b16 %v451, %v449
      %v480 = vpack.c.b16 %v454, %v452
      %v481 = vpack.c.b16 %v455, %v453
      %v482 = vpack.c.b16 %v458, %v456
      %v483 = vpack.c.b16 %v459, %v457
      %v484 = vpack.c.b16 %v462, %v460
      %v485 = vpack.c.b16 %v463, %v461
      %v486 = vpack.c.b16 %v466, %v464
      %v487 = vpack.c.b16 %v467, %v465
      %v488 = vpack.c.b16 %v470, %v468
      %v489 = vpack.c.b16 %v471, %v469
      %v490 = vpack.c.b16 %v474, %v472
      %v491 = vpack.c.b16 %v475, %v473
      %v518 = vunpack.c.l.b16 %v403
      %v519 = vunpack.c.l.b16 %v404
      %v520 = vunpack.c.l.b16 %v405
      %v521 = vunpack.c.l.b16 %v406
      %v522 = vunpack.c.l.b16 %v407
      %v523 = vunpack.c.l.b16 %v408
      %v524 = vunpack.c.l.b16 %v409
      %v525 = vunpack.c.l.b16 %v410
      %v526 = vunpack.c.l.b16 %v411
      %v527 = vunpack.c.l.b16 %v412
      %v528 = vunpack.c.l.b16 %v413
      %v529 = vunpack.c.l.b16 %v414
      %v530 = vunpack.c.l.b16 %v415
      %v531 = vunpack.c.l.b16 %v416
      %v532 = vunpack.c.l.b16 %v417
      %v533 = vunpack.c.l.b16 %v418
      %v534 = vunpack.c.l.b16 %v419
      %v535 = vunpack.c.l.b16 %v420
      %v536 = vpack.c.b16 %v519, %v518
      %v537 = vpack.c.b16 %v521, %v520
      %v538 = vpack.c.b16 %v523, %v522
      %v539 = vpack.c.b16 %v525, %v524
      %v540 = vpack.c.b16 %v527, %v526
      %v541 = vpack.c.b16 %v529, %v528
      %v542 = vpack.c.b16 %v531, %v530
      %v543 = vpack.c.b16 %v533, %v532
      %v544 = vpack.c.b16 %v535, %v534
      %vm554 = vcmask 130048
      %v556 = vsel %vm554, %v477, 0
      %v559 = vsel %vm554, %v479, 0
      %v562 = vsel %vm554, %v481, 0
      %v565 = vsel %vm554, %v483, 0
      %v568 = vsel %vm554, %v485, 0
      %v571 = vsel %vm554, %v487, 0
      %v574 = vsel %vm554, %v489, 0
      %v577 = vsel %vm554, %v491, 0
      %579 = vmatprep.subr.bf16.mxu0 0
      %580 = vmatpush1.bf16.msra.mxu0 %v536
      %581 = vmatprep.subr.bf16.mxu0 0
      %582 = vmatpush1.bf16.msra.mxu0 %v537
      %583 = vmatprep.subr.bf16.mxu0 0
      %584 = vmatpush1.bf16.msra.mxu0 %v538
      %585 = vmatprep.subr.bf16.mxu0 0
      %586 = vmatpush1.bf16.msra.mxu0 %v539
      %587 = vmatprep.subr.bf16.mxu0 0
      %588 = vmatpush1.bf16.msra.mxu0 %v540
      %589 = vmatprep.subr.bf16.mxu0 0
      %590 = vmatpush1.bf16.msra.mxu0 %v541
      %591 = vmatprep.subr.bf16.mxu0 0
      %592 = vmatpush1.bf16.msra.mxu0 %v542
      %593 = vmatprep.subr.bf16.mxu0 0
      %594 = vmatpush1.bf16.msra.mxu0 %v543
      %595 = vmatprep.subr.bf16.mxu0 0
      %596 = vmatpush1.bf16.msra.mxu0 %v544
      %597 = vmatprep.subr.bf16.mxu0 0
      %598 = vmatpush1.bf16.msra.mxu0 0
      %599 = vmatprep.subr.bf16.mxu0 0
      %600 = vmatpush1.bf16.msra.mxu0 0
      %601 = vmatprep.subr.bf16.mxu0 0
      %602 = vmatpush1.bf16.msra.mxu0 0
      %603 = vmatprep.subr.bf16.mxu0 0
      %604 = vmatpush1.bf16.msra.mxu0 0
      %605 = vmatprep.subr.bf16.mxu0 0
      %606 = vmatpush1.bf16.msra.mxu0 0
      %607 = vmatprep.subr.bf16.mxu0 0
      %608 = vmatpush1.bf16.msra.mxu0 0
      %609 = vmatprep.subr.bf16.mxu0 0
      %610 = vmatpush1.bf16.msra.mxu0 0
      %611 = vmatprep.mubr.bf16.mxu0 %v556
      %612 = vmatmul.mubr.bf16.gmra.mrb[0].mxu0 %v476
      %v613 = vpop.f32.mrb[0].mxu0
      %v614 = vadd.f32 %v426, %v613
      %v615 = vpop.f32.mrb[0].mxu0
      %v616 = vpop.f32.mrb[0].mxu0
      %v617 = vadd.f32 %v426, %v616
      %v618 = vpop.f32.mrb[0].mxu0
      %619 = vmatprep.mubr.bf16.mxu0 %v559
      %620 = vmatmul.mubr.bf16.gmra.mrb[0].mxu0 %v478
      %v621 = vpop.f32.mrb[0].mxu0
      %v622 = vadd.f32 %v426, %v621
      %v623 = vpop.f32.mrb[0].mxu0
      %v624 = vpop.f32.mrb[0].mxu0
      %v625 = vadd.f32 %v426, %v624
      %v626 = vpop.f32.mrb[0].mxu0
      %627 = vmatprep.mubr.bf16.mxu0 %v562
      %628 = vmatmul.mubr.bf16.gmra.mrb[0].mxu0 %v480
      %v629 = vpop.f32.mrb[0].mxu0
      %v630 = vadd.f32 %v426, %v629
      %v631 = vpop.f32.mrb[0].mxu0
      %v632 = vpop.f32.mrb[0].mxu0
      %v633 = vadd.f32 %v426, %v632
      %v634 = vpop.f32.mrb[0].mxu0
      %635 = vmatprep.mubr.bf16.mxu0 %v565
      %636 = vmatmul.mubr.bf16.gmra.mrb[0].mxu0 %v482
      %v637 = vpop.f32.mrb[0].mxu0
      %v638 = vadd.f32 %v426, %v637
      %v639 = vpop.f32.mrb[0].mxu0
      %v640 = vpop.f32.mrb[0].mxu0
      %v641 = vadd.f32 %v426, %v640
      %v642 = vpop.f32.mrb[0].mxu0
      %643 = vmatprep.mubr.bf16.mxu0 %v568
      %644 = vmatmul.mubr.bf16.gmra.mrb[0].mxu0 %v484
      %v645 = vpop.f32.mrb[0].mxu0
      %v646 = vadd.f32 %v426, %v645
      %v647 = vpop.f32.mrb[0].mxu0
      %v648 = vpop.f32.mrb[0].mxu0
      %v649 = vadd.f32 %v426, %v648
      %v650 = vpop.f32.mrb[0].mxu0
      %651 = vmatprep.mubr.bf16.mxu0 %v571
      %652 = vmatmul.mubr.bf16.gmra.mrb[0].mxu0 %v486
      %v653 = vpop.f32.mrb[0].mxu0
      %v654 = vadd.f32 %v426, %v653
      %v655 = vpop.f32.mrb[0].mxu0
      %v656 = vpop.f32.mrb[0].mxu0
      %v657 = vadd.f32 %v426, %v656
      %v658 = vpop.f32.mrb[0].mxu0
      %659 = vmatprep.mubr.bf16.mxu0 %v574
      %660 = vmatmul.mubr.bf16.gmra.mrb[0].mxu0 %v488
      %v661 = vpop.f32.mrb[0].mxu0
      %v662 = vadd.f32 %v426, %v661
      %v663 = vpop.f32.mrb[0].mxu0
      %v664 = vpop.f32.mrb[0].mxu0
      %v665 = vadd.f32 %v426, %v664
      %v666 = vpop.f32.mrb[0].mxu0
      %667 = vmatprep.mubr.bf16.mxu0 %v577
      %668 = vmatmul.mubr.bf16.gmra.mrb[0].mxu0 %v490
      %v669 = vpop.f32.mrb[0].mxu0
      %v670 = vadd.f32 %v426, %v669
      %v671 = vpop.f32.mrb[0].mxu0
      %v672 = vpop.f32.mrb[0].mxu0
      %v673 = vadd.f32 %v426, %v672
      %v674 = vpop.f32.mrb[0].mxu0
      %675 = vdwg.mxu0
      %v676 = vxor.u32 %v614, 2147483648
      %v677 = vxor.u32 %v617, 2147483648
      %v678 = vxor.u32 %v622, 2147483648
      %v679 = vxor.u32 %v625, 2147483648
      %v680 = vxor.u32 %v630, 2147483648
      %v681 = vxor.u32 %v633, 2147483648
      %v682 = vxor.u32 %v638, 2147483648
      %v683 = vxor.u32 %v641, 2147483648
      %v684 = vxor.u32 %v646, 2147483648
      %v685 = vxor.u32 %v649, 2147483648
      %v686 = vxor.u32 %v654, 2147483648
      %v687 = vxor.u32 %v657, 2147483648
      %v688 = vxor.u32 %v662, 2147483648
      %v689 = vxor.u32 %v665, 2147483648
      %v690 = vxor.u32 %v670, 2147483648
      %v691 = vxor.u32 %v673, 2147483648
      %v692 = vmul.f32 %v676, 1.442695
      %v693 = vpow.pop %v692
      %v694 = vmul.f32 %v677, 1.442695
      %v695 = vpow.pop %v694
      %v696 = vmul.f32 %v678, 1.442695
      %v697 = vpow.pop %v696
      %v698 = vmul.f32 %v679, 1.442695
      %v699 = vpow.pop %v698
      %v700 = vmul.f32 %v680, 1.442695
      %v701 = vpow.pop %v700
      %v702 = vmul.f32 %v681, 1.442695
      %v703 = vpow.pop %v702
      %v704 = vmul.f32 %v682, 1.442695
      %v705 = vpow.pop %v704
      %v706 = vmul.f32 %v683, 1.442695
      %v707 = vpow.pop %v706
      %v708 = vmul.f32 %v684, 1.442695
      %v709 = vpow.pop %v708
      %v710 = vmul.f32 %v685, 1.442695
      %v711 = vpow.pop %v710
      %v712 = vmul.f32 %v686, 1.442695
      %v713 = vpow.pop %v712
      %v714 = vmul.f32 %v687, 1.442695
      %v715 = vpow.pop %v714
      %v716 = vmul.f32 %v688, 1.442695
      %v717 = vpow.pop %v716
      %v718 = vmul.f32 %v689, 1.442695
      %v719 = vpow.pop %v718
      %v720 = vmul.f32 %v690, 1.442695
      %v721 = vpow.pop %v720
      %v722 = vmul.f32 %v691, 1.442695
      %v723 = vpow.pop %v722
      %v724 = vadd.f32 %v693, 1.0
      %v725 = vadd.f32 %v695, 1.0
      %v726 = vadd.f32 %v697, 1.0
      %v727 = vadd.f32 %v699, 1.0
      %v728 = vadd.f32 %v701, 1.0
      %v729 = vadd.f32 %v703, 1.0
      %v730 = vadd.f32 %v705, 1.0
      %v731 = vadd.f32 %v707, 1.0
      %v732 = vadd.f32 %v709, 1.0
      %v733 = vadd.f32 %v711, 1.0
      %v734 = vadd.f32 %v713, 1.0
      %v735 = vadd.f32 %v715, 1.0
      %v736 = vadd.f32 %v717, 1.0
      %v737 = vadd.f32 %v719, 1.0
      %v738 = vadd.f32 %v721, 1.0
      %v739 = vadd.f32 %v723, 1.0
      %v740 = vrcp.pop %v724
      %v741 = vmul.f32 1.0, %v740
      %v742 = vrcp.pop %v725
      %v743 = vmul.f32 1.0, %v742
      %v744 = vrcp.pop %v726
      %v745 = vmul.f32 1.0, %v744
      %v746 = vrcp.pop %v727
      %v747 = vmul.f32 1.0, %v746
      %v748 = vrcp.pop %v728
      %v749 = vmul.f32 1.0, %v748
      %v750 = vrcp.pop %v729
      %v751 = vmul.f32 1.0, %v750
      %v752 = vrcp.pop %v730
      %v753 = vmul.f32 1.0, %v752
      %v754 = vrcp.pop %v731
      %v755 = vmul.f32 1.0, %v754
      %v756 = vrcp.pop %v732
      %v757 = vmul.f32 1.0, %v756
      %v758 = vrcp.pop %v733
      %v759 = vmul.f32 1.0, %v758
      %v760 = vrcp.pop %v734
      %v761 = vmul.f32 1.0, %v760
      %v762 = vrcp.pop %v735
      %v763 = vmul.f32 1.0, %v762
      %v764 = vrcp.pop %v736
      %v765 = vmul.f32 1.0, %v764
      %v766 = vrcp.pop %v737
      %v767 = vmul.f32 1.0, %v766
      %v768 = vrcp.pop %v738
      %v769 = vmul.f32 1.0, %v768
      %v770 = vrcp.pop %v739
      %v771 = vmul.f32 1.0, %v770
      %v772 = vmul.f32 %v614, %v741
      %v773 = vmul.f32 %v617, %v743
      %v774 = vmul.f32 %v622, %v745
      %v775 = vmul.f32 %v625, %v747
      %v776 = vmul.f32 %v630, %v749
      %v777 = vmul.f32 %v633, %v751
      %v778 = vmul.f32 %v638, %v753
      %v779 = vmul.f32 %v641, %v755
      %v780 = vmul.f32 %v646, %v757
      %v781 = vmul.f32 %v649, %v759
      %v782 = vmul.f32 %v654, %v761
      %v783 = vmul.f32 %v657, %v763
      %v784 = vmul.f32 %v662, %v765
      %v785 = vmul.f32 %v665, %v767
      %v786 = vmul.f32 %v670, %v769
      %v787 = vmul.f32 %v673, %v771
      %v788 = vpack.c.bf16 %v773, %v772
      %v789 = vpack.c.bf16 %v775, %v774
      %v790 = vpack.c.bf16 %v777, %v776
      %v791 = vpack.c.bf16 %v779, %v778
      %v792 = vpack.c.bf16 %v781, %v780
      %v793 = vpack.c.bf16 %v783, %v782
      %v794 = vpack.c.bf16 %v785, %v784
      %v795 = vpack.c.bf16 %v787, %v786
      %v804 = vunpack.c.l.b16 %v788
      %v805 = vunpack.c.h.b16 %v788
      %v806 = vunpack.c.l.b16 %v789
      %v807 = vunpack.c.h.b16 %v789
      %v808 = vunpack.c.l.b16 %v790
      %v809 = vunpack.c.h.b16 %v790
      %v810 = vunpack.c.l.b16 %v791
      %v811 = vunpack.c.h.b16 %v791
      %v812 = vunpack.c.l.b16 %v792
      %v813 = vunpack.c.h.b16 %v792
      %v814 = vunpack.c.l.b16 %v793
      %v815 = vunpack.c.h.b16 %v793
      %v816 = vunpack.c.l.b16 %v794
      %v817 = vunpack.c.h.b16 %v794
      %v818 = vunpack.c.l.b16 %v795
      %v819 = vunpack.c.h.b16 %v795
      %v820 = vpack.c.b16 %v804, %v804
      %v821 = vpack.c.b16 %v805, %v805
      %v822 = vpack.c.b16 %v806, %v806
      %v823 = vpack.c.b16 %v807, %v807
      %v824 = vpack.c.b16 %v808, %v808
      %v825 = vpack.c.b16 %v809, %v809
      %v826 = vpack.c.b16 %v810, %v810
      %v827 = vpack.c.b16 %v811, %v811
      %v828 = vpack.c.b16 %v812, %v812
      %v829 = vpack.c.b16 %v813, %v813
      %v830 = vpack.c.b16 %v814, %v814
      %v831 = vpack.c.b16 %v815, %v815
      %v832 = vpack.c.b16 %v816, %v816
      %v833 = vpack.c.b16 %v817, %v817
      %v834 = vpack.c.b16 %v818, %v818
      %v835 = vpack.c.b16 %v819, %v819
      %vm852 = vcmask 257024
      %853 = vst.msk [vmem:[%s374] sm:$0xf] %vm852, %v820
      %854 = vst.msk [vmem:[%s374 + $0x4] sm:$0xf] %vm852, %v821
      %855 = vst.msk [vmem:[%s374 + $0x8] sm:$0xf] %vm852, %v822
      %856 = vst.msk [vmem:[%s374 + $0xc] sm:$0xf] %vm852, %v823
      %857 = vst.msk [vmem:[%s374 + $0x10] sm:$0xf] %vm852, %v824
      %858 = vst.msk [vmem:[%s374 + $0x14] sm:$0xf] %vm852, %v825
      %859 = vst.msk [vmem:[%s374 + $0x18] sm:$0xf] %vm852, %v826
      %860 = vst.msk [vmem:[%s374 + $0x1c] sm:$0xf] %vm852, %v827
      %861 = vst.msk [vmem:[%s374 + $0x20] sm:$0xf] %vm852, %v828
      %862 = vst.msk [vmem:[%s374 + $0x24] sm:$0xf] %vm852, %v829
      %863 = vst.msk [vmem:[%s374 + $0x28] sm:$0xf] %vm852, %v830
      %864 = vst.msk [vmem:[%s374 + $0x2c] sm:$0xf] %vm852, %v831
      %865 = vst.msk [vmem:[%s374 + $0x30] sm:$0xf] %vm852, %v832
      %866 = vst.msk [vmem:[%s374 + $0x34] sm:$0xf] %vm852, %v833
      %867 = vst.msk [vmem:[%s374 + $0x38] sm:$0xf] %vm852, %v834
      %868 = vst.msk [vmem:[%s374 + $0x3c] sm:$0xf] %vm852, %v835
      %v869 = vld [vmem:[%s361] sm:$0xf]
      %v870 = vld [vmem:[%s361 + $0x4] sm:$0xf]
      %v871 = vld [vmem:[%s361 + $0x8] sm:$0xf]
      %v872 = vld [vmem:[%s361 + $0xc] sm:$0xf]
      %v877 = vunpack.c.l.b16 %v869
      %v878 = vunpack.c.l.b16 %v870
      %v879 = vunpack.c.l.b16 %v871
      %v880 = vunpack.c.l.b16 %v872
      %v881 = vpack.c.b16 %v878, %v877
      %v882 = vpack.c.b16 %v880, %v879
      %vm885 = vcmask 261120
      %v887 = vsel %vm885, %v788, 0
      %v890 = vsel %vm885, %v789, 0
      %v893 = vsel %vm885, %v790, 0
      %v896 = vsel %vm885, %v791, 0
      %v899 = vsel %vm885, %v792, 0
      %v902 = vsel %vm885, %v793, 0
      %v905 = vsel %vm885, %v794, 0
      %v908 = vsel %vm885, %v795, 0
      %910 = vmatprep.subr.bf16.mxu0 0
      %911 = vmatpush1.bf16.msra.mxu0 %v881
      %912 = vmatprep.subr.bf16.mxu0 0
      %913 = vmatpush1.bf16.msra.mxu0 %v882
      %914 = vmatprep.subr.bf16.mxu0 0
      %915 = vmatpush1.bf16.msra.mxu0 0
      %916 = vmatprep.subr.bf16.mxu0 0
      %917 = vmatpush1.bf16.msra.mxu0 0
      %918 = vmatprep.subr.bf16.mxu0 0
      %919 = vmatpush1.bf16.msra.mxu0 0
      %920 = vmatprep.subr.bf16.mxu0 0
      %921 = vmatpush1.bf16.msra.mxu0 0
      %922 = vmatprep.subr.bf16.mxu0 0
      %923 = vmatpush1.bf16.msra.mxu0 0
      %924 = vmatprep.subr.bf16.mxu0 0
      %925 = vmatpush1.bf16.msra.mxu0 0
      %926 = vmatprep.subr.bf16.mxu0 0
      %927 = vmatpush1.bf16.msra.mxu0 0
      %928 = vmatprep.subr.bf16.mxu0 0
      %929 = vmatpush1.bf16.msra.mxu0 0
      %930 = vmatprep.subr.bf16.mxu0 0
      %931 = vmatpush1.bf16.msra.mxu0 0
      %932 = vmatprep.subr.bf16.mxu0 0
      %933 = vmatpush1.bf16.msra.mxu0 0
      %934 = vmatprep.subr.bf16.mxu0 0
      %935 = vmatpush1.bf16.msra.mxu0 0
      %936 = vmatprep.subr.bf16.mxu0 0
      %937 = vmatpush1.bf16.msra.mxu0 0
      %938 = vmatprep.subr.bf16.mxu0 0
      %939 = vmatpush1.bf16.msra.mxu0 0
      %940 = vmatprep.subr.bf16.mxu0 0
      %941 = vmatpush1.bf16.msra.mxu0 0
      %942 = vmatprep.mubr.bf16.mxu0 0
      %943 = vmatmul.mubr.bf16.gmra.mrb[0].mxu0 %v887
      %v944 = vpop.f32.mrb[0].mxu0
      %v945 = vadd.f32 0.0, %v944
      %v946 = vpop.f32.mrb[0].mxu0
      %v947 = vpop.f32.mrb[0].mxu0
      %v948 = vadd.f32 0.0, %v947
      %v949 = vpop.f32.mrb[0].mxu0
      %950 = vmatprep.mubr.bf16.mxu0 0
      %951 = vmatmul.mubr.bf16.gmra.mrb[0].mxu0 %v890
      %v952 = vpop.f32.mrb[0].mxu0
      %v953 = vadd.f32 0.0, %v952
      %v954 = vpop.f32.mrb[0].mxu0
      %v955 = vpop.f32.mrb[0].mxu0
      %v956 = vadd.f32 0.0, %v955
      %v957 = vpop.f32.mrb[0].mxu0
      %958 = vmatprep.mubr.bf16.mxu0 0
      %959 = vmatmul.mubr.bf16.gmra.mrb[0].mxu0 %v893
      %v960 = vpop.f32.mrb[0].mxu0
      %v961 = vadd.f32 0.0, %v960
      %v962 = vpop.f32.mrb[0].mxu0
      %v963 = vpop.f32.mrb[0].mxu0
      %v964 = vadd.f32 0.0, %v963
      %v965 = vpop.f32.mrb[0].mxu0
      %966 = vmatprep.mubr.bf16.mxu0 0
      %967 = vmatmul.mubr.bf16.gmra.mrb[0].mxu0 %v896
      %v968 = vpop.f32.mrb[0].mxu0
      %v969 = vadd.f32 0.0, %v968
      %v970 = vpop.f32.mrb[0].mxu0
      %v971 = vpop.f32.mrb[0].mxu0
      %v972 = vadd.f32 0.0, %v971
      %v973 = vpop.f32.mrb[0].mxu0
      %974 = vmatprep.mubr.bf16.mxu0 0
      %975 = vmatmul.mubr.bf16.gmra.mrb[0].mxu0 %v899
      %v976 = vpop.f32.mrb[0].mxu0
      %v977 = vadd.f32 0.0, %v976
      %v978 = vpop.f32.mrb[0].mxu0
      %v979 = vpop.f32.mrb[0].mxu0
      %v980 = vadd.f32 0.0, %v979
      %v981 = vpop.f32.mrb[0].mxu0
      %982 = vmatprep.mubr.bf16.mxu0 0
      %983 = vmatmul.mubr.bf16.gmra.mrb[0].mxu0 %v902
      %v984 = vpop.f32.mrb[0].mxu0
      %v985 = vadd.f32 0.0, %v984
      %v986 = vpop.f32.mrb[0].mxu0
      %v987 = vpop.f32.mrb[0].mxu0
      %v988 = vadd.f32 0.0, %v987
      %v989 = vpop.f32.mrb[0].mxu0
      %990 = vmatprep.mubr.bf16.mxu0 0
      %991 = vmatmul.mubr.bf16.gmra.mrb[0].mxu0 %v905
      %v992 = vpop.f32.mrb[0].mxu0
      %v993 = vadd.f32 0.0, %v992
      %v994 = vpop.f32.mrb[0].mxu0
      %v995 = vpop.f32.mrb[0].mxu0
      %v996 = vadd.f32 0.0, %v995
      %v997 = vpop.f32.mrb[0].mxu0
      %998 = vmatprep.mubr.bf16.mxu0 0
      %999 = vmatmul.mubr.bf16.gmra.mrb[0].mxu0 %v908
      %v1000 = vpop.f32.mrb[0].mxu0
      %v1001 = vadd.f32 0.0, %v1000
      %v1002 = vpop.f32.mrb[0].mxu0
      %v1003 = vpop.f32.mrb[0].mxu0
      %v1004 = vadd.f32 0.0, %v1003
      %v1005 = vpop.f32.mrb[0].mxu0
      %1006 = vdwg.mxu0
      %p1007 = scmp.eq.s32.totalorder %s25, 0
      // Predicated region
      $region41: #{_lambda_.3} parent=39 // pred_check
        %p1008 = pneg %p1007
      $region42: #{_lambda_.3} parent=39 // pred_check_branch
        %1010 = sbr.rel (%p1008) target = $region44
      $region43: #{_lambda_.3} parent=39 // pred_region
        %v1011 = vld [vmem:[%s4] sm:$0x1]
        %v1013 = vlaneseq
        %v1014 = vshrl.u32 %v1013, 7
        %v1015 = vsub.s32 0, %v1014
        %v1016 = vrot.slane %v1011, %v1015
        %v1018 = vadd.f32 %v1016, %v945
        %v1019 = vadd.f32 %v1016, %v948
        %v1020 = vadd.f32 %v1016, %v953
        %v1021 = vadd.f32 %v1016, %v956
        %v1022 = vadd.f32 %v1016, %v961
        %v1023 = vadd.f32 %v1016, %v964
        %v1024 = vadd.f32 %v1016, %v969
        %v1025 = vadd.f32 %v1016, %v972
        %v1026 = vadd.f32 %v1016, %v977
        %v1027 = vadd.f32 %v1016, %v980
        %v1028 = vadd.f32 %v1016, %v985
        %v1029 = vadd.f32 %v1016, %v988
        %v1030 = vadd.f32 %v1016, %v993
        %v1031 = vadd.f32 %v1016, %v996
        %v1032 = vadd.f32 %v1016, %v1001
        %v1033 = vadd.f32 %v1016, %v1004
        %1034 = vst.msk [vmem:[%s384] sm:$0xff] %vm885, %v1018
        %1035 = vst.msk [vmem:[%s384 + $0x8] sm:$0xff] %vm885, %v1019
        %1036 = vst.msk [vmem:[%s384 + $0x10] sm:$0xff] %vm885, %v1020
        %1037 = vst.msk [vmem:[%s384 + $0x18] sm:$0xff] %vm885, %v1021
        %1038 = vst.msk [vmem:[%s384 + $0x20] sm:$0xff] %vm885, %v1022
        %1039 = vst.msk [vmem:[%s384 + $0x28] sm:$0xff] %vm885, %v1023
        %1040 = vst.msk [vmem:[%s384 + $0x30] sm:$0xff] %vm885, %v1024
        %1041 = vst.msk [vmem:[%s384 + $0x38] sm:$0xff] %vm885, %v1025
        %1042 = vst.msk [vmem:[%s384 + $0x40] sm:$0xff] %vm885, %v1026
        %1043 = vst.msk [vmem:[%s384 + $0x48] sm:$0xff] %vm885, %v1027
        %1044 = vst.msk [vmem:[%s384 + $0x50] sm:$0xff] %vm885, %v1028
        %1045 = vst.msk [vmem:[%s384 + $0x58] sm:$0xff] %vm885, %v1029
        %1046 = vst.msk [vmem:[%s384 + $0x60] sm:$0xff] %vm885, %v1030
        %1047 = vst.msk [vmem:[%s384 + $0x68] sm:$0xff] %vm885, %v1031
        %1048 = vst.msk [vmem:[%s384 + $0x70] sm:$0xff] %vm885, %v1032
        %1049 = vst.msk [vmem:[%s384 + $0x78] sm:$0xff] %vm885, %v1033
      $region44: #{_lambda_.3} parent=39 // pred_fallthru
        _
      %p1050 = scmp.ne.s32.totalorder %s25, 0
      // Predicated region
      $region45: #{_lambda_.3} parent=39 // pred_check
        %p1051 = pneg %p1050
      $region46: #{_lambda_.3} parent=39 // pred_check_branch
        %1053 = sbr.rel (%p1051) target = $region48
      $region47: #{_lambda_.3} parent=39 // pred_region
        %v1054 = vld [vmem:[%s384] sm:$0xff]
        %v1055 = vld [vmem:[%s384 + $0x8] sm:$0xff]
        %v1056 = vld [vmem:[%s384 + $0x10] sm:$0xff]
        %v1057 = vld [vmem:[%s384 + $0x18] sm:$0xff]
        %v1058 = vld [vmem:[%s384 + $0x20] sm:$0xff]
        %v1059 = vld [vmem:[%s384 + $0x28] sm:$0xff]
        %v1060 = vld [vmem:[%s384 + $0x30] sm:$0xff]
        %v1061 = vld [vmem:[%s384 + $0x38] sm:$0xff]
        %v1062 = vld [vmem:[%s384 + $0x40] sm:$0xff]
        %v1063 = vld [vmem:[%s384 + $0x48] sm:$0xff]
        %v1064 = vld [vmem:[%s384 + $0x50] sm:$0xff]
        %v1065 = vld [vmem:[%s384 + $0x58] sm:$0xff]
        %v1066 = vld [vmem:[%s384 + $0x60] sm:$0xff]
        %v1067 = vld [vmem:[%s384 + $0x68] sm:$0xff]
        %v1068 = vld [vmem:[%s384 + $0x70] sm:$0xff]
        %v1069 = vld [vmem:[%s384 + $0x78] sm:$0xff]
        %v1070 = vadd.f32 %v1054, %v945
        %v1071 = vadd.f32 %v1055, %v948
        %v1072 = vadd.f32 %v1056, %v953
        %v1073 = vadd.f32 %v1057, %v956
        %v1074 = vadd.f32 %v1058, %v961
        %v1075 = vadd.f32 %v1059, %v964
        %v1076 = vadd.f32 %v1060, %v969
        %v1077 = vadd.f32 %v1061, %v972
        %v1078 = vadd.f32 %v1062, %v977
        %v1079 = vadd.f32 %v1063, %v980
        %v1080 = vadd.f32 %v1064, %v985
        %v1081 = vadd.f32 %v1065, %v988
        %v1082 = vadd.f32 %v1066, %v993
        %v1083 = vadd.f32 %v1067, %v996
        %v1084 = vadd.f32 %v1068, %v1001
        %v1085 = vadd.f32 %v1069, %v1004
        %1086 = vst.msk [vmem:[%s384] sm:$0xff] %vm885, %v1070
        %1087 = vst.msk [vmem:[%s384 + $0x8] sm:$0xff] %vm885, %v1071
        %1088 = vst.msk [vmem:[%s384 + $0x10] sm:$0xff] %vm885, %v1072
        %1089 = vst.msk [vmem:[%s384 + $0x18] sm:$0xff] %vm885, %v1073
        %1090 = vst.msk [vmem:[%s384 + $0x20] sm:$0xff] %vm885, %v1074
        %1091 = vst.msk [vmem:[%s384 + $0x28] sm:$0xff] %vm885, %v1075
        %1092 = vst.msk [vmem:[%s384 + $0x30] sm:$0xff] %vm885, %v1076
        %1093 = vst.msk [vmem:[%s384 + $0x38] sm:$0xff] %vm885, %v1077
        %1094 = vst.msk [vmem:[%s384 + $0x40] sm:$0xff] %vm885, %v1078
        %1095 = vst.msk [vmem:[%s384 + $0x48] sm:$0xff] %vm885, %v1079
        %1096 = vst.msk [vmem:[%s384 + $0x50] sm:$0xff] %vm885, %v1080
        %1097 = vst.msk [vmem:[%s384 + $0x58] sm:$0xff] %vm885, %v1081
        %1098 = vst.msk [vmem:[%s384 + $0x60] sm:$0xff] %vm885, %v1082
        %1099 = vst.msk [vmem:[%s384 + $0x68] sm:$0xff] %vm885, %v1083
        %1100 = vst.msk [vmem:[%s384 + $0x70] sm:$0xff] %vm885, %v1084
        %1101 = vst.msk [vmem:[%s384 + $0x78] sm:$0xff] %vm885, %v1085
      $region48: #{_lambda_.3} parent=39 // pred_fallthru
        _
      %s1102 = smul.u32 16, %s24
      %p1103 = scmp.lt.s32.totalorder %s23, 1
      %s1104 = scalar_select %p1103, %s23, 1
      %p1105 = scmp.lt.s32.totalorder %s1102, 15
      %s1106 = scalar_select %p1105, %s1102, 15
      %p1107 = scmp.lt.s32.totalorder %s25, 0
      %s1108 = scalar_select %p1107, %s25, 0
      %s1109 = sadd.s32 %s1108, %s1106
      %s1110 = smul.addr %s1104, 16
      %s1111 = sadd.s32 %s1109, %s1110
      %s1112 = smul.addr %s1111, 4
      %s1113 = scalar_lea.vmem %s5, %s1112
      %s1114 = smul.u32 16, %s24
      %p1115 = scmp.lt.s32.totalorder %s23, 1
      %s1116 = scalar_select %p1115, %s23, 1
      %p1117 = scmp.lt.s32.totalorder %s1114, 15
      %s1118 = scalar_select %p1117, %s1114, 15
      %s1119 = smul.addr %s1116, 16
      %s1120 = sadd.s32 %s1118, %s1119
      %s1121 = smul.addr %s1120, 8
      %s1122 = scalar_lea.vmem %s6, %s1121
      // Predicated region
      $region49: #{_lambda_.3} parent=39 // pred_check
        %p1123 = pneg %p186
      $region50: #{_lambda_.3} parent=39 // pred_check_branch
        %1125 = sbr.rel (%p1123) target = $region52
      $region51: #{_lambda_.3} parent=39 // pred_region
        %s1126 = smul.u32 16, %s24
      $region52: #{_lambda_.3} parent=39 // pred_fallthru
        _
      // Predicated region
      $region53: #{_lambda_.3} parent=39 // pred_check
        %p1127 = pneg %p214
      $region54: #{_lambda_.3} parent=39 // pred_check_branch
        %1129 = sbr.rel (%p1127) target = $region56
      $region55: #{_lambda_.3} parent=39 // pred_region
        %s1130 = smul.u32 16, %s24
      $region56: #{_lambda_.3} parent=39 // pred_fallthru
        _
    $region40: #{_lambda_.3} parent=5 // pred_fallthru
      _
    %p1131 = scmp.le.s32.totalorder 2, %s13
    // Predicated region
    $region57: #{_lambda_.3} parent=5 // pred_check
      %p1132 = pneg %p1131
    $region58: #{_lambda_.3} parent=5 // pred_check_branch
      %1134 = sbr.rel (%p1132) target = $region60
    $region59: #{_lambda_.3} parent=5 // pred_region
      %s1135 = ssub.s32 %s13, 2
      // Predicated region
      $region61: #{_lambda_.3} parent=59 // pred_check
        %p1136 = pneg %p192
      $region62: #{_lambda_.3} parent=59 // pred_check_branch
        %1138 = sbr.rel (%p1136) target = $region64
      $region63: #{_lambda_.3} parent=59 // pred_region
        %s1139 = smul.u32 16, %s27
        %p1140 = scmp.lt.s32.totalorder %s26, 1
        %s1141 = scalar_select %p1140, %s26, 1
        %p1142 = scmp.lt.s32.totalorder %s1139, 15
        %s1143 = scalar_select %p1142, %s1139, 15
        %p1144 = scmp.lt.s32.totalorder %s28, 0
        %s1145 = scalar_select %p1144, %s28, 0
        %s1146 = sadd.s32 %s1145, %s1143
        %s1147 = smul.addr %s1141, 16
        %s1148 = sadd.s32 %s1146, %s1147
        %s1149 = smul.addr %s1148, 4
        %s1150 = scalar_lea.vmem %s5, %s1149
      $region64: #{_lambda_.3} parent=59 // pred_fallthru
        _
      // Predicated region
      $region65: #{_lambda_.3} parent=59 // pred_check
        %p1151 = pneg %p220
      $region66: #{_lambda_.3} parent=59 // pred_check_branch
        %1153 = sbr.rel (%p1151) target = $region68
      $region67: #{_lambda_.3} parent=59 // pred_region
        %s1154 = smul.u32 16, %s27
        %p1155 = scmp.lt.s32.totalorder %s26, 1
        %s1156 = scalar_select %p1155, %s26, 1
        %p1157 = scmp.lt.s32.totalorder %s1154, 15
        %s1158 = scalar_select %p1157, %s1154, 15
        %s1159 = smul.addr %s1156, 16
        %s1160 = sadd.s32 %s1158, %s1159
        %s1161 = smul.addr %s1160, 8
        %s1162 = scalar_lea.vmem %s6, %s1161
      $region68: #{_lambda_.3} parent=59 // pred_fallthru
        _
    $region60: #{_lambda_.3} parent=5 // pred_fallthru
      _
  $region6: #{_lambda_.3} parent=0 // loop_footer
    %s17 = sadd.s32 1, %s13
  $region7: #{_lambda_.3} parent=0 // loop_footer_branch
    %12 = sbr.rel target = $region3
  $region8: #{_lambda_.3} parent=0 // loop_exit
    _

// kernel: _lambda_.4
$region0: #{_lambda_.4}
  #allocation0 [shape = 'u32[]', space=smem, size = 0x4, offset = 0x4, fixed_abs, tag = 'smem constant byte address 0x4 - core index']
  #allocation1 [shape = 'u32[144,128]{1,0:T(1,128)}', space=vmem, size = 0x12000, scoped, tag = 'internal scratch']
  %s0 = inlined_call_operand.vmem [shape: bf16[2,64,288], index: 0, kind: input, shape index: {}]
  %s1 = inlined_call_operand.vmem [shape: bf16[288,64], index: 1, kind: input, shape index: {}]
  %s2 = inlined_call_operand.vmem [shape: f32[1,64], index: 2, kind: input, shape index: {}]
  %s3 = inlined_call_operand.vmem [shape: bf16[64,64], index: 3, kind: input, shape index: {}]
  %s4 = inlined_call_operand.vmem [shape: f32[1,64], index: 4, kind: input, shape index: {}]
  %s5 = inlined_call_operand.vmem [shape: bf16[2,64,64], index: 5, kind: output, shape index: {0}]
  %s6 = inlined_call_operand.vmem [shape: f32[2,64,64], index: 6, kind: output, shape index: {1}]
  %7 = xla_tuple %s5, %s6
  %s8 = sld [smem:[#allocation0]]
  $region69: #{_lambda_.4} parent=0
    _
  %s10 = ssub.s32 1, %s8
  %s11 = scalar_select 0, %s10, %s8
  loop: start=0, step=1, limit=4
  $region2: #{_lambda_.4} parent=0 // loop_pre_header
    _
  $region3: #{_lambda_.4} parent=0 // loop_header
    %s13 = sphi 0, %s17
    %p14 = scmp.ge.s32.totalorder %s13, 4
    %s20 = sphi 0, %s39
    %s21 = sphi 0, %s35
    %s22 = sphi 0, %s31
    %s23 = sphi 0, %s20
    %s24 = sphi 0, %s21
    %s25 = sphi 0, %s22
    %s26 = sphi 0, %s23
    %s27 = sphi 0, %s24
    %s28 = sphi 0, %s25
    %s44 = sphi 0, %s46
    %s47 = sphi 0, %s44
    %s48 = sphi 0, %s47
    %s64 = sphi 0, %s48
    %s70 = sphi 0, %s72
    %s73 = sphi 0, %s70
    %s74 = sphi 0, %s73
    %s90 = sphi 0, %s74
    %s96 = sphi 0, %s98
    %s99 = sphi 0, %s96
    %s100 = sphi 0, %s99
    %s116 = sphi 0, %s100
    %s122 = sphi 0, %s124
    %s125 = sphi 0, %s122
    %s126 = sphi 0, %s125
    %s142 = sphi 0, %s126
    %s146 = sphi 0, %s146
    %s148 = sphi 0, %s146
    %s149 = sphi 0, %s148
    %s163 = sphi 0, %s149
    %s173 = sphi 0, %s175
    %s176 = sphi 0, %s173
    %s177 = sphi 0, %s176
    %s193 = sphi 0, %s177
    %s201 = sphi 0, %s203
    %s204 = sphi 0, %s201
    %s205 = sphi 0, %s204
    %s221 = sphi 0, %s205
  $region4: #{_lambda_.4} parent=0 // loop_header_branch
    %16 = sbr.rel (%p14) target = $region8
  $region5: #{_lambda_.4} parent=0 // loop_body
    %s18 = ssub.s32 %s13, 1
    %s19 = ssub.s32 %s13, 2
    %s29 = sadd.s32 1, %s22
    %p30 = scmp.ge.s32.totalorder %s29, 1
    %s31 = scalar_select %p30, 0, %s29
    %s32 = sadd.s32 1, %s21
    %s33 = scalar_select %p30, %s32, %s21
    %p34 = scmp.ge.s32.totalorder %s33, 1
    %s35 = scalar_select %p34, 0, %s33
    %s36 = sadd.s32 1, %s20
    %s37 = scalar_select %p34, %s36, %s20
    %p38 = scmp.ge.s32.totalorder %s37, 2
    %s39 = scalar_select %p38, 0, %s37
    %s40 = ssub.s32 %s20, %s39
    %s41 = ssub.s32 %s21, %s35
    %s42 = sor.u32 %s40, %s41
    %p43 = scmp.eq.s32.totalorder %s42, 0
    %s45 = sadd.s32 %s44, 1
    %s46 = scalar_select %p43, %s44, %s45
    %p49 = pneg %p43
    %p50 = scmp.eq.s32.totalorder %s13, 1
    %p51 = por %p49, %p50
    %p52 = scmp.ne.s32.totalorder %s44, %s47
    %p53 = scmp.eq.s32.totalorder %s13, 0
    %p54 = por %p52, %p53
    %p55 = scmp.ne.s32.totalorder %s44, %s47
    %p56 = scmp.eq.s32.totalorder %s18, 1
    %p57 = por %p55, %p56
    %p58 = scmp.ne.s32.totalorder %s47, %s48
    %p59 = scmp.eq.s32.totalorder %s18, 0
    %p60 = por %p58, %p59
    %p61 = scmp.ne.s32.totalorder %s47, %s48
    %p62 = scmp.eq.s32.totalorder %s19, 1
    %p63 = por %p61, %p62
    %p65 = scmp.ne.s32.totalorder %s48, %s64
    %p66 = scmp.eq.s32.totalorder %s19, 0
    %p67 = por %p65, %p66
    %s68 = ssub.s32 %s22, %s31
    %p69 = scmp.eq.s32.totalorder %s68, 0
    %s71 = sadd.s32 %s70, 1
    %s72 = scalar_select %p69, %s70, %s71
    %p75 = pneg %p69
    %p76 = scmp.eq.s32.totalorder %s13, 1
    %p77 = por %p75, %p76
    %p78 = scmp.ne.s32.totalorder %s70, %s73
    %p79 = scmp.eq.s32.totalorder %s13, 0
    %p80 = por %p78, %p79
    %p81 = scmp.ne.s32.totalorder %s70, %s73
    %p82 = scmp.eq.s32.totalorder %s18, 1
    %p83 = por %p81, %p82
    %p84 = scmp.ne.s32.totalorder %s73, %s74
    %p85 = scmp.eq.s32.totalorder %s18, 0
    %p86 = por %p84, %p85
    %p87 = scmp.ne.s32.totalorder %s73, %s74
    %p88 = scmp.eq.s32.totalorder %s19, 1
    %p89 = por %p87, %p88
    %p91 = scmp.ne.s32.totalorder %s74, %s90
    %p92 = scmp.eq.s32.totalorder %s19, 0
    %p93 = por %p91, %p92
    %s94 = ssub.s32 %s22, %s31
    %p95 = scmp.eq.s32.totalorder %s94, 0
    %s97 = sadd.s32 %s96, 1
    %s98 = scalar_select %p95, %s96, %s97
    %p101 = pneg %p95
    %p102 = scmp.eq.s32.totalorder %s13, 1
    %p103 = por %p101, %p102
    %p104 = scmp.ne.s32.totalorder %s96, %s99
    %p105 = scmp.eq.s32.totalorder %s13, 0
    %p106 = por %p104, %p105
    %p107 = scmp.ne.s32.totalorder %s96, %s99
    %p108 = scmp.eq.s32.totalorder %s18, 1
    %p109 = por %p107, %p108
    %p110 = scmp.ne.s32.totalorder %s99, %s100
    %p111 = scmp.eq.s32.totalorder %s18, 0
    %p112 = por %p110, %p111
    %p113 = scmp.ne.s32.totalorder %s99, %s100
    %p114 = scmp.eq.s32.totalorder %s19, 1
    %p115 = por %p113, %p114
    %p117 = scmp.ne.s32.totalorder %s100, %s116
    %p118 = scmp.eq.s32.totalorder %s19, 0
    %p119 = por %p117, %p118
    %s120 = ssub.s32 %s22, %s31
    %p121 = scmp.eq.s32.totalorder %s120, 0
    %s123 = sadd.s32 %s122, 1
    %s124 = scalar_select %p121, %s122, %s123
    %p127 = pneg %p121
    %p128 = scmp.eq.s32.totalorder %s13, 1
    %p129 = por %p127, %p128
    %p130 = scmp.ne.s32.totalorder %s122, %s125
    %p131 = scmp.eq.s32.totalorder %s13, 0
    %p132 = por %p130, %p131
    %p133 = scmp.ne.s32.totalorder %s122, %s125
    %p134 = scmp.eq.s32.totalorder %s18, 1
    %p135 = por %p133, %p134
    %p136 = scmp.ne.s32.totalorder %s125, %s126
    %p137 = scmp.eq.s32.totalorder %s18, 0
    %p138 = por %p136, %p137
    %p139 = scmp.ne.s32.totalorder %s125, %s126
    %p140 = scmp.eq.s32.totalorder %s19, 1
    %p141 = por %p139, %p140
    %p143 = scmp.ne.s32.totalorder %s126, %s142
    %p144 = scmp.eq.s32.totalorder %s19, 0
    %p145 = por %p143, %p144
    %s147 = sadd.s32 %s146, 1
    %p150 = scmp.eq.s32.totalorder %s13, 1
    %p151 = scmp.ne.s32.totalorder %s146, %s148
    %p152 = scmp.eq.s32.totalorder %s13, 0
    %p153 = por %p151, %p152
    %p154 = scmp.ne.s32.totalorder %s146, %s148
    %p155 = scmp.eq.s32.totalorder %s18, 1
    %p156 = por %p154, %p155
    %p157 = scmp.ne.s32.totalorder %s148, %s149
    %p158 = scmp.eq.s32.totalorder %s18, 0
    %p159 = por %p157, %p158
    %p160 = scmp.ne.s32.totalorder %s148, %s149
    %p161 = scmp.eq.s32.totalorder %s19, 1
    %p162 = por %p160, %p161
    %p164 = scmp.ne.s32.totalorder %s149, %s163
    %p165 = scmp.eq.s32.totalorder %s19, 0
    %p166 = por %p164, %p165
    %s167 = ssub.s32 %s20, %s39
    %s168 = ssub.s32 %s21, %s35
    %s169 = sor.u32 %s167, %s168
    %s170 = ssub.s32 %s22, %s31
    %s171 = sor.u32 %s169, %s170
    %p172 = scmp.eq.s32.totalorder %s171, 0
    %s174 = sadd.s32 %s173, 1
    %s175 = scalar_select %p172, %s173, %s174
    %p178 = pneg %p172
    %p179 = scmp.eq.s32.totalorder %s13, 1
    %p180 = por %p178, %p179
    %p181 = scmp.ne.s32.totalorder %s173, %s176
    %p182 = scmp.eq.s32.totalorder %s13, 0
    %p183 = por %p181, %p182
    %p184 = scmp.ne.s32.totalorder %s173, %s176
    %p185 = scmp.eq.s32.totalorder %s18, 1
    %p186 = por %p184, %p185
    %p187 = scmp.ne.s32.totalorder %s176, %s177
    %p188 = scmp.eq.s32.totalorder %s18, 0
    %p189 = por %p187, %p188
    %p190 = scmp.ne.s32.totalorder %s176, %s177
    %p191 = scmp.eq.s32.totalorder %s19, 1
    %p192 = por %p190, %p191
    %p194 = scmp.ne.s32.totalorder %s177, %s193
    %p195 = scmp.eq.s32.totalorder %s19, 0
    %p196 = por %p194, %p195
    %s197 = ssub.s32 %s20, %s39
    %s198 = ssub.s32 %s21, %s35
    %s199 = sor.u32 %s197, %s198
    %p200 = scmp.eq.s32.totalorder %s199, 0
    %s202 = sadd.s32 %s201, 1
    %s203 = scalar_select %p200, %s201, %s202
    %p206 = pneg %p200
    %p207 = scmp.eq.s32.totalorder %s13, 1
    %p208 = por %p206, %p207
    %p209 = scmp.ne.s32.totalorder %s201, %s204
    %p210 = scmp.eq.s32.totalorder %s13, 0
    %p211 = por %p209, %p210
    %p212 = scmp.ne.s32.totalorder %s201, %s204
    %p213 = scmp.eq.s32.totalorder %s18, 1
    %p214 = por %p212, %p213
    %p215 = scmp.ne.s32.totalorder %s204, %s205
    %p216 = scmp.eq.s32.totalorder %s18, 0
    %p217 = por %p215, %p216
    %p218 = scmp.ne.s32.totalorder %s204, %s205
    %p219 = scmp.eq.s32.totalorder %s19, 1
    %p220 = por %p218, %p219
    %p222 = scmp.ne.s32.totalorder %s205, %s221
    %p223 = scmp.eq.s32.totalorder %s19, 0
    %p224 = por %p222, %p223
    %p225 = scmp.le.s32.totalorder 1, %s13
    %p226 = scmp.lt.s32.totalorder %s13, 3
    %p227 = pnand %p225, %p226
    %p228 = pneg %p227
    // Predicated region
    $region9: #{_lambda_.4} parent=5 // pred_check
      _
    $region10: #{_lambda_.4} parent=5 // pred_check_branch
      %230 = sbr.rel (%p227) target = $region12
    $region11: #{_lambda_.4} parent=5 // pred_region
      %s231 = ssub.s32 %s13, 1
      // Predicated region
      $region13: #{_lambda_.4} parent=11 // pred_check
        %p232 = pneg %p86
      $region14: #{_lambda_.4} parent=11 // pred_check_branch
        %234 = sbr.rel (%p232) target = $region16
      $region15: #{_lambda_.4} parent=11 // pred_region
        %p235 = scmp.lt.s32.totalorder %s25, 0
        %s236 = scalar_select %p235, %s25, 0
        %s237 = smul.addr %s236, 4
        %s238 = scalar_lea.vmem %s1, %s237
      $region16: #{_lambda_.4} parent=11 // pred_fallthru
        _
      // Predicated region
      $region17: #{_lambda_.4} parent=11 // pred_check
        %p239 = pneg %p112
      $region18: #{_lambda_.4} parent=11 // pred_check_branch
        %241 = sbr.rel (%p239) target = $region20
      $region19: #{_lambda_.4} parent=11 // pred_region
        %p242 = scmp.lt.s32.totalorder %s25, 0
        %s243 = scalar_select %p242, %s25, 0
        %s244 = scalar_lea.vmem %s2, %s243
      $region20: #{_lambda_.4} parent=11 // pred_fallthru
        _
      // Predicated region
      $region21: #{_lambda_.4} parent=11 // pred_check
        %p245 = pneg %p138
      $region22: #{_lambda_.4} parent=11 // pred_check_branch
        %247 = sbr.rel (%p245) target = $region24
      $region23: #{_lambda_.4} parent=11 // pred_region
        %s248 = smul.u32 8, %s25
        %p249 = scmp.lt.s32.totalorder %s248, 7
        %s250 = scalar_select %p249, %s248, 7
        %s251 = smul.addr %s250, 4
        %s252 = scalar_lea.vmem %s3, %s251
        %s253 = smul.u32 8, %s25
      $region24: #{_lambda_.4} parent=11 // pred_fallthru
        _
      // Predicated region
      $region25: #{_lambda_.4} parent=11 // pred_check
        %p254 = pneg %p159
      $region26: #{_lambda_.4} parent=11 // pred_check_branch
        %256 = sbr.rel (%p254) target = $region28
      $region27: #{_lambda_.4} parent=11 // pred_region
        _
      $region28: #{_lambda_.4} parent=11 // pred_fallthru
        _
    $region12: #{_lambda_.4} parent=5 // pred_fallthru
      _
    %p257 = scmp.lt.s32.totalorder %s13, 2
    // Predicated region
    $region29: #{_lambda_.4} parent=5 // pred_check
      %p258 = pneg %p257
    $region30: #{_lambda_.4} parent=5 // pred_check_branch
      %260 = sbr.rel (%p258) target = $region32
    $region31: #{_lambda_.4} parent=5 // pred_region
      // Predicated region
      $region33: #{_lambda_.4} parent=31 // pred_check
        %p261 = pneg %p54
      $region34: #{_lambda_.4} parent=31 // pred_check_branch
        %263 = sbr.rel (%p261) target = $region36
      $region35: #{_lambda_.4} parent=31 // pred_region
        %s264 = smul.u32 8, %s21
        %p265 = scmp.lt.s32.totalorder %s20, 1
        %s266 = scalar_select %p265, %s20, 1
        %p267 = scmp.lt.s32.totalorder %s264, 7
        %s268 = scalar_select %p267, %s264, 7
        %s269 = smul.addr %s268, 3
        %s270 = smul.addr %s266, 24
        %s271 = sadd.s32 %s269, %s270
        %s272 = smul.addr %s271, 4
        %s273 = scalar_lea.vmem %s0, %s272
        %s274 = smul.u32 8, %s21
      $region36: #{_lambda_.4} parent=31 // pred_fallthru
        _
    $region32: #{_lambda_.4} parent=5 // pred_fallthru
      _
    %p275 = scmp.le.s32.totalorder 1, %s13
    %p276 = scmp.lt.s32.totalorder %s13, 3
    %p277 = pnand %p275, %p276
    %p278 = pneg %p277
    // Predicated region
    $region37: #{_lambda_.4} parent=5 // pred_check
      _
    $region38: #{_lambda_.4} parent=5 // pred_check_branch
      %280 = sbr.rel (%p277) target = $region40
    $region39: #{_lambda_.4} parent=5 // pred_region
      %s281 = ssub.s32 %s13, 1
      %s282 = smul.u32 8, %s24
      %p283 = scmp.lt.s32.totalorder %s23, 1
      %s284 = scalar_select %p283, %s23, 1
      %p285 = scmp.lt.s32.totalorder %s282, 7
      %s286 = scalar_select %p285, %s282, 7
      %s287 = smul.addr %s286, 3
      %s288 = smul.addr %s284, 24
      %s289 = sadd.s32 %s287, %s288
      %s290 = smul.addr %s289, 4
      %s291 = scalar_lea.vmem %s0, %s290
      %p292 = pneg %p60
      %p293 = pneg %p57
      %p294 = scmp.lt.s32.totalorder %s25, 0
      %s295 = scalar_select %p294, %s25, 0
      %s296 = smul.addr %s295, 4
      %s297 = scalar_lea.vmem %s1, %s296
      %p298 = pneg %p86
      %p299 = pneg %p83
      %p300 = scmp.lt.s32.totalorder %s25, 0
      %s301 = scalar_select %p300, %s25, 0
      %s302 = scalar_lea.vmem %s2, %s301
      %p303 = pneg %p112
      %p304 = pneg %p109
      %s305 = smul.u32 8, %s25
      %p306 = scmp.lt.s32.totalorder %s305, 7
      %s307 = scalar_select %p306, %s305, 7
      %s308 = smul.addr %s307, 4
      %s309 = scalar_lea.vmem %s3, %s308
      %p310 = pneg %p138
      %p311 = pneg %p135
      %p312 = pneg %p159
      %p313 = pneg %p156
      %p314 = pneg %p189
      %p315 = pneg %p186
      %s316 = smul.u32 8, %s24
      %p317 = scmp.lt.s32.totalorder %s23, 1
      %s318 = scalar_select %p317, %s23, 1
      %p319 = scmp.lt.s32.totalorder %s316, 7
      %s320 = scalar_select %p319, %s316, 7
      %p321 = scmp.lt.s32.totalorder %s25, 0
      %s322 = scalar_select %p321, %s25, 0
      %s323 = sadd.s32 %s322, %s320
      %s324 = smul.addr %s318, 8
      %s325 = sadd.s32 %s323, %s324
      %s326 = smul.addr %s325, 4
      %s327 = scalar_lea.vmem %s5, %s326
      %p328 = pneg %p217
      %p329 = pneg %p214
      %s330 = smul.u32 8, %s24
      %p331 = scmp.lt.s32.totalorder %s23, 1
      %s332 = scalar_select %p331, %s23, 1
      %p333 = scmp.lt.s32.totalorder %s330, 7
      %s334 = scalar_select %p333, %s330, 7
      %s335 = smul.addr %s332, 8
      %s336 = sadd.s32 %s334, %s335
      %s337 = smul.addr %s336, 8
      %s338 = scalar_lea.vmem %s6, %s337
      %s339 = smul.u32 8, %s24
      %p340 = scmp.lt.s32.totalorder %s23, 1
      %s341 = scalar_select %p340, %s23, 1
      %p342 = scmp.lt.s32.totalorder %s339, 7
      %s343 = scalar_select %p342, %s339, 7
      %s344 = smul.addr %s343, 3
      %s345 = smul.addr %s341, 24
      %s346 = sadd.s32 %s344, %s345
      %s347 = smul.addr %s346, 4
      %s348 = scalar_lea.vmem %s0, %s347
      %s349 = smul.u32 8, %s24
      %p350 = scmp.lt.s32.totalorder %s25, 0
      %s351 = scalar_select %p350, %s25, 0
      %s352 = smul.addr %s351, 4
      %s353 = scalar_lea.vmem %s1, %s352
      %p354 = scmp.lt.s32.totalorder %s25, 0
      %s355 = scalar_select %p354, %s25, 0
      %s356 = scalar_lea.vmem %s2, %s355
      %s357 = smul.u32 8, %s25
      %p358 = scmp.lt.s32.totalorder %s357, 7
      %s359 = scalar_select %p358, %s357, 7
      %s360 = smul.addr %s359, 4
      %s361 = scalar_lea.vmem %s3, %s360
      %s362 = smul.u32 8, %s25
      %s363 = smul.u32 8, %s24
      %p364 = scmp.lt.s32.totalorder %s23, 1
      %s365 = scalar_select %p364, %s23, 1
      %p366 = scmp.lt.s32.totalorder %s363, 7
      %s367 = scalar_select %p366, %s363, 7
      %p368 = scmp.lt.s32.totalorder %s25, 0
      %s369 = scalar_select %p368, %s25, 0
      %s370 = sadd.s32 %s369, %s367
      %s371 = smul.addr %s365, 8
      %s372 = sadd.s32 %s370, %s371
      %s373 = smul.addr %s372, 4
      %s374 = scalar_lea.vmem %s5, %s373
      %s375 = smul.u32 8, %s24
      %s376 = smul.u32 8, %s24
      %p377 = scmp.lt.s32.totalorder %s23, 1
      %s378 = scalar_select %p377, %s23, 1
      %p379 = scmp.lt.s32.totalorder %s376, 7
      %s380 = scalar_select %p379, %s376, 7
      %s381 = smul.addr %s378, 8
      %s382 = sadd.s32 %s380, %s381
      %s383 = smul.addr %s382, 8
      %s384 = scalar_lea.vmem %s6, %s383
      %s385 = smul.u32 8, %s24
      %v387 = vld [vmem:[%s348] sm:$0xff]
      %v388 = vld [vmem:[%s348 + $0x8] sm:$0xf]
      %v389 = vld [vmem:[%s348 + $0xc] sm:$0xff]
      %v390 = vld [vmem:[%s348 + $0x14] sm:$0xf]
      %v391 = vld [vmem:[%s348 + $0x18] sm:$0xff]
      %v392 = vld [vmem:[%s348 + $0x20] sm:$0xf]
      %v393 = vld [vmem:[%s348 + $0x24] sm:$0xff]
      %v394 = vld [vmem:[%s348 + $0x2c] sm:$0xf]
      %v395 = vld [vmem:[%s348 + $0x30] sm:$0xff]
      %v396 = vld [vmem:[%s348 + $0x38] sm:$0xf]
      %v397 = vld [vmem:[%s348 + $0x3c] sm:$0xff]
      %v398 = vld [vmem:[%s348 + $0x44] sm:$0xf]
      %v399 = vld [vmem:[%s348 + $0x48] sm:$0xff]
      %v400 = vld [vmem:[%s348 + $0x50] sm:$0xf]
      %v401 = vld [vmem:[%s348 + $0x54] sm:$0xff]
      %v402 = vld [vmem:[%s348 + $0x5c] sm:$0xf]
      %v403 = vld [vmem:[%s353] sm:$0xf]
      %v404 = vld [vmem:[%s353 + $0x4] sm:$0xf]
      %v405 = vld [vmem:[%s353 + $0x8] sm:$0xf]
      %v406 = vld [vmem:[%s353 + $0xc] sm:$0xf]
      %v407 = vld [vmem:[%s353 + $0x10] sm:$0xf]
      %v408 = vld [vmem:[%s353 + $0x14] sm:$0xf]
      %v409 = vld [vmem:[%s353 + $0x18] sm:$0xf]
      %v410 = vld [vmem:[%s353 + $0x1c] sm:$0xf]
      %v411 = vld [vmem:[%s353 + $0x20] sm:$0xf]
      %v412 = vld [vmem:[%s353 + $0x24] sm:$0xf]
      %v413 = vld [vmem:[%s353 + $0x28] sm:$0xf]
      %v414 = vld [vmem:[%s353 + $0x2c] sm:$0xf]
      %v415 = vld [vmem:[%s353 + $0x30] sm:$0xf]
      %v416 = vld [vmem:[%s353 + $0x34] sm:$0xf]
      %v417 = vld [vmem:[%s353 + $0x38] sm:$0xf]
      %v418 = vld [vmem:[%s353 + $0x3c] sm:$0xf]
      %v419 = vld [vmem:[%s353 + $0x40] sm:$0xf]
      %v420 = vld [vmem:[%s353 + $0x44] sm:$0xf]
      %v421 = vld [vmem:[%s353 + $0x48] sm:$0xf]
      %v422 = vld [vmem:[%s353 + $0x4c] sm:$0xf]
      %v423 = vld [vmem:[%s353 + $0x50] sm:$0xf]
      %v424 = vld [vmem:[%s353 + $0x54] sm:$0xf]
      %v425 = vld [vmem:[%s353 + $0x58] sm:$0xf]
      %v426 = vld [vmem:[%s353 + $0x5c] sm:$0xf]
      %v427 = vld [vmem:[%s353 + $0x60] sm:$0xf]
      %v428 = vld [vmem:[%s353 + $0x64] sm:$0xf]
      %v429 = vld [vmem:[%s353 + $0x68] sm:$0xf]
      %v430 = vld [vmem:[%s353 + $0x6c] sm:$0xf]
      %v431 = vld [vmem:[%s353 + $0x70] sm:$0xf]
      %v432 = vld [vmem:[%s353 + $0x74] sm:$0xf]
      %v433 = vld [vmem:[%s353 + $0x78] sm:$0xf]
      %v434 = vld [vmem:[%s353 + $0x7c] sm:$0xf]
      %v435 = vld [vmem:[%s353 + $0x80] sm:$0xf]
      %v436 = vld [vmem:[%s353 + $0x84] sm:$0xf]
      %v437 = vld [vmem:[%s353 + $0x88] sm:$0xf]
      %v438 = vld [vmem:[%s353 + $0x8c] sm:$0xf]
      %v439 = vld [vmem:[%s356] sm:$0x1]
      %v441 = vlaneseq
      %v442 = vshrl.u32 %v441, 7
      %v443 = vsub.s32 0, %v442
      %v444 = vrot.slane %v439, %v443
      %v462 = vunpack.c.l.b16 %v387
      %v463 = vunpack.c.h.b16 %v387
      %v464 = vunpack.c.l.b16 %v388
      %v465 = vunpack.c.l.b16 %v389
      %v466 = vunpack.c.h.b16 %v389
      %v467 = vunpack.c.l.b16 %v390
      %v468 = vunpack.c.l.b16 %v391
      %v469 = vunpack.c.h.b16 %v391
      %v470 = vunpack.c.l.b16 %v392
      %v471 = vunpack.c.l.b16 %v393
      %v472 = vunpack.c.h.b16 %v393
      %v473 = vunpack.c.l.b16 %v394
      %v474 = vunpack.c.l.b16 %v395
      %v475 = vunpack.c.h.b16 %v395
      %v476 = vunpack.c.l.b16 %v396
      %v477 = vunpack.c.l.b16 %v397
      %v478 = vunpack.c.h.b16 %v397
      %v479 = vunpack.c.l.b16 %v398
      %v480 = vunpack.c.l.b16 %v399
      %v481 = vunpack.c.h.b16 %v399
      %v482 = vunpack.c.l.b16 %v400
      %v483 = vunpack.c.l.b16 %v401
      %v484 = vunpack.c.h.b16 %v401
      %v485 = vunpack.c.l.b16 %v402
      %v486 = vpack.c.b16 %v465, %v462
      %v487 = vpack.c.b16 %v466, %v463
      %v488 = vpack.c.b16 %v467, %v464
      %v489 = vpack.c.b16 %v471, %v468
      %v490 = vpack.c.b16 %v472, %v469
      %v491 = vpack.c.b16 %v473, %v470
      %v492 = vpack.c.b16 %v477, %v474
      %v493 = vpack.c.b16 %v478, %v475
      %v494 = vpack.c.b16 %v479, %v476
      %v495 = vpack.c.b16 %v483, %v480
      %v496 = vpack.c.b16 %v484, %v481
      %v497 = vpack.c.b16 %v485, %v482
      %v542 = vunpack.c.l.b16 %v403
      %v543 = vunpack.c.l.b16 %v404
      %v544 = vunpack.c.l.b16 %v405
      %v545 = vunpack.c.l.b16 %v406
      %v546 = vunpack.c.l.b16 %v407
      %v547 = vunpack.c.l.b16 %v408
      %v548 = vunpack.c.l.b16 %v409
      %v549 = vunpack.c.l.b16 %v410
      %v550 = vunpack.c.l.b16 %v411
      %v551 = vunpack.c.l.b16 %v412
      %v552 = vunpack.c.l.b16 %v413
      %v553 = vunpack.c.l.b16 %v414
      %v554 = vunpack.c.l.b16 %v415
      %v555 = vunpack.c.l.b16 %v416
      %v556 = vunpack.c.l.b16 %v417
      %v557 = vunpack.c.l.b16 %v418
      %v558 = vunpack.c.l.b16 %v419
      %v559 = vunpack.c.l.b16 %v420
      %v560 = vunpack.c.l.b16 %v421
      %v561 = vunpack.c.l.b16 %v422
      %v562 = vunpack.c.l.b16 %v423
      %v563 = vunpack.c.l.b16 %v424
      %v564 = vunpack.c.l.b16 %v425
      %v565 = vunpack.c.l.b16 %v426
      %v566 = vunpack.c.l.b16 %v427
      %v567 = vunpack.c.l.b16 %v428
      %v568 = vunpack.c.l.b16 %v429
      %v569 = vunpack.c.l.b16 %v430
      %v570 = vunpack.c.l.b16 %v431
      %v571 = vunpack.c.l.b16 %v432
      %v572 = vunpack.c.l.b16 %v433
      %v573 = vunpack.c.l.b16 %v434
      %v574 = vunpack.c.l.b16 %v435
      %v575 = vunpack.c.l.b16 %v436
      %v576 = vunpack.c.l.b16 %v437
      %v577 = vunpack.c.l.b16 %v438
      %v578 = vpack.c.b16 %v543, %v542
      %v579 = vpack.c.b16 %v545, %v544
      %v580 = vpack.c.b16 %v547, %v546
      %v581 = vpack.c.b16 %v549, %v548
      %v582 = vpack.c.b16 %v551, %v550
      %v583 = vpack.c.b16 %v553, %v552
      %v584 = vpack.c.b16 %v555, %v554
      %v585 = vpack.c.b16 %v557, %v556
      %v586 = vpack.c.b16 %v559, %v558
      %v587 = vpack.c.b16 %v561, %v560
      %v588 = vpack.c.b16 %v563, %v562
      %v589 = vpack.c.b16 %v565, %v564
      %v590 = vpack.c.b16 %v567, %v566
      %v591 = vpack.c.b16 %v569, %v568
      %v592 = vpack.c.b16 %v571, %v570
      %v593 = vpack.c.b16 %v573, %v572
      %v594 = vpack.c.b16 %v575, %v574
      %v595 = vpack.c.b16 %v577, %v576
      %vm614 = vcmask 261120
      %v616 = vsel %vm614, %v488, 0
      %v619 = vsel %vm614, %v491, 0
      %v622 = vsel %vm614, %v494, 0
      %v625 = vsel %vm614, %v497, 0
      %627 = vmatprep.subr.bf16.mxu0 0
      %628 = vmatpush1.bf16.msra.mxu0 %v578
      %629 = vmatprep.subr.bf16.mxu0 0
      %630 = vmatpush1.bf16.msra.mxu0 %v579
      %631 = vmatprep.subr.bf16.mxu0 0
      %632 = vmatpush1.bf16.msra.mxu0 %v580
      %633 = vmatprep.subr.bf16.mxu0 0
      %634 = vmatpush1.bf16.msra.mxu0 %v581
      %635 = vmatprep.subr.bf16.mxu0 0
      %636 = vmatpush1.bf16.msra.mxu0 %v582
      %637 = vmatprep.subr.bf16.mxu0 0
      %638 = vmatpush1.bf16.msra.mxu0 %v583
      %639 = vmatprep.subr.bf16.mxu0 0
      %640 = vmatpush1.bf16.msra.mxu0 %v584
      %641 = vmatprep.subr.bf16.mxu0 0
      %642 = vmatpush1.bf16.msra.mxu0 %v585
      %643 = vmatprep.subr.bf16.mxu0 0
      %644 = vmatpush1.bf16.msra.mxu0 %v586
      %645 = vmatprep.subr.bf16.mxu0 0
      %646 = vmatpush1.bf16.msra.mxu0 %v587
      %647 = vmatprep.subr.bf16.mxu0 0
      %648 = vmatpush1.bf16.msra.mxu0 %v588
      %649 = vmatprep.subr.bf16.mxu0 0
      %650 = vmatpush1.bf16.msra.mxu0 %v589
      %651 = vmatprep.subr.bf16.mxu0 0
      %652 = vmatpush1.bf16.msra.mxu0 %v590
      %653 = vmatprep.subr.bf16.mxu0 0
      %654 = vmatpush1.bf16.msra.mxu0 %v591
      %655 = vmatprep.subr.bf16.mxu0 0
      %656 = vmatpush1.bf16.msra.mxu0 %v592
      %657 = vmatprep.subr.bf16.mxu0 0
      %658 = vmatpush1.bf16.msra.mxu0 %v593
      %659 = vmatprep.mubr.bf16.mxu0 %v487
      %660 = vmatmul.mubr.bf16.gmra.mrb[0].mxu0 %v486
      %v661 = vpop.f32.mrb[0].mxu0
      %v662 = vadd.f32 %v444, %v661
      %v663 = vpop.f32.mrb[0].mxu0
      %v664 = vpop.f32.mrb[0].mxu0
      %v665 = vadd.f32 %v444, %v664
      %v666 = vpop.f32.mrb[0].mxu0
      %667 = vmatprep.mubr.bf16.mxu0 %v490
      %668 = vmatmul.mubr.bf16.gmra.mrb[0].mxu0 %v489
      %v669 = vpop.f32.mrb[0].mxu0
      %v670 = vadd.f32 %v444, %v669
      %v671 = vpop.f32.mrb[0].mxu0
      %v672 = vpop.f32.mrb[0].mxu0
      %v673 = vadd.f32 %v444, %v672
      %v674 = vpop.f32.mrb[0].mxu0
      %675 = vmatprep.mubr.bf16.mxu0 %v493
      %676 = vmatmul.mubr.bf16.gmra.mrb[0].mxu0 %v492
      %v677 = vpop.f32.mrb[0].mxu0
      %v678 = vadd.f32 %v444, %v677
      %v679 = vpop.f32.mrb[0].mxu0
      %v680 = vpop.f32.mrb[0].mxu0
      %v681 = vadd.f32 %v444, %v680
      %v682 = vpop.f32.mrb[0].mxu0
      %683 = vmatprep.mubr.bf16.mxu0 %v496
      %684 = vmatmul.mubr.bf16.gmra.mrb[0].mxu0 %v495
      %v685 = vpop.f32.mrb[0].mxu0
      %v686 = vadd.f32 %v444, %v685
      %v687 = vpop.f32.mrb[0].mxu0
      %v688 = vpop.f32.mrb[0].mxu0
      %v689 = vadd.f32 %v444, %v688
      %v690 = vpop.f32.mrb[0].mxu0
      %691 = vdwg.mxu0
      %692 = vmatprep.subr.bf16.mxu0 0
      %693 = vmatpush1.bf16.msra.mxu0 %v594
      %694 = vmatprep.subr.bf16.mxu0 0
      %695 = vmatpush1.bf16.msra.mxu0 %v595
      %696 = vmatprep.subr.bf16.mxu0 0
      %697 = vmatpush1.bf16.msra.mxu0 0
      %698 = vmatprep.subr.bf16.mxu0 0
      %699 = vmatpush1.bf16.msra.mxu0 0
      %700 = vmatprep.subr.bf16.mxu0 0
      %701 = vmatpush1.bf16.msra.mxu0 0
      %702 = vmatprep.subr.bf16.mxu0 0
      %703 = vmatpush1.bf16.msra.mxu0 0
      %704 = vmatprep.subr.bf16.mxu0 0
      %705 = vmatpush1.bf16.msra.mxu0 0
      %706 = vmatprep.subr.bf16.mxu0 0
      %707 = vmatpush1.bf16.msra.mxu0 0
      %708 = vmatprep.subr.bf16.mxu0 0
      %709 = vmatpush1.bf16.msra.mxu0 0
      %710 = vmatprep.subr.bf16.mxu0 0
      %711 = vmatpush1.bf16.msra.mxu0 0
      %712 = vmatprep.subr.bf16.mxu0 0
      %713 = vmatpush1.bf16.msra.mxu0 0
      %714 = vmatprep.subr.bf16.mxu0 0
      %715 = vmatpush1.bf16.msra.mxu0 0
      %716 = vmatprep.subr.bf16.mxu0 0
      %717 = vmatpush1.bf16.msra.mxu0 0
      %718 = vmatprep.subr.bf16.mxu0 0
      %719 = vmatpush1.bf16.msra.mxu0 0
      %720 = vmatprep.subr.bf16.mxu0 0
      %721 = vmatpush1.bf16.msra.mxu0 0
      %722 = vmatprep.subr.bf16.mxu0 0
      %723 = vmatpush1.bf16.msra.mxu0 0
      %724 = vmatprep.mubr.bf16.mxu0 0
      %725 = vmatmul.mubr.bf16.gmra.mrb[0].mxu0 %v616
      %v726 = vpop.f32.mrb[0].mxu0
      %v727 = vadd.f32 %v662, %v726
      %v728 = vpop.f32.mrb[0].mxu0
      %v729 = vpop.f32.mrb[0].mxu0
      %v730 = vadd.f32 %v665, %v729
      %v731 = vpop.f32.mrb[0].mxu0
      %732 = vmatprep.mubr.bf16.mxu0 0
      %733 = vmatmul.mubr.bf16.gmra.mrb[0].mxu0 %v619
      %v734 = vpop.f32.mrb[0].mxu0
      %v735 = vadd.f32 %v670, %v734
      %v736 = vpop.f32.mrb[0].mxu0
      %v737 = vpop.f32.mrb[0].mxu0
      %v738 = vadd.f32 %v673, %v737
      %v739 = vpop.f32.mrb[0].mxu0
      %740 = vmatprep.mubr.bf16.mxu0 0
      %741 = vmatmul.mubr.bf16.gmra.mrb[0].mxu0 %v622
      %v742 = vpop.f32.mrb[0].mxu0
      %v743 = vadd.f32 %v678, %v742
      %v744 = vpop.f32.mrb[0].mxu0
      %v745 = vpop.f32.mrb[0].mxu0
      %v746 = vadd.f32 %v681, %v745
      %v747 = vpop.f32.mrb[0].mxu0
      %748 = vmatprep.mubr.bf16.mxu0 0
      %749 = vmatmul.mubr.bf16.gmra.mrb[0].mxu0 %v625
      %v750 = vpop.f32.mrb[0].mxu0
      %v751 = vadd.f32 %v686, %v750
      %v752 = vpop.f32.mrb[0].mxu0
      %v753 = vpop.f32.mrb[0].mxu0
      %v754 = vadd.f32 %v689, %v753
      %v755 = vpop.f32.mrb[0].mxu0
      %756 = vdwg.mxu0
      %v757 = vxor.u32 %v727, 2147483648
      %v758 = vxor.u32 %v730, 2147483648
      %v759 = vxor.u32 %v735, 2147483648
      %v760 = vxor.u32 %v738, 2147483648
      %v761 = vxor.u32 %v743, 2147483648
      %v762 = vxor.u32 %v746, 2147483648
      %v763 = vxor.u32 %v751, 2147483648
      %v764 = vxor.u32 %v754, 2147483648
      %v765 = vmul.f32 %v757, 1.442695
      %v766 = vpow.pop %v765
      %v767 = vmul.f32 %v758, 1.442695
      %v768 = vpow.pop %v767
      %v769 = vmul.f32 %v759, 1.442695
      %v770 = vpow.pop %v769
      %v771 = vmul.f32 %v760, 1.442695
      %v772 = vpow.pop %v771
      %v773 = vmul.f32 %v761, 1.442695
      %v774 = vpow.pop %v773
      %v775 = vmul.f32 %v762, 1.442695
      %v776 = vpow.pop %v775
      %v777 = vmul.f32 %v763, 1.442695
      %v778 = vpow.pop %v777
      %v779 = vmul.f32 %v764, 1.442695
      %v780 = vpow.pop %v779
      %v781 = vadd.f32 %v766, 1.0
      %v782 = vadd.f32 %v768, 1.0
      %v783 = vadd.f32 %v770, 1.0
      %v784 = vadd.f32 %v772, 1.0
      %v785 = vadd.f32 %v774, 1.0
      %v786 = vadd.f32 %v776, 1.0
      %v787 = vadd.f32 %v778, 1.0
      %v788 = vadd.f32 %v780, 1.0
      %v789 = vrcp.pop %v781
      %v790 = vmul.f32 1.0, %v789
      %v791 = vrcp.pop %v782
      %v792 = vmul.f32 1.0, %v791
      %v793 = vrcp.pop %v783
      %v794 = vmul.f32 1.0, %v793
      %v795 = vrcp.pop %v784
      %v796 = vmul.f32 1.0, %v795
      %v797 = vrcp.pop %v785
      %v798 = vmul.f32 1.0, %v797
      %v799 = vrcp.pop %v786
      %v800 = vmul.f32 1.0, %v799
      %v801 = vrcp.pop %v787
      %v802 = vmul.f32 1.0, %v801
      %v803 = vrcp.pop %v788
      %v804 = vmul.f32 1.0, %v803
      %v805 = vmul.f32 %v727, %v790
      %v806 = vmul.f32 %v730, %v792
      %v807 = vmul.f32 %v735, %v794
      %v808 = vmul.f32 %v738, %v796
      %v809 = vmul.f32 %v743, %v798
      %v810 = vmul.f32 %v746, %v800
      %v811 = vmul.f32 %v751, %v802
      %v812 = vmul.f32 %v754, %v804
      %v813 = vpack.c.bf16 %v806, %v805
      %v814 = vpack.c.bf16 %v808, %v807
      %v815 = vpack.c.bf16 %v810, %v809
      %v816 = vpack.c.bf16 %v812, %v811
      %v821 = vunpack.c.l.b16 %v813
      %v822 = vunpack.c.h.b16 %v813
      %v823 = vunpack.c.l.b16 %v814
      %v824 = vunpack.c.h.b16 %v814
      %v825 = vunpack.c.l.b16 %v815
      %v826 = vunpack.c.h.b16 %v815
      %v827 = vunpack.c.l.b16 %v816
      %v828 = vunpack.c.h.b16 %v816
      %v829 = vpack.c.b16 %v821, %v821
      %v830 = vpack.c.b16 %v822, %v822
      %v831 = vpack.c.b16 %v823, %v823
      %v832 = vpack.c.b16 %v824, %v824
      %v833 = vpack.c.b16 %v825, %v825
      %v834 = vpack.c.b16 %v826, %v826
      %v835 = vpack.c.b16 %v827, %v827
      %v836 = vpack.c.b16 %v828, %v828
      %vm845 = vcmask 519168
      %846 = vst.msk [vmem:[%s374] sm:$0xf] %vm845, %v829
      %847 = vst.msk [vmem:[%s374 + $0x4] sm:$0xf] %vm845, %v830
      %848 = vst.msk [vmem:[%s374 + $0x8] sm:$0xf] %vm845, %v831
      %849 = vst.msk [vmem:[%s374 + $0xc] sm:$0xf] %vm845, %v832
      %850 = vst.msk [vmem:[%s374 + $0x10] sm:$0xf] %vm845, %v833
      %851 = vst.msk [vmem:[%s374 + $0x14] sm:$0xf] %vm845, %v834
      %852 = vst.msk [vmem:[%s374 + $0x18] sm:$0xf] %vm845, %v835
      %853 = vst.msk [vmem:[%s374 + $0x1c] sm:$0xf] %vm845, %v836
      %v854 = vld [vmem:[%s361] sm:$0xf]
      %v855 = vld [vmem:[%s361 + $0x4] sm:$0xf]
      %v856 = vld [vmem:[%s361 + $0x8] sm:$0xf]
      %v857 = vld [vmem:[%s361 + $0xc] sm:$0xf]
      %v858 = vld [vmem:[%s361 + $0x10] sm:$0xf]
      %v859 = vld [vmem:[%s361 + $0x14] sm:$0xf]
      %v860 = vld [vmem:[%s361 + $0x18] sm:$0xf]
      %v861 = vld [vmem:[%s361 + $0x1c] sm:$0xf]
      %v870 = vunpack.c.l.b16 %v854
      %v871 = vunpack.c.l.b16 %v855
      %v872 = vunpack.c.l.b16 %v856
      %v873 = vunpack.c.l.b16 %v857
      %v874 = vunpack.c.l.b16 %v858
      %v875 = vunpack.c.l.b16 %v859
      %v876 = vunpack.c.l.b16 %v860
      %v877 = vunpack.c.l.b16 %v861
      %v878 = vpack.c.b16 %v871, %v870
      %v879 = vpack.c.b16 %v873, %v872
      %v880 = vpack.c.b16 %v875, %v874
      %v881 = vpack.c.b16 %v877, %v876
      %vm886 = vcmask 523264
      %v888 = vsel %vm886, %v813, 0
      %v891 = vsel %vm886, %v814, 0
      %v894 = vsel %vm886, %v815, 0
      %v897 = vsel %vm886, %v816, 0
      %899 = vmatprep.subr.bf16.mxu0 0
      %900 = vmatpush1.bf16.msra.mxu0 %v878
      %901 = vmatprep.subr.bf16.mxu0 0
      %902 = vmatpush1.bf16.msra.mxu0 %v879
      %903 = vmatprep.subr.bf16.mxu0 0
      %904 = vmatpush1.bf16.msra.mxu0 %v880
      %905 = vmatprep.subr.bf16.mxu0 0
      %906 = vmatpush1.bf16.msra.mxu0 %v881
      %907 = vmatprep.subr.bf16.mxu0 0
      %908 = vmatpush1.bf16.msra.mxu0 0
      %909 = vmatprep.subr.bf16.mxu0 0
      %910 = vmatpush1.bf16.msra.mxu0 0
      %911 = vmatprep.subr.bf16.mxu0 0
      %912 = vmatpush1.bf16.msra.mxu0 0
      %913 = vmatprep.subr.bf16.mxu0 0
      %914 = vmatpush1.bf16.msra.mxu0 0
      %915 = vmatprep.subr.bf16.mxu0 0
      %916 = vmatpush1.bf16.msra.mxu0 0
      %917 = vmatprep.subr.bf16.mxu0 0
      %918 = vmatpush1.bf16.msra.mxu0 0
      %919 = vmatprep.subr.bf16.mxu0 0
      %920 = vmatpush1.bf16.msra.mxu0 0
      %921 = vmatprep.subr.bf16.mxu0 0
      %922 = vmatpush1.bf16.msra.mxu0 0
      %923 = vmatprep.subr.bf16.mxu0 0
      %924 = vmatpush1.bf16.msra.mxu0 0
      %925 = vmatprep.subr.bf16.mxu0 0
      %926 = vmatpush1.bf16.msra.mxu0 0
      %927 = vmatprep.subr.bf16.mxu0 0
      %928 = vmatpush1.bf16.msra.mxu0 0
      %929 = vmatprep.subr.bf16.mxu0 0
      %930 = vmatpush1.bf16.msra.mxu0 0
      %931 = vmatprep.mubr.bf16.mxu0 0
      %932 = vmatmul.mubr.bf16.gmra.mrb[0].mxu0 %v888
      %v933 = vpop.f32.mrb[0].mxu0
      %v934 = vadd.f32 0.0, %v933
      %v935 = vpop.f32.mrb[0].mxu0
      %v936 = vpop.f32.mrb[0].mxu0
      %v937 = vadd.f32 0.0, %v936
      %v938 = vpop.f32.mrb[0].mxu0
      %939 = vmatprep.mubr.bf16.mxu0 0
      %940 = vmatmul.mubr.bf16.gmra.mrb[0].mxu0 %v891
      %v941 = vpop.f32.mrb[0].mxu0
      %v942 = vadd.f32 0.0, %v941
      %v943 = vpop.f32.mrb[0].mxu0
      %v944 = vpop.f32.mrb[0].mxu0
      %v945 = vadd.f32 0.0, %v944
      %v946 = vpop.f32.mrb[0].mxu0
      %947 = vmatprep.mubr.bf16.mxu0 0
      %948 = vmatmul.mubr.bf16.gmra.mrb[0].mxu0 %v894
      %v949 = vpop.f32.mrb[0].mxu0
      %v950 = vadd.f32 0.0, %v949
      %v951 = vpop.f32.mrb[0].mxu0
      %v952 = vpop.f32.mrb[0].mxu0
      %v953 = vadd.f32 0.0, %v952
      %v954 = vpop.f32.mrb[0].mxu0
      %955 = vmatprep.mubr.bf16.mxu0 0
      %956 = vmatmul.mubr.bf16.gmra.mrb[0].mxu0 %v897
      %v957 = vpop.f32.mrb[0].mxu0
      %v958 = vadd.f32 0.0, %v957
      %v959 = vpop.f32.mrb[0].mxu0
      %v960 = vpop.f32.mrb[0].mxu0
      %v961 = vadd.f32 0.0, %v960
      %v962 = vpop.f32.mrb[0].mxu0
      %963 = vdwg.mxu0
      %p964 = scmp.eq.s32.totalorder %s25, 0
      // Predicated region
      $region41: #{_lambda_.4} parent=39 // pred_check
        %p965 = pneg %p964
      $region42: #{_lambda_.4} parent=39 // pred_check_branch
        %967 = sbr.rel (%p965) target = $region44
      $region43: #{_lambda_.4} parent=39 // pred_region
        %v968 = vld [vmem:[%s4] sm:$0x1]
        %v970 = vlaneseq
        %v971 = vshrl.u32 %v970, 7
        %v972 = vsub.s32 0, %v971
        %v973 = vrot.slane %v968, %v972
        %v975 = vadd.f32 %v973, %v934
        %v976 = vadd.f32 %v973, %v937
        %v977 = vadd.f32 %v973, %v942
        %v978 = vadd.f32 %v973, %v945
        %v979 = vadd.f32 %v973, %v950
        %v980 = vadd.f32 %v973, %v953
        %v981 = vadd.f32 %v973, %v958
        %v982 = vadd.f32 %v973, %v961
        %983 = vst.msk [vmem:[%s384] sm:$0xff] %vm886, %v975
        %984 = vst.msk [vmem:[%s384 + $0x8] sm:$0xff] %vm886, %v976
        %985 = vst.msk [vmem:[%s384 + $0x10] sm:$0xff] %vm886, %v977
        %986 = vst.msk [vmem:[%s384 + $0x18] sm:$0xff] %vm886, %v978
        %987 = vst.msk [vmem:[%s384 + $0x20] sm:$0xff] %vm886, %v979
        %988 = vst.msk [vmem:[%s384 + $0x28] sm:$0xff] %vm886, %v980
        %989 = vst.msk [vmem:[%s384 + $0x30] sm:$0xff] %vm886, %v981
        %990 = vst.msk [vmem:[%s384 + $0x38] sm:$0xff] %vm886, %v982
      $region44: #{_lambda_.4} parent=39 // pred_fallthru
        _
      %p991 = scmp.ne.s32.totalorder %s25, 0
      // Predicated region
      $region45: #{_lambda_.4} parent=39 // pred_check
        %p992 = pneg %p991
      $region46: #{_lambda_.4} parent=39 // pred_check_branch
        %994 = sbr.rel (%p992) target = $region48
      $region47: #{_lambda_.4} parent=39 // pred_region
        %v995 = vld [vmem:[%s384] sm:$0xff]
        %v996 = vld [vmem:[%s384 + $0x8] sm:$0xff]
        %v997 = vld [vmem:[%s384 + $0x10] sm:$0xff]
        %v998 = vld [vmem:[%s384 + $0x18] sm:$0xff]
        %v999 = vld [vmem:[%s384 + $0x20] sm:$0xff]
        %v1000 = vld [vmem:[%s384 + $0x28] sm:$0xff]
        %v1001 = vld [vmem:[%s384 + $0x30] sm:$0xff]
        %v1002 = vld [vmem:[%s384 + $0x38] sm:$0xff]
        %v1003 = vadd.f32 %v995, %v934
        %v1004 = vadd.f32 %v996, %v937
        %v1005 = vadd.f32 %v997, %v942
        %v1006 = vadd.f32 %v998, %v945
        %v1007 = vadd.f32 %v999, %v950
        %v1008 = vadd.f32 %v1000, %v953
        %v1009 = vadd.f32 %v1001, %v958
        %v1010 = vadd.f32 %v1002, %v961
        %1011 = vst.msk [vmem:[%s384] sm:$0xff] %vm886, %v1003
        %1012 = vst.msk [vmem:[%s384 + $0x8] sm:$0xff] %vm886, %v1004
        %1013 = vst.msk [vmem:[%s384 + $0x10] sm:$0xff] %vm886, %v1005
        %1014 = vst.msk [vmem:[%s384 + $0x18] sm:$0xff] %vm886, %v1006
        %1015 = vst.msk [vmem:[%s384 + $0x20] sm:$0xff] %vm886, %v1007
        %1016 = vst.msk [vmem:[%s384 + $0x28] sm:$0xff] %vm886, %v1008
        %1017 = vst.msk [vmem:[%s384 + $0x30] sm:$0xff] %vm886, %v1009
        %1018 = vst.msk [vmem:[%s384 + $0x38] sm:$0xff] %vm886, %v1010
      $region48: #{_lambda_.4} parent=39 // pred_fallthru
        _
      %s1019 = smul.u32 8, %s24
      %p1020 = scmp.lt.s32.totalorder %s23, 1
      %s1021 = scalar_select %p1020, %s23, 1
      %p1022 = scmp.lt.s32.totalorder %s1019, 7
      %s1023 = scalar_select %p1022, %s1019, 7
      %p1024 = scmp.lt.s32.totalorder %s25, 0
      %s1025 = scalar_select %p1024, %s25, 0
      %s1026 = sadd.s32 %s1025, %s1023
      %s1027 = smul.addr %s1021, 8
      %s1028 = sadd.s32 %s1026, %s1027
      %s1029 = smul.addr %s1028, 4
      %s1030 = scalar_lea.vmem %s5, %s1029
      %s1031 = smul.u32 8, %s24
      %p1032 = scmp.lt.s32.totalorder %s23, 1
      %s1033 = scalar_select %p1032, %s23, 1
      %p1034 = scmp.lt.s32.totalorder %s1031, 7
      %s1035 = scalar_select %p1034, %s1031, 7
      %s1036 = smul.addr %s1033, 8
      %s1037 = sadd.s32 %s1035, %s1036
      %s1038 = smul.addr %s1037, 8
      %s1039 = scalar_lea.vmem %s6, %s1038
      // Predicated region
      $region49: #{_lambda_.4} parent=39 // pred_check
        %p1040 = pneg %p186
      $region50: #{_lambda_.4} parent=39 // pred_check_branch
        %1042 = sbr.rel (%p1040) target = $region52
      $region51: #{_lambda_.4} parent=39 // pred_region
        %s1043 = smul.u32 8, %s24
      $region52: #{_lambda_.4} parent=39 // pred_fallthru
        _
      // Predicated region
      $region53: #{_lambda_.4} parent=39 // pred_check
        %p1044 = pneg %p214
      $region54: #{_lambda_.4} parent=39 // pred_check_branch
        %1046 = sbr.rel (%p1044) target = $region56
      $region55: #{_lambda_.4} parent=39 // pred_region
        %s1047 = smul.u32 8, %s24
      $region56: #{_lambda_.4} parent=39 // pred_fallthru
        _
    $region40: #{_lambda_.4} parent=5 // pred_fallthru
      _
    %p1048 = scmp.le.s32.totalorder 2, %s13
    // Predicated region
    $region57: #{_lambda_.4} parent=5 // pred_check
      %p1049 = pneg %p1048
    $region58: #{_lambda_.4} parent=5 // pred_check_branch
      %1051 = sbr.rel (%p1049) target = $region60
    $region59: #{_lambda_.4} parent=5 // pred_region
      %s1052 = ssub.s32 %s13, 2
      // Predicated region
      $region61: #{_lambda_.4} parent=59 // pred_check
        %p1053 = pneg %p192
      $region62: #{_lambda_.4} parent=59 // pred_check_branch
        %1055 = sbr.rel (%p1053) target = $region64
      $region63: #{_lambda_.4} parent=59 // pred_region
        %s1056 = smul.u32 8, %s27
        %p1057 = scmp.lt.s32.totalorder %s26, 1
        %s1058 = scalar_select %p1057, %s26, 1
        %p1059 = scmp.lt.s32.totalorder %s1056, 7
        %s1060 = scalar_select %p1059, %s1056, 7
        %p1061 = scmp.lt.s32.totalorder %s28, 0
        %s1062 = scalar_select %p1061, %s28, 0
        %s1063 = sadd.s32 %s1062, %s1060
        %s1064 = smul.addr %s1058, 8
        %s1065 = sadd.s32 %s1063, %s1064
        %s1066 = smul.addr %s1065, 4
        %s1067 = scalar_lea.vmem %s5, %s1066
      $region64: #{_lambda_.4} parent=59 // pred_fallthru
        _
      // Predicated region
      $region65: #{_lambda_.4} parent=59 // pred_check
        %p1068 = pneg %p220
      $region66: #{_lambda_.4} parent=59 // pred_check_branch
        %1070 = sbr.rel (%p1068) target = $region68
      $region67: #{_lambda_.4} parent=59 // pred_region
        %s1071 = smul.u32 8, %s27
        %p1072 = scmp.lt.s32.totalorder %s26, 1
        %s1073 = scalar_select %p1072, %s26, 1
        %p1074 = scmp.lt.s32.totalorder %s1071, 7
        %s1075 = scalar_select %p1074, %s1071, 7
        %s1076 = smul.addr %s1073, 8
        %s1077 = sadd.s32 %s1075, %s1076
        %s1078 = smul.addr %s1077, 8
        %s1079 = scalar_lea.vmem %s6, %s1078
      $region68: #{_lambda_.4} parent=59 // pred_fallthru
        _
    $region60: #{_lambda_.4} parent=5 // pred_fallthru
      _
  $region6: #{_lambda_.4} parent=0 // loop_footer
    %s17 = sadd.s32 1, %s13
  $region7: #{_lambda_.4} parent=0 // loop_footer_branch
    %12 = sbr.rel target = $region3
  $region8: #{_lambda_.4} parent=0 // loop_exit
    _

// kernel: _lambda_.5
$region0: #{_lambda_.5}
  #allocation0 [shape = 'u32[]', space=smem, size = 0x4, offset = 0x4, fixed_abs, tag = 'smem constant byte address 0x4 - core index']
  #allocation1 [shape = 'u32[144,128]{1,0:T(1,128)}', space=vmem, size = 0x12000, scoped, tag = 'internal scratch']
  %s0 = inlined_call_operand.vmem [shape: bf16[2,32,576], index: 0, kind: input, shape index: {}]
  %s1 = inlined_call_operand.vmem [shape: bf16[576,128], index: 1, kind: input, shape index: {}]
  %s2 = inlined_call_operand.vmem [shape: f32[1,128], index: 2, kind: input, shape index: {}]
  %s3 = inlined_call_operand.vmem [shape: bf16[128,128], index: 3, kind: input, shape index: {}]
  %s4 = inlined_call_operand.vmem [shape: f32[1,128], index: 4, kind: input, shape index: {}]
  %s5 = inlined_call_operand.vmem [shape: bf16[2,32,128], index: 5, kind: output, shape index: {0}]
  %s6 = inlined_call_operand.vmem [shape: f32[2,32,128], index: 6, kind: output, shape index: {1}]
  %7 = xla_tuple %s5, %s6
  %s8 = sld [smem:[#allocation0]]
  $region69: #{_lambda_.5} parent=0
    _
  %s10 = ssub.s32 1, %s8
  %s11 = scalar_select 0, %s10, %s8
  loop: start=0, step=1, limit=4
  $region2: #{_lambda_.5} parent=0 // loop_pre_header
    _
  $region3: #{_lambda_.5} parent=0 // loop_header
    %s13 = sphi 0, %s17
    %p14 = scmp.ge.s32.totalorder %s13, 4
    %s20 = sphi 0, %s39
    %s21 = sphi 0, %s35
    %s22 = sphi 0, %s31
    %s23 = sphi 0, %s20
    %s24 = sphi 0, %s21
    %s25 = sphi 0, %s22
    %s26 = sphi 0, %s23
    %s27 = sphi 0, %s24
    %s28 = sphi 0, %s25
    %s44 = sphi 0, %s46
    %s47 = sphi 0, %s44
    %s48 = sphi 0, %s47
    %s64 = sphi 0, %s48
    %s70 = sphi 0, %s72
    %s73 = sphi 0, %s70
    %s74 = sphi 0, %s73
    %s90 = sphi 0, %s74
    %s96 = sphi 0, %s98
    %s99 = sphi 0, %s96
    %s100 = sphi 0, %s99
    %s116 = sphi 0, %s100
    %s122 = sphi 0, %s124
    %s125 = sphi 0, %s122
    %s126 = sphi 0, %s125
    %s142 = sphi 0, %s126
    %s146 = sphi 0, %s146
    %s148 = sphi 0, %s146
    %s149 = sphi 0, %s148
    %s163 = sphi 0, %s149
    %s173 = sphi 0, %s175
    %s176 = sphi 0, %s173
    %s177 = sphi 0, %s176
    %s193 = sphi 0, %s177
    %s201 = sphi 0, %s203
    %s204 = sphi 0, %s201
    %s205 = sphi 0, %s204
    %s221 = sphi 0, %s205
  $region4: #{_lambda_.5} parent=0 // loop_header_branch
    %16 = sbr.rel (%p14) target = $region8
  $region5: #{_lambda_.5} parent=0 // loop_body
    %s18 = ssub.s32 %s13, 1
    %s19 = ssub.s32 %s13, 2
    %s29 = sadd.s32 1, %s22
    %p30 = scmp.ge.s32.totalorder %s29, 1
    %s31 = scalar_select %p30, 0, %s29
    %s32 = sadd.s32 1, %s21
    %s33 = scalar_select %p30, %s32, %s21
    %p34 = scmp.ge.s32.totalorder %s33, 1
    %s35 = scalar_select %p34, 0, %s33
    %s36 = sadd.s32 1, %s20
    %s37 = scalar_select %p34, %s36, %s20
    %p38 = scmp.ge.s32.totalorder %s37, 2
    %s39 = scalar_select %p38, 0, %s37
    %s40 = ssub.s32 %s20, %s39
    %s41 = ssub.s32 %s21, %s35
    %s42 = sor.u32 %s40, %s41
    %p43 = scmp.eq.s32.totalorder %s42, 0
    %s45 = sadd.s32 %s44, 1
    %s46 = scalar_select %p43, %s44, %s45
    %p49 = pneg %p43
    %p50 = scmp.eq.s32.totalorder %s13, 1
    %p51 = por %p49, %p50
    %p52 = scmp.ne.s32.totalorder %s44, %s47
    %p53 = scmp.eq.s32.totalorder %s13, 0
    %p54 = por %p52, %p53
    %p55 = scmp.ne.s32.totalorder %s44, %s47
    %p56 = scmp.eq.s32.totalorder %s18, 1
    %p57 = por %p55, %p56
    %p58 = scmp.ne.s32.totalorder %s47, %s48
    %p59 = scmp.eq.s32.totalorder %s18, 0
    %p60 = por %p58, %p59
    %p61 = scmp.ne.s32.totalorder %s47, %s48
    %p62 = scmp.eq.s32.totalorder %s19, 1
    %p63 = por %p61, %p62
    %p65 = scmp.ne.s32.totalorder %s48, %s64
    %p66 = scmp.eq.s32.totalorder %s19, 0
    %p67 = por %p65, %p66
    %s68 = ssub.s32 %s22, %s31
    %p69 = scmp.eq.s32.totalorder %s68, 0
    %s71 = sadd.s32 %s70, 1
    %s72 = scalar_select %p69, %s70, %s71
    %p75 = pneg %p69
    %p76 = scmp.eq.s32.totalorder %s13, 1
    %p77 = por %p75, %p76
    %p78 = scmp.ne.s32.totalorder %s70, %s73
    %p79 = scmp.eq.s32.totalorder %s13, 0
    %p80 = por %p78, %p79
    %p81 = scmp.ne.s32.totalorder %s70, %s73
    %p82 = scmp.eq.s32.totalorder %s18, 1
    %p83 = por %p81, %p82
    %p84 = scmp.ne.s32.totalorder %s73, %s74
    %p85 = scmp.eq.s32.totalorder %s18, 0
    %p86 = por %p84, %p85
    %p87 = scmp.ne.s32.totalorder %s73, %s74
    %p88 = scmp.eq.s32.totalorder %s19, 1
    %p89 = por %p87, %p88
    %p91 = scmp.ne.s32.totalorder %s74, %s90
    %p92 = scmp.eq.s32.totalorder %s19, 0
    %p93 = por %p91, %p92
    %s94 = ssub.s32 %s22, %s31
    %p95 = scmp.eq.s32.totalorder %s94, 0
    %s97 = sadd.s32 %s96, 1
    %s98 = scalar_select %p95, %s96, %s97
    %p101 = pneg %p95
    %p102 = scmp.eq.s32.totalorder %s13, 1
    %p103 = por %p101, %p102
    %p104 = scmp.ne.s32.totalorder %s96, %s99
    %p105 = scmp.eq.s32.totalorder %s13, 0
    %p106 = por %p104, %p105
    %p107 = scmp.ne.s32.totalorder %s96, %s99
    %p108 = scmp.eq.s32.totalorder %s18, 1
    %p109 = por %p107, %p108
    %p110 = scmp.ne.s32.totalorder %s99, %s100
    %p111 = scmp.eq.s32.totalorder %s18, 0
    %p112 = por %p110, %p111
    %p113 = scmp.ne.s32.totalorder %s99, %s100
    %p114 = scmp.eq.s32.totalorder %s19, 1
    %p115 = por %p113, %p114
    %p117 = scmp.ne.s32.totalorder %s100, %s116
    %p118 = scmp.eq.s32.totalorder %s19, 0
    %p119 = por %p117, %p118
    %s120 = ssub.s32 %s22, %s31
    %p121 = scmp.eq.s32.totalorder %s120, 0
    %s123 = sadd.s32 %s122, 1
    %s124 = scalar_select %p121, %s122, %s123
    %p127 = pneg %p121
    %p128 = scmp.eq.s32.totalorder %s13, 1
    %p129 = por %p127, %p128
    %p130 = scmp.ne.s32.totalorder %s122, %s125
    %p131 = scmp.eq.s32.totalorder %s13, 0
    %p132 = por %p130, %p131
    %p133 = scmp.ne.s32.totalorder %s122, %s125
    %p134 = scmp.eq.s32.totalorder %s18, 1
    %p135 = por %p133, %p134
    %p136 = scmp.ne.s32.totalorder %s125, %s126
    %p137 = scmp.eq.s32.totalorder %s18, 0
    %p138 = por %p136, %p137
    %p139 = scmp.ne.s32.totalorder %s125, %s126
    %p140 = scmp.eq.s32.totalorder %s19, 1
    %p141 = por %p139, %p140
    %p143 = scmp.ne.s32.totalorder %s126, %s142
    %p144 = scmp.eq.s32.totalorder %s19, 0
    %p145 = por %p143, %p144
    %s147 = sadd.s32 %s146, 1
    %p150 = scmp.eq.s32.totalorder %s13, 1
    %p151 = scmp.ne.s32.totalorder %s146, %s148
    %p152 = scmp.eq.s32.totalorder %s13, 0
    %p153 = por %p151, %p152
    %p154 = scmp.ne.s32.totalorder %s146, %s148
    %p155 = scmp.eq.s32.totalorder %s18, 1
    %p156 = por %p154, %p155
    %p157 = scmp.ne.s32.totalorder %s148, %s149
    %p158 = scmp.eq.s32.totalorder %s18, 0
    %p159 = por %p157, %p158
    %p160 = scmp.ne.s32.totalorder %s148, %s149
    %p161 = scmp.eq.s32.totalorder %s19, 1
    %p162 = por %p160, %p161
    %p164 = scmp.ne.s32.totalorder %s149, %s163
    %p165 = scmp.eq.s32.totalorder %s19, 0
    %p166 = por %p164, %p165
    %s167 = ssub.s32 %s20, %s39
    %s168 = ssub.s32 %s21, %s35
    %s169 = sor.u32 %s167, %s168
    %s170 = ssub.s32 %s22, %s31
    %s171 = sor.u32 %s169, %s170
    %p172 = scmp.eq.s32.totalorder %s171, 0
    %s174 = sadd.s32 %s173, 1
    %s175 = scalar_select %p172, %s173, %s174
    %p178 = pneg %p172
    %p179 = scmp.eq.s32.totalorder %s13, 1
    %p180 = por %p178, %p179
    %p181 = scmp.ne.s32.totalorder %s173, %s176
    %p182 = scmp.eq.s32.totalorder %s13, 0
    %p183 = por %p181, %p182
    %p184 = scmp.ne.s32.totalorder %s173, %s176
    %p185 = scmp.eq.s32.totalorder %s18, 1
    %p186 = por %p184, %p185
    %p187 = scmp.ne.s32.totalorder %s176, %s177
    %p188 = scmp.eq.s32.totalorder %s18, 0
    %p189 = por %p187, %p188
    %p190 = scmp.ne.s32.totalorder %s176, %s177
    %p191 = scmp.eq.s32.totalorder %s19, 1
    %p192 = por %p190, %p191
    %p194 = scmp.ne.s32.totalorder %s177, %s193
    %p195 = scmp.eq.s32.totalorder %s19, 0
    %p196 = por %p194, %p195
    %s197 = ssub.s32 %s20, %s39
    %s198 = ssub.s32 %s21, %s35
    %s199 = sor.u32 %s197, %s198
    %p200 = scmp.eq.s32.totalorder %s199, 0
    %s202 = sadd.s32 %s201, 1
    %s203 = scalar_select %p200, %s201, %s202
    %p206 = pneg %p200
    %p207 = scmp.eq.s32.totalorder %s13, 1
    %p208 = por %p206, %p207
    %p209 = scmp.ne.s32.totalorder %s201, %s204
    %p210 = scmp.eq.s32.totalorder %s13, 0
    %p211 = por %p209, %p210
    %p212 = scmp.ne.s32.totalorder %s201, %s204
    %p213 = scmp.eq.s32.totalorder %s18, 1
    %p214 = por %p212, %p213
    %p215 = scmp.ne.s32.totalorder %s204, %s205
    %p216 = scmp.eq.s32.totalorder %s18, 0
    %p217 = por %p215, %p216
    %p218 = scmp.ne.s32.totalorder %s204, %s205
    %p219 = scmp.eq.s32.totalorder %s19, 1
    %p220 = por %p218, %p219
    %p222 = scmp.ne.s32.totalorder %s205, %s221
    %p223 = scmp.eq.s32.totalorder %s19, 0
    %p224 = por %p222, %p223
    %p225 = scmp.le.s32.totalorder 1, %s13
    %p226 = scmp.lt.s32.totalorder %s13, 3
    %p227 = pnand %p225, %p226
    %p228 = pneg %p227
    // Predicated region
    $region9: #{_lambda_.5} parent=5 // pred_check
      _
    $region10: #{_lambda_.5} parent=5 // pred_check_branch
      %230 = sbr.rel (%p227) target = $region12
    $region11: #{_lambda_.5} parent=5 // pred_region
      %s231 = ssub.s32 %s13, 1
      // Predicated region
      $region13: #{_lambda_.5} parent=11 // pred_check
        %p232 = pneg %p86
      $region14: #{_lambda_.5} parent=11 // pred_check_branch
        %234 = sbr.rel (%p232) target = $region16
      $region15: #{_lambda_.5} parent=11 // pred_region
        %p235 = scmp.lt.s32.totalorder %s25, 0
        %s236 = scalar_select %p235, %s25, 0
        %s237 = smul.addr %s236, 4
        %s238 = scalar_lea.vmem %s1, %s237
      $region16: #{_lambda_.5} parent=11 // pred_fallthru
        _
      // Predicated region
      $region17: #{_lambda_.5} parent=11 // pred_check
        %p239 = pneg %p112
      $region18: #{_lambda_.5} parent=11 // pred_check_branch
        %241 = sbr.rel (%p239) target = $region20
      $region19: #{_lambda_.5} parent=11 // pred_region
        %p242 = scmp.lt.s32.totalorder %s25, 0
        %s243 = scalar_select %p242, %s25, 0
        %s244 = scalar_lea.vmem %s2, %s243
      $region20: #{_lambda_.5} parent=11 // pred_fallthru
        _
      // Predicated region
      $region21: #{_lambda_.5} parent=11 // pred_check
        %p245 = pneg %p138
      $region22: #{_lambda_.5} parent=11 // pred_check_branch
        %247 = sbr.rel (%p245) target = $region24
      $region23: #{_lambda_.5} parent=11 // pred_region
        %s248 = smul.u32 16, %s25
        %p249 = scmp.lt.s32.totalorder %s248, 15
        %s250 = scalar_select %p249, %s248, 15
        %s251 = smul.addr %s250, 4
        %s252 = scalar_lea.vmem %s3, %s251
        %s253 = smul.u32 16, %s25
      $region24: #{_lambda_.5} parent=11 // pred_fallthru
        _
      // Predicated region
      $region25: #{_lambda_.5} parent=11 // pred_check
        %p254 = pneg %p159
      $region26: #{_lambda_.5} parent=11 // pred_check_branch
        %256 = sbr.rel (%p254) target = $region28
      $region27: #{_lambda_.5} parent=11 // pred_region
        _
      $region28: #{_lambda_.5} parent=11 // pred_fallthru
        _
    $region12: #{_lambda_.5} parent=5 // pred_fallthru
      _
    %p257 = scmp.lt.s32.totalorder %s13, 2
    // Predicated region
    $region29: #{_lambda_.5} parent=5 // pred_check
      %p258 = pneg %p257
    $region30: #{_lambda_.5} parent=5 // pred_check_branch
      %260 = sbr.rel (%p258) target = $region32
    $region31: #{_lambda_.5} parent=5 // pred_region
      // Predicated region
      $region33: #{_lambda_.5} parent=31 // pred_check
        %p261 = pneg %p54
      $region34: #{_lambda_.5} parent=31 // pred_check_branch
        %263 = sbr.rel (%p261) target = $region36
      $region35: #{_lambda_.5} parent=31 // pred_region
        %s264 = smul.u32 4, %s21
        %p265 = scmp.lt.s32.totalorder %s20, 1
        %s266 = scalar_select %p265, %s20, 1
        %p267 = scmp.lt.s32.totalorder %s264, 3
        %s268 = scalar_select %p267, %s264, 3
        %s269 = smul.addr %s268, 5
        %s270 = smul.addr %s266, 20
        %s271 = sadd.s32 %s269, %s270
        %s272 = smul.addr %s271, 4
        %s273 = scalar_lea.vmem %s0, %s272
        %s274 = smul.u32 4, %s21
      $region36: #{_lambda_.5} parent=31 // pred_fallthru
        _
    $region32: #{_lambda_.5} parent=5 // pred_fallthru
      _
    %p275 = scmp.le.s32.totalorder 1, %s13
    %p276 = scmp.lt.s32.totalorder %s13, 3
    %p277 = pnand %p275, %p276
    %p278 = pneg %p277
    // Predicated region
    $region37: #{_lambda_.5} parent=5 // pred_check
      _
    $region38: #{_lambda_.5} parent=5 // pred_check_branch
      %280 = sbr.rel (%p277) target = $region40
    $region39: #{_lambda_.5} parent=5 // pred_region
      %s281 = ssub.s32 %s13, 1
      %s282 = smul.u32 4, %s24
      %p283 = scmp.lt.s32.totalorder %s23, 1
      %s284 = scalar_select %p283, %s23, 1
      %p285 = scmp.lt.s32.totalorder %s282, 3
      %s286 = scalar_select %p285, %s282, 3
      %s287 = smul.addr %s286, 5
      %s288 = smul.addr %s284, 20
      %s289 = sadd.s32 %s287, %s288
      %s290 = smul.addr %s289, 4
      %s291 = scalar_lea.vmem %s0, %s290
      %p292 = pneg %p60
      %p293 = pneg %p57
      %p294 = scmp.lt.s32.totalorder %s25, 0
      %s295 = scalar_select %p294, %s25, 0
      %s296 = smul.addr %s295, 4
      %s297 = scalar_lea.vmem %s1, %s296
      %p298 = pneg %p86
      %p299 = pneg %p83
      %p300 = scmp.lt.s32.totalorder %s25, 0
      %s301 = scalar_select %p300, %s25, 0
      %s302 = scalar_lea.vmem %s2, %s301
      %p303 = pneg %p112
      %p304 = pneg %p109
      %s305 = smul.u32 16, %s25
      %p306 = scmp.lt.s32.totalorder %s305, 15
      %s307 = scalar_select %p306, %s305, 15
      %s308 = smul.addr %s307, 4
      %s309 = scalar_lea.vmem %s3, %s308
      %p310 = pneg %p138
      %p311 = pneg %p135
      %p312 = pneg %p159
      %p313 = pneg %p156
      %p314 = pneg %p189
      %p315 = pneg %p186
      %s316 = smul.u32 4, %s24
      %p317 = scmp.lt.s32.totalorder %s23, 1
      %s318 = scalar_select %p317, %s23, 1
      %p319 = scmp.lt.s32.totalorder %s316, 3
      %s320 = scalar_select %p319, %s316, 3
      %p321 = scmp.lt.s32.totalorder %s25, 0
      %s322 = scalar_select %p321, %s25, 0
      %s323 = sadd.s32 %s322, %s320
      %s324 = smul.addr %s318, 4
      %s325 = sadd.s32 %s323, %s324
      %s326 = smul.addr %s325, 4
      %s327 = scalar_lea.vmem %s5, %s326
      %p328 = pneg %p217
      %p329 = pneg %p214
      %s330 = smul.u32 4, %s24
      %p331 = scmp.lt.s32.totalorder %s23, 1
      %s332 = scalar_select %p331, %s23, 1
      %p333 = scmp.lt.s32.totalorder %s330, 3
      %s334 = scalar_select %p333, %s330, 3
      %s335 = smul.addr %s332, 4
      %s336 = sadd.s32 %s334, %s335
      %s337 = smul.addr %s336, 8
      %s338 = scalar_lea.vmem %s6, %s337
      %s339 = smul.u32 4, %s24
      %p340 = scmp.lt.s32.totalorder %s23, 1
      %s341 = scalar_select %p340, %s23, 1
      %p342 = scmp.lt.s32.totalorder %s339, 3
      %s343 = scalar_select %p342, %s339, 3
      %s344 = smul.addr %s343, 5
      %s345 = smul.addr %s341, 20
      %s346 = sadd.s32 %s344, %s345
      %s347 = smul.addr %s346, 4
      %s348 = scalar_lea.vmem %s0, %s347
      %s349 = smul.u32 4, %s24
      %p350 = scmp.lt.s32.totalorder %s25, 0
      %s351 = scalar_select %p350, %s25, 0
      %s352 = smul.addr %s351, 4
      %s353 = scalar_lea.vmem %s1, %s352
      %p354 = scmp.lt.s32.totalorder %s25, 0
      %s355 = scalar_select %p354, %s25, 0
      %s356 = scalar_lea.vmem %s2, %s355
      %s357 = smul.u32 16, %s25
      %p358 = scmp.lt.s32.totalorder %s357, 15
      %s359 = scalar_select %p358, %s357, 15
      %s360 = smul.addr %s359, 4
      %s361 = scalar_lea.vmem %s3, %s360
      %s362 = smul.u32 16, %s25
      %s363 = smul.u32 4, %s24
      %p364 = scmp.lt.s32.totalorder %s23, 1
      %s365 = scalar_select %p364, %s23, 1
      %p366 = scmp.lt.s32.totalorder %s363, 3
      %s367 = scalar_select %p366, %s363, 3
      %p368 = scmp.lt.s32.totalorder %s25, 0
      %s369 = scalar_select %p368, %s25, 0
      %s370 = sadd.s32 %s369, %s367
      %s371 = smul.addr %s365, 4
      %s372 = sadd.s32 %s370, %s371
      %s373 = smul.addr %s372, 4
      %s374 = scalar_lea.vmem %s5, %s373
      %s375 = smul.u32 4, %s24
      %s376 = smul.u32 4, %s24
      %p377 = scmp.lt.s32.totalorder %s23, 1
      %s378 = scalar_select %p377, %s23, 1
      %p379 = scmp.lt.s32.totalorder %s376, 3
      %s380 = scalar_select %p379, %s376, 3
      %s381 = smul.addr %s378, 4
      %s382 = sadd.s32 %s380, %s381
      %s383 = smul.addr %s382, 8
      %s384 = scalar_lea.vmem %s6, %s383
      %s385 = smul.u32 4, %s24
      %v387 = vld [vmem:[%s348] sm:$0xff]
      %v388 = vld [vmem:[%s348 + $0x8] sm:$0xff]
      %v389 = vld [vmem:[%s348 + $0x10] sm:$0xf]
      %v390 = vld [vmem:[%s348 + $0x14] sm:$0xff]
      %v391 = vld [vmem:[%s348 + $0x1c] sm:$0xff]
      %v392 = vld [vmem:[%s348 + $0x24] sm:$0xf]
      %v393 = vld [vmem:[%s348 + $0x28] sm:$0xff]
      %v394 = vld [vmem:[%s348 + $0x30] sm:$0xff]
      %v395 = vld [vmem:[%s348 + $0x38] sm:$0xf]
      %v396 = vld [vmem:[%s348 + $0x3c] sm:$0xff]
      %v397 = vld [vmem:[%s348 + $0x44] sm:$0xff]
      %v398 = vld [vmem:[%s348 + $0x4c] sm:$0xf]
      %v399 = vld [vmem:[%s353] sm:$0xf]
      %v400 = vld [vmem:[%s353 + $0x4] sm:$0xf]
      %v401 = vld [vmem:[%s353 + $0x8] sm:$0xf]
      %v402 = vld [vmem:[%s353 + $0xc] sm:$0xf]
      %v403 = vld [vmem:[%s353 + $0x10] sm:$0xf]
      %v404 = vld [vmem:[%s353 + $0x14] sm:$0xf]
      %v405 = vld [vmem:[%s353 + $0x18] sm:$0xf]
      %v406 = vld [vmem:[%s353 + $0x1c] sm:$0xf]
      %v407 = vld [vmem:[%s353 + $0x20] sm:$0xf]
      %v408 = vld [vmem:[%s353 + $0x24] sm:$0xf]
      %v409 = vld [vmem:[%s353 + $0x28] sm:$0xf]
      %v410 = vld [vmem:[%s353 + $0x2c] sm:$0xf]
      %v411 = vld [vmem:[%s353 + $0x30] sm:$0xf]
      %v412 = vld [vmem:[%s353 + $0x34] sm:$0xf]
      %v413 = vld [vmem:[%s353 + $0x38] sm:$0xf]
      %v414 = vld [vmem:[%s353 + $0x3c] sm:$0xf]
      %v415 = vld [vmem:[%s353 + $0x40] sm:$0xf]
      %v416 = vld [vmem:[%s353 + $0x44] sm:$0xf]
      %v417 = vld [vmem:[%s353 + $0x48] sm:$0xf]
      %v418 = vld [vmem:[%s353 + $0x4c] sm:$0xf]
      %v419 = vld [vmem:[%s353 + $0x50] sm:$0xf]
      %v420 = vld [vmem:[%s353 + $0x54] sm:$0xf]
      %v421 = vld [vmem:[%s353 + $0x58] sm:$0xf]
      %v422 = vld [vmem:[%s353 + $0x5c] sm:$0xf]
      %v423 = vld [vmem:[%s353 + $0x60] sm:$0xf]
      %v424 = vld [vmem:[%s353 + $0x64] sm:$0xf]
      %v425 = vld [vmem:[%s353 + $0x68] sm:$0xf]
      %v426 = vld [vmem:[%s353 + $0x6c] sm:$0xf]
      %v427 = vld [vmem:[%s353 + $0x70] sm:$0xf]
      %v428 = vld [vmem:[%s353 + $0x74] sm:$0xf]
      %v429 = vld [vmem:[%s353 + $0x78] sm:$0xf]
      %v430 = vld [vmem:[%s353 + $0x7c] sm:$0xf]
      %v431 = vld [vmem:[%s353 + $0x80] sm:$0xf]
      %v432 = vld [vmem:[%s353 + $0x84] sm:$0xf]
      %v433 = vld [vmem:[%s353 + $0x88] sm:$0xf]
      %v434 = vld [vmem:[%s353 + $0x8c] sm:$0xf]
      %v435 = vld [vmem:[%s353 + $0x90] sm:$0xf]
      %v436 = vld [vmem:[%s353 + $0x94] sm:$0xf]
      %v437 = vld [vmem:[%s353 + $0x98] sm:$0xf]
      %v438 = vld [vmem:[%s353 + $0x9c] sm:$0xf]
      %v439 = vld [vmem:[%s353 + $0xa0] sm:$0xf]
      %v440 = vld [vmem:[%s353 + $0xa4] sm:$0xf]
      %v441 = vld [vmem:[%s353 + $0xa8] sm:$0xf]
      %v442 = vld [vmem:[%s353 + $0xac] sm:$0xf]
      %v443 = vld [vmem:[%s353 + $0xb0] sm:$0xf]
      %v444 = vld [vmem:[%s353 + $0xb4] sm:$0xf]
      %v445 = vld [vmem:[%s353 + $0xb8] sm:$0xf]
      %v446 = vld [vmem:[%s353 + $0xbc] sm:$0xf]
      %v447 = vld [vmem:[%s353 + $0xc0] sm:$0xf]
      %v448 = vld [vmem:[%s353 + $0xc4] sm:$0xf]
      %v449 = vld [vmem:[%s353 + $0xc8] sm:$0xf]
      %v450 = vld [vmem:[%s353 + $0xcc] sm:$0xf]
      %v451 = vld [vmem:[%s353 + $0xd0] sm:$0xf]
      %v452 = vld [vmem:[%s353 + $0xd4] sm:$0xf]
      %v453 = vld [vmem:[%s353 + $0xd8] sm:$0xf]
      %v454 = vld [vmem:[%s353 + $0xdc] sm:$0xf]
      %v455 = vld [vmem:[%s353 + $0xe0] sm:$0xf]
      %v456 = vld [vmem:[%s353 + $0xe4] sm:$0xf]
      %v457 = vld [vmem:[%s353 + $0xe8] sm:$0xf]
      %v458 = vld [vmem:[%s353 + $0xec] sm:$0xf]
      %v459 = vld [vmem:[%s353 + $0xf0] sm:$0xf]
      %v460 = vld [vmem:[%s353 + $0xf4] sm:$0xf]
      %v461 = vld [vmem:[%s353 + $0xf8] sm:$0xf]
      %v462 = vld [vmem:[%s353 + $0xfc] sm:$0xf]
      %v463 = vld [vmem:[%s353 + $0x100] sm:$0xf]
      %v464 = vld [vmem:[%s353 + $0x104] sm:$0xf]
      %v465 = vld [vmem:[%s353 + $0x108] sm:$0xf]
      %v466 = vld [vmem:[%s353 + $0x10c] sm:$0xf]
      %v467 = vld [vmem:[%s353 + $0x110] sm:$0xf]
      %v468 = vld [vmem:[%s353 + $0x114] sm:$0xf]
      %v469 = vld [vmem:[%s353 + $0x118] sm:$0xf]
      %v470 = vld [vmem:[%s353 + $0x11c] sm:$0xf]
      %v471 = vld [vmem:[%s356] sm:$0x1]
      %v473 = vlaneseq
      %v474 = vshrl.u32 %v473, 7
      %v475 = vsub.s32 0, %v474
      %v476 = vrot.slane %v471, %v475
      %v490 = vunpack.c.l.b16 %v387
      %v491 = vunpack.c.h.b16 %v387
      %v492 = vunpack.c.l.b16 %v388
      %v493 = vunpack.c.h.b16 %v388
      %v494 = vunpack.c.l.b16 %v389
      %v495 = vunpack.c.l.b16 %v390
      %v496 = vunpack.c.h.b16 %v390
      %v497 = vunpack.c.l.b16 %v391
      %v498 = vunpack.c.h.b16 %v391
      %v499 = vunpack.c.l.b16 %v392
      %v500 = vunpack.c.l.b16 %v393
      %v501 = vunpack.c.h.b16 %v393
      %v502 = vunpack.c.l.b16 %v394
      %v503 = vunpack.c.h.b16 %v394
      %v504 = vunpack.c.l.b16 %v395
      %v505 = vunpack.c.l.b16 %v396
      %v506 = vunpack.c.h.b16 %v396
      %v507 = vunpack.c.l.b16 %v397
      %v508 = vunpack.c.h.b16 %v397
      %v509 = vunpack.c.l.b16 %v398
      %v510 = vpack.c.b16 %v495, %v490
      %v511 = vpack.c.b16 %v496, %v491
      %v512 = vpack.c.b16 %v497, %v492
      %v513 = vpack.c.b16 %v498, %v493
      %v514 = vpack.c.b16 %v499, %v494
      %v515 = vpack.c.b16 %v505, %v500
      %v516 = vpack.c.b16 %v506, %v501
      %v517 = vpack.c.b16 %v507, %v502
      %v518 = vpack.c.b16 %v508, %v503
      %v519 = vpack.c.b16 %v509, %v504
      %v600 = vunpack.c.l.b16 %v399
      %v601 = vunpack.c.l.b16 %v400
      %v602 = vunpack.c.l.b16 %v401
      %v603 = vunpack.c.l.b16 %v402
      %v604 = vunpack.c.l.b16 %v403
      %v605 = vunpack.c.l.b16 %v404
      %v606 = vunpack.c.l.b16 %v405
      %v607 = vunpack.c.l.b16 %v406
      %v608 = vunpack.c.l.b16 %v407
      %v609 = vunpack.c.l.b16 %v408
      %v610 = vunpack.c.l.b16 %v409
      %v611 = vunpack.c.l.b16 %v410
      %v612 = vunpack.c.l.b16 %v411
      %v613 = vunpack.c.l.b16 %v412
      %v614 = vunpack.c.l.b16 %v413
      %v615 = vunpack.c.l.b16 %v414
      %v616 = vunpack.c.l.b16 %v415
      %v617 = vunpack.c.l.b16 %v416
      %v618 = vunpack.c.l.b16 %v417
      %v619 = vunpack.c.l.b16 %v418
      %v620 = vunpack.c.l.b16 %v419
      %v621 = vunpack.c.l.b16 %v420
      %v622 = vunpack.c.l.b16 %v421
      %v623 = vunpack.c.l.b16 %v422
      %v624 = vunpack.c.l.b16 %v423
      %v625 = vunpack.c.l.b16 %v424
      %v626 = vunpack.c.l.b16 %v425
      %v627 = vunpack.c.l.b16 %v426
      %v628 = vunpack.c.l.b16 %v427
      %v629 = vunpack.c.l.b16 %v428
      %v630 = vunpack.c.l.b16 %v429
      %v631 = vunpack.c.l.b16 %v430
      %v632 = vunpack.c.l.b16 %v431
      %v633 = vunpack.c.l.b16 %v432
      %v634 = vunpack.c.l.b16 %v433
      %v635 = vunpack.c.l.b16 %v434
      %v636 = vunpack.c.l.b16 %v435
      %v637 = vunpack.c.l.b16 %v436
      %v638 = vunpack.c.l.b16 %v437
      %v639 = vunpack.c.l.b16 %v438
      %v640 = vunpack.c.l.b16 %v439
      %v641 = vunpack.c.l.b16 %v440
      %v642 = vunpack.c.l.b16 %v441
      %v643 = vunpack.c.l.b16 %v442
      %v644 = vunpack.c.l.b16 %v443
      %v645 = vunpack.c.l.b16 %v444
      %v646 = vunpack.c.l.b16 %v445
      %v647 = vunpack.c.l.b16 %v446
      %v648 = vunpack.c.l.b16 %v447
      %v649 = vunpack.c.l.b16 %v448
      %v650 = vunpack.c.l.b16 %v449
      %v651 = vunpack.c.l.b16 %v450
      %v652 = vunpack.c.l.b16 %v451
      %v653 = vunpack.c.l.b16 %v452
      %v654 = vunpack.c.l.b16 %v453
      %v655 = vunpack.c.l.b16 %v454
      %v656 = vunpack.c.l.b16 %v455
      %v657 = vunpack.c.l.b16 %v456
      %v658 = vunpack.c.l.b16 %v457
      %v659 = vunpack.c.l.b16 %v458
      %v660 = vunpack.c.l.b16 %v459
      %v661 = vunpack.c.l.b16 %v460
      %v662 = vunpack.c.l.b16 %v461
      %v663 = vunpack.c.l.b16 %v462
      %v664 = vunpack.c.l.b16 %v463
      %v665 = vunpack.c.l.b16 %v464
      %v666 = vunpack.c.l.b16 %v465
      %v667 = vunpack.c.l.b16 %v466
      %v668 = vunpack.c.l.b16 %v467
      %v669 = vunpack.c.l.b16 %v468
      %v670 = vunpack.c.l.b16 %v469
      %v671 = vunpack.c.l.b16 %v470
      %v672 = vpack.c.b16 %v601, %v600
      %v673 = vpack.c.b16 %v603, %v602
      %v674 = vpack.c.b16 %v605, %v604
      %v675 = vpack.c.b16 %v607, %v606
      %v676 = vpack.c.b16 %v609, %v608
      %v677 = vpack.c.b16 %v611, %v610
      %v678 = vpack.c.b16 %v613, %v612
      %v679 = vpack.c.b16 %v615, %v614
      %v680 = vpack.c.b16 %v617, %v616
      %v681 = vpack.c.b16 %v619, %v618
      %v682 = vpack.c.b16 %v621, %v620
      %v683 = vpack.c.b16 %v623, %v622
      %v684 = vpack.c.b16 %v625, %v624
      %v685 = vpack.c.b16 %v627, %v626
      %v686 = vpack.c.b16 %v629, %v628
      %v687 = vpack.c.b16 %v631, %v630
      %v688 = vpack.c.b16 %v633, %v632
      %v689 = vpack.c.b16 %v635, %v634
      %v690 = vpack.c.b16 %v637, %v636
      %v691 = vpack.c.b16 %v639, %v638
      %v692 = vpack.c.b16 %v641, %v640
      %v693 = vpack.c.b16 %v643, %v642
      %v694 = vpack.c.b16 %v645, %v644
      %v695 = vpack.c.b16 %v647, %v646
      %v696 = vpack.c.b16 %v649, %v648
      %v697 = vpack.c.b16 %v651, %v650
      %v698 = vpack.c.b16 %v653, %v652
      %v699 = vpack.c.b16 %v655, %v654
      %v700 = vpack.c.b16 %v657, %v656
      %v701 = vpack.c.b16 %v659, %v658
      %v702 = vpack.c.b16 %v661, %v660
      %v703 = vpack.c.b16 %v663, %v662
      %v704 = vpack.c.b16 %v665, %v664
      %v705 = vpack.c.b16 %v667, %v666
      %v706 = vpack.c.b16 %v669, %v668
      %v707 = vpack.c.b16 %v671, %v670
      %vm744 = vcmask 523264
      %v746 = vsel %vm744, %v514, 0
      %v749 = vsel %vm744, %v519, 0
      %751 = vmatprep.subr.bf16.mxu0 0
      %752 = vmatpush1.bf16.msra.mxu0 %v672
      %753 = vmatprep.subr.bf16.mxu0 0
      %754 = vmatpush1.bf16.msra.mxu0 %v673
      %755 = vmatprep.subr.bf16.mxu0 0
      %756 = vmatpush1.bf16.msra.mxu0 %v674
      %757 = vmatprep.subr.bf16.mxu0 0
      %758 = vmatpush1.bf16.msra.mxu0 %v675
      %759 = vmatprep.subr.bf16.mxu0 0
      %760 = vmatpush1.bf16.msra.mxu0 %v676
      %761 = vmatprep.subr.bf16.mxu0 0
      %762 = vmatpush1.bf16.msra.mxu0 %v677
      %763 = vmatprep.subr.bf16.mxu0 0
      %764 = vmatpush1.bf16.msra.mxu0 %v678
      %765 = vmatprep.subr.bf16.mxu0 0
      %766 = vmatpush1.bf16.msra.mxu0 %v679
      %767 = vmatprep.subr.bf16.mxu0 0
      %768 = vmatpush1.bf16.msra.mxu0 %v680
      %769 = vmatprep.subr.bf16.mxu0 0
      %770 = vmatpush1.bf16.msra.mxu0 %v681
      %771 = vmatprep.subr.bf16.mxu0 0
      %772 = vmatpush1.bf16.msra.mxu0 %v682
      %773 = vmatprep.subr.bf16.mxu0 0
      %774 = vmatpush1.bf16.msra.mxu0 %v683
      %775 = vmatprep.subr.bf16.mxu0 0
      %776 = vmatpush1.bf16.msra.mxu0 %v684
      %777 = vmatprep.subr.bf16.mxu0 0
      %778 = vmatpush1.bf16.msra.mxu0 %v685
      %779 = vmatprep.subr.bf16.mxu0 0
      %780 = vmatpush1.bf16.msra.mxu0 %v686
      %781 = vmatprep.subr.bf16.mxu0 0
      %782 = vmatpush1.bf16.msra.mxu0 %v687
      %783 = vmatprep.mubr.bf16.mxu0 %v511
      %784 = vmatmul.mubr.bf16.gmra.mrb[0].mxu0 %v510
      %v785 = vpop.f32.mrb[0].mxu0
      %v786 = vadd.f32 %v476, %v785
      %v787 = vpop.f32.mrb[0].mxu0
      %v788 = vpop.f32.mrb[0].mxu0
      %v789 = vadd.f32 %v476, %v788
      %v790 = vpop.f32.mrb[0].mxu0
      %791 = vmatprep.mubr.bf16.mxu0 %v516
      %792 = vmatmul.mubr.bf16.gmra.mrb[0].mxu0 %v515
      %v793 = vpop.f32.mrb[0].mxu0
      %v794 = vadd.f32 %v476, %v793
      %v795 = vpop.f32.mrb[0].mxu0
      %v796 = vpop.f32.mrb[0].mxu0
      %v797 = vadd.f32 %v476, %v796
      %v798 = vpop.f32.mrb[0].mxu0
      %799 = vdwg.mxu0
      %800 = vmatprep.subr.bf16.mxu0 0
      %801 = vmatpush1.bf16.msra.mxu0 %v688
      %802 = vmatprep.subr.bf16.mxu0 0
      %803 = vmatpush1.bf16.msra.mxu0 %v689
      %804 = vmatprep.subr.bf16.mxu0 0
      %805 = vmatpush1.bf16.msra.mxu0 %v690
      %806 = vmatprep.subr.bf16.mxu0 0
      %807 = vmatpush1.bf16.msra.mxu0 %v691
      %808 = vmatprep.subr.bf16.mxu0 0
      %809 = vmatpush1.bf16.msra.mxu0 %v692
      %810 = vmatprep.subr.bf16.mxu0 0
      %811 = vmatpush1.bf16.msra.mxu0 %v693
      %812 = vmatprep.subr.bf16.mxu0 0
      %813 = vmatpush1.bf16.msra.mxu0 %v694
      %814 = vmatprep.subr.bf16.mxu0 0
      %815 = vmatpush1.bf16.msra.mxu0 %v695
      %816 = vmatprep.subr.bf16.mxu0 0
      %817 = vmatpush1.bf16.msra.mxu0 %v696
      %818 = vmatprep.subr.bf16.mxu0 0
      %819 = vmatpush1.bf16.msra.mxu0 %v697
      %820 = vmatprep.subr.bf16.mxu0 0
      %821 = vmatpush1.bf16.msra.mxu0 %v698
      %822 = vmatprep.subr.bf16.mxu0 0
      %823 = vmatpush1.bf16.msra.mxu0 %v699
      %824 = vmatprep.subr.bf16.mxu0 0
      %825 = vmatpush1.bf16.msra.mxu0 %v700
      %826 = vmatprep.subr.bf16.mxu0 0
      %827 = vmatpush1.bf16.msra.mxu0 %v701
      %828 = vmatprep.subr.bf16.mxu0 0
      %829 = vmatpush1.bf16.msra.mxu0 %v702
      %830 = vmatprep.subr.bf16.mxu0 0
      %831 = vmatpush1.bf16.msra.mxu0 %v703
      %832 = vmatprep.mubr.bf16.mxu0 %v513
      %833 = vmatmul.mubr.bf16.gmra.mrb[0].mxu0 %v512
      %v834 = vpop.f32.mrb[0].mxu0
      %v835 = vadd.f32 %v786, %v834
      %v836 = vpop.f32.mrb[0].mxu0
      %v837 = vpop.f32.mrb[0].mxu0
      %v838 = vadd.f32 %v789, %v837
      %v839 = vpop.f32.mrb[0].mxu0
      %840 = vmatprep.mubr.bf16.mxu0 %v518
      %841 = vmatmul.mubr.bf16.gmra.mrb[0].mxu0 %v517
      %v842 = vpop.f32.mrb[0].mxu0
      %v843 = vadd.f32 %v794, %v842
      %v844 = vpop.f32.mrb[0].mxu0
      %v845 = vpop.f32.mrb[0].mxu0
      %v846 = vadd.f32 %v797, %v845
      %v847 = vpop.f32.mrb[0].mxu0
      %848 = vdwg.mxu0
      %849 = vmatprep.subr.bf16.mxu0 0
      %850 = vmatpush1.bf16.msra.mxu0 %v704
      %851 = vmatprep.subr.bf16.mxu0 0
      %852 = vmatpush1.bf16.msra.mxu0 %v705
      %853 = vmatprep.subr.bf16.mxu0 0
      %854 = vmatpush1.bf16.msra.mxu0 %v706
      %855 = vmatprep.subr.bf16.mxu0 0
      %856 = vmatpush1.bf16.msra.mxu0 %v707
      %857 = vmatprep.subr.bf16.mxu0 0
      %858 = vmatpush1.bf16.msra.mxu0 0
      %859 = vmatprep.subr.bf16.mxu0 0
      %860 = vmatpush1.bf16.msra.mxu0 0
      %861 = vmatprep.subr.bf16.mxu0 0
      %862 = vmatpush1.bf16.msra.mxu0 0
      %863 = vmatprep.subr.bf16.mxu0 0
      %864 = vmatpush1.bf16.msra.mxu0 0
      %865 = vmatprep.subr.bf16.mxu0 0
      %866 = vmatpush1.bf16.msra.mxu0 0
      %867 = vmatprep.subr.bf16.mxu0 0
      %868 = vmatpush1.bf16.msra.mxu0 0
      %869 = vmatprep.subr.bf16.mxu0 0
      %870 = vmatpush1.bf16.msra.mxu0 0
      %871 = vmatprep.subr.bf16.mxu0 0
      %872 = vmatpush1.bf16.msra.mxu0 0
      %873 = vmatprep.subr.bf16.mxu0 0
      %874 = vmatpush1.bf16.msra.mxu0 0
      %875 = vmatprep.subr.bf16.mxu0 0
      %876 = vmatpush1.bf16.msra.mxu0 0
      %877 = vmatprep.subr.bf16.mxu0 0
      %878 = vmatpush1.bf16.msra.mxu0 0
      %879 = vmatprep.subr.bf16.mxu0 0
      %880 = vmatpush1.bf16.msra.mxu0 0
      %881 = vmatprep.mubr.bf16.mxu0 0
      %882 = vmatmul.mubr.bf16.gmra.mrb[0].mxu0 %v746
      %v883 = vpop.f32.mrb[0].mxu0
      %v884 = vadd.f32 %v835, %v883
      %v885 = vpop.f32.mrb[0].mxu0
      %v886 = vpop.f32.mrb[0].mxu0
      %v887 = vadd.f32 %v838, %v886
      %v888 = vpop.f32.mrb[0].mxu0
      %889 = vmatprep.mubr.bf16.mxu0 0
      %890 = vmatmul.mubr.bf16.gmra.mrb[0].mxu0 %v749
      %v891 = vpop.f32.mrb[0].mxu0
      %v892 = vadd.f32 %v843, %v891
      %v893 = vpop.f32.mrb[0].mxu0
      %v894 = vpop.f32.mrb[0].mxu0
      %v895 = vadd.f32 %v846, %v894
      %v896 = vpop.f32.mrb[0].mxu0
      %897 = vdwg.mxu0
      %v898 = vxor.u32 %v884, 2147483648
      %v899 = vxor.u32 %v887, 2147483648
      %v900 = vxor.u32 %v892, 2147483648
      %v901 = vxor.u32 %v895, 2147483648
      %v902 = vmul.f32 %v898, 1.442695
      %v903 = vpow.pop %v902
      %v904 = vmul.f32 %v899, 1.442695
      %v905 = vpow.pop %v904
      %v906 = vmul.f32 %v900, 1.442695
      %v907 = vpow.pop %v906
      %v908 = vmul.f32 %v901, 1.442695
      %v909 = vpow.pop %v908
      %v910 = vadd.f32 %v903, 1.0
      %v911 = vadd.f32 %v905, 1.0
      %v912 = vadd.f32 %v907, 1.0
      %v913 = vadd.f32 %v909, 1.0
      %v914 = vrcp.pop %v910
      %v915 = vmul.f32 1.0, %v914
      %v916 = vrcp.pop %v911
      %v917 = vmul.f32 1.0, %v916
      %v918 = vrcp.pop %v912
      %v919 = vmul.f32 1.0, %v918
      %v920 = vrcp.pop %v913
      %v921 = vmul.f32 1.0, %v920
      %v922 = vmul.f32 %v884, %v915
      %v923 = vmul.f32 %v887, %v917
      %v924 = vmul.f32 %v892, %v919
      %v925 = vmul.f32 %v895, %v921
      %v926 = vpack.c.bf16 %v923, %v922
      %v927 = vpack.c.bf16 %v925, %v924
      %v930 = vunpack.c.l.b16 %v926
      %v931 = vunpack.c.h.b16 %v926
      %v932 = vunpack.c.l.b16 %v927
      %v933 = vunpack.c.h.b16 %v927
      %v934 = vpack.c.b16 %v930, %v930
      %v935 = vpack.c.b16 %v931, %v931
      %v936 = vpack.c.b16 %v932, %v932
      %v937 = vpack.c.b16 %v933, %v933
      %942 = vst [vmem:[%s374] sm:$0xf] %v934
      %943 = vst [vmem:[%s374 + $0x4] sm:$0xf] %v935
      %944 = vst [vmem:[%s374 + $0x8] sm:$0xf] %v936
      %945 = vst [vmem:[%s374 + $0xc] sm:$0xf] %v937
      %v946 = vld [vmem:[%s361] sm:$0xf]
      %v947 = vld [vmem:[%s361 + $0x4] sm:$0xf]
      %v948 = vld [vmem:[%s361 + $0x8] sm:$0xf]
      %v949 = vld [vmem:[%s361 + $0xc] sm:$0xf]
      %v950 = vld [vmem:[%s361 + $0x10] sm:$0xf]
      %v951 = vld [vmem:[%s361 + $0x14] sm:$0xf]
      %v952 = vld [vmem:[%s361 + $0x18] sm:$0xf]
      %v953 = vld [vmem:[%s361 + $0x1c] sm:$0xf]
      %v954 = vld [vmem:[%s361 + $0x20] sm:$0xf]
      %v955 = vld [vmem:[%s361 + $0x24] sm:$0xf]
      %v956 = vld [vmem:[%s361 + $0x28] sm:$0xf]
      %v957 = vld [vmem:[%s361 + $0x2c] sm:$0xf]
      %v958 = vld [vmem:[%s361 + $0x30] sm:$0xf]
      %v959 = vld [vmem:[%s361 + $0x34] sm:$0xf]
      %v960 = vld [vmem:[%s361 + $0x38] sm:$0xf]
      %v961 = vld [vmem:[%s361 + $0x3c] sm:$0xf]
      %v978 = vunpack.c.l.b16 %v946
      %v979 = vunpack.c.l.b16 %v947
      %v980 = vunpack.c.l.b16 %v948
      %v981 = vunpack.c.l.b16 %v949
      %v982 = vunpack.c.l.b16 %v950
      %v983 = vunpack.c.l.b16 %v951
      %v984 = vunpack.c.l.b16 %v952
      %v985 = vunpack.c.l.b16 %v953
      %v986 = vunpack.c.l.b16 %v954
      %v987 = vunpack.c.l.b16 %v955
      %v988 = vunpack.c.l.b16 %v956
      %v989 = vunpack.c.l.b16 %v957
      %v990 = vunpack.c.l.b16 %v958
      %v991 = vunpack.c.l.b16 %v959
      %v992 = vunpack.c.l.b16 %v960
      %v993 = vunpack.c.l.b16 %v961
      %v994 = vpack.c.b16 %v979, %v978
      %v995 = vpack.c.b16 %v981, %v980
      %v996 = vpack.c.b16 %v983, %v982
      %v997 = vpack.c.b16 %v985, %v984
      %v998 = vpack.c.b16 %v987, %v986
      %v999 = vpack.c.b16 %v989, %v988
      %v1000 = vpack.c.b16 %v991, %v990
      %v1001 = vpack.c.b16 %v993, %v992
      %1010 = vmatprep.subr.bf16.mxu0 0
      %1011 = vmatpush1.bf16.msra.mxu0 %v994
      %1012 = vmatprep.subr.bf16.mxu0 0
      %1013 = vmatpush1.bf16.msra.mxu0 %v995
      %1014 = vmatprep.subr.bf16.mxu0 0
      %1015 = vmatpush1.bf16.msra.mxu0 %v996
      %1016 = vmatprep.subr.bf16.mxu0 0
      %1017 = vmatpush1.bf16.msra.mxu0 %v997
      %1018 = vmatprep.subr.bf16.mxu0 0
      %1019 = vmatpush1.bf16.msra.mxu0 %v998
      %1020 = vmatprep.subr.bf16.mxu0 0
      %1021 = vmatpush1.bf16.msra.mxu0 %v999
      %1022 = vmatprep.subr.bf16.mxu0 0
      %1023 = vmatpush1.bf16.msra.mxu0 %v1000
      %1024 = vmatprep.subr.bf16.mxu0 0
      %1025 = vmatpush1.bf16.msra.mxu0 %v1001
      %1026 = vmatprep.subr.bf16.mxu0 0
      %1027 = vmatpush1.bf16.msra.mxu0 0
      %1028 = vmatprep.subr.bf16.mxu0 0
      %1029 = vmatpush1.bf16.msra.mxu0 0
      %1030 = vmatprep.subr.bf16.mxu0 0
      %1031 = vmatpush1.bf16.msra.mxu0 0
      %1032 = vmatprep.subr.bf16.mxu0 0
      %1033 = vmatpush1.bf16.msra.mxu0 0
      %1034 = vmatprep.subr.bf16.mxu0 0
      %1035 = vmatpush1.bf16.msra.mxu0 0
      %1036 = vmatprep.subr.bf16.mxu0 0
      %1037 = vmatpush1.bf16.msra.mxu0 0
      %1038 = vmatprep.subr.bf16.mxu0 0
      %1039 = vmatpush1.bf16.msra.mxu0 0
      %1040 = vmatprep.subr.bf16.mxu0 0
      %1041 = vmatpush1.bf16.msra.mxu0 0
      %1042 = vmatprep.mubr.bf16.mxu0 0
      %1043 = vmatmul.mubr.bf16.gmra.mrb[0].mxu0 %v926
      %v1044 = vpop.f32.mrb[0].mxu0
      %v1045 = vadd.f32 0.0, %v1044
      %v1046 = vpop.f32.mrb[0].mxu0
      %v1047 = vpop.f32.mrb[0].mxu0
      %v1048 = vadd.f32 0.0, %v1047
      %v1049 = vpop.f32.mrb[0].mxu0
      %1050 = vmatprep.mubr.bf16.mxu0 0
      %1051 = vmatmul.mubr.bf16.gmra.mrb[0].mxu0 %v927
      %v1052 = vpop.f32.mrb[0].mxu0
      %v1053 = vadd.f32 0.0, %v1052
      %v1054 = vpop.f32.mrb[0].mxu0
      %v1055 = vpop.f32.mrb[0].mxu0
      %v1056 = vadd.f32 0.0, %v1055
      %v1057 = vpop.f32.mrb[0].mxu0
      %1058 = vdwg.mxu0
      %p1059 = scmp.eq.s32.totalorder %s25, 0
      // Predicated region
      $region41: #{_lambda_.5} parent=39 // pred_check
        %p1060 = pneg %p1059
      $region42: #{_lambda_.5} parent=39 // pred_check_branch
        %1062 = sbr.rel (%p1060) target = $region44
      $region43: #{_lambda_.5} parent=39 // pred_region
        %v1063 = vld [vmem:[%s4] sm:$0x1]
        %v1065 = vlaneseq
        %v1066 = vshrl.u32 %v1065, 7
        %v1067 = vsub.s32 0, %v1066
        %v1068 = vrot.slane %v1063, %v1067
        %v1070 = vadd.f32 %v1068, %v1045
        %v1071 = vadd.f32 %v1068, %v1048
        %v1072 = vadd.f32 %v1068, %v1053
        %v1073 = vadd.f32 %v1068, %v1056
        %1074 = vst [vmem:[%s384] sm:$0xff] %v1070
        %1075 = vst [vmem:[%s384 + $0x8] sm:$0xff] %v1071
        %1076 = vst [vmem:[%s384 + $0x10] sm:$0xff] %v1072
        %1077 = vst [vmem:[%s384 + $0x18] sm:$0xff] %v1073
      $region44: #{_lambda_.5} parent=39 // pred_fallthru
        _
      %p1078 = scmp.ne.s32.totalorder %s25, 0
      // Predicated region
      $region45: #{_lambda_.5} parent=39 // pred_check
        %p1079 = pneg %p1078
      $region46: #{_lambda_.5} parent=39 // pred_check_branch
        %1081 = sbr.rel (%p1079) target = $region48
      $region47: #{_lambda_.5} parent=39 // pred_region
        %v1082 = vld [vmem:[%s384] sm:$0xff]
        %v1083 = vld [vmem:[%s384 + $0x8] sm:$0xff]
        %v1084 = vld [vmem:[%s384 + $0x10] sm:$0xff]
        %v1085 = vld [vmem:[%s384 + $0x18] sm:$0xff]
        %v1086 = vadd.f32 %v1082, %v1045
        %v1087 = vadd.f32 %v1083, %v1048
        %v1088 = vadd.f32 %v1084, %v1053
        %v1089 = vadd.f32 %v1085, %v1056
        %1090 = vst [vmem:[%s384] sm:$0xff] %v1086
        %1091 = vst [vmem:[%s384 + $0x8] sm:$0xff] %v1087
        %1092 = vst [vmem:[%s384 + $0x10] sm:$0xff] %v1088
        %1093 = vst [vmem:[%s384 + $0x18] sm:$0xff] %v1089
      $region48: #{_lambda_.5} parent=39 // pred_fallthru
        _
      %s1094 = smul.u32 4, %s24
      %p1095 = scmp.lt.s32.totalorder %s23, 1
      %s1096 = scalar_select %p1095, %s23, 1
      %p1097 = scmp.lt.s32.totalorder %s1094, 3
      %s1098 = scalar_select %p1097, %s1094, 3
      %p1099 = scmp.lt.s32.totalorder %s25, 0
      %s1100 = scalar_select %p1099, %s25, 0
      %s1101 = sadd.s32 %s1100, %s1098
      %s1102 = smul.addr %s1096, 4
      %s1103 = sadd.s32 %s1101, %s1102
      %s1104 = smul.addr %s1103, 4
      %s1105 = scalar_lea.vmem %s5, %s1104
      %s1106 = smul.u32 4, %s24
      %p1107 = scmp.lt.s32.totalorder %s23, 1
      %s1108 = scalar_select %p1107, %s23, 1
      %p1109 = scmp.lt.s32.totalorder %s1106, 3
      %s1110 = scalar_select %p1109, %s1106, 3
      %s1111 = smul.addr %s1108, 4
      %s1112 = sadd.s32 %s1110, %s1111
      %s1113 = smul.addr %s1112, 8
      %s1114 = scalar_lea.vmem %s6, %s1113
      // Predicated region
      $region49: #{_lambda_.5} parent=39 // pred_check
        %p1115 = pneg %p186
      $region50: #{_lambda_.5} parent=39 // pred_check_branch
        %1117 = sbr.rel (%p1115) target = $region52
      $region51: #{_lambda_.5} parent=39 // pred_region
        %s1118 = smul.u32 4, %s24
      $region52: #{_lambda_.5} parent=39 // pred_fallthru
        _
      // Predicated region
      $region53: #{_lambda_.5} parent=39 // pred_check
        %p1119 = pneg %p214
      $region54: #{_lambda_.5} parent=39 // pred_check_branch
        %1121 = sbr.rel (%p1119) target = $region56
      $region55: #{_lambda_.5} parent=39 // pred_region
        %s1122 = smul.u32 4, %s24
      $region56: #{_lambda_.5} parent=39 // pred_fallthru
        _
    $region40: #{_lambda_.5} parent=5 // pred_fallthru
      _
    %p1123 = scmp.le.s32.totalorder 2, %s13
    // Predicated region
    $region57: #{_lambda_.5} parent=5 // pred_check
      %p1124 = pneg %p1123
    $region58: #{_lambda_.5} parent=5 // pred_check_branch
      %1126 = sbr.rel (%p1124) target = $region60
    $region59: #{_lambda_.5} parent=5 // pred_region
      %s1127 = ssub.s32 %s13, 2
      // Predicated region
      $region61: #{_lambda_.5} parent=59 // pred_check
        %p1128 = pneg %p192
      $region62: #{_lambda_.5} parent=59 // pred_check_branch
        %1130 = sbr.rel (%p1128) target = $region64
      $region63: #{_lambda_.5} parent=59 // pred_region
        %s1131 = smul.u32 4, %s27
        %p1132 = scmp.lt.s32.totalorder %s26, 1
        %s1133 = scalar_select %p1132, %s26, 1
        %p1134 = scmp.lt.s32.totalorder %s1131, 3
        %s1135 = scalar_select %p1134, %s1131, 3
        %p1136 = scmp.lt.s32.totalorder %s28, 0
        %s1137 = scalar_select %p1136, %s28, 0
        %s1138 = sadd.s32 %s1137, %s1135
        %s1139 = smul.addr %s1133, 4
        %s1140 = sadd.s32 %s1138, %s1139
        %s1141 = smul.addr %s1140, 4
        %s1142 = scalar_lea.vmem %s5, %s1141
      $region64: #{_lambda_.5} parent=59 // pred_fallthru
        _
      // Predicated region
      $region65: #{_lambda_.5} parent=59 // pred_check
        %p1143 = pneg %p220
      $region66: #{_lambda_.5} parent=59 // pred_check_branch
        %1145 = sbr.rel (%p1143) target = $region68
      $region67: #{_lambda_.5} parent=59 // pred_region
        %s1146 = smul.u32 4, %s27
        %p1147 = scmp.lt.s32.totalorder %s26, 1
        %s1148 = scalar_select %p1147, %s26, 1
        %p1149 = scmp.lt.s32.totalorder %s1146, 3
        %s1150 = scalar_select %p1149, %s1146, 3
        %s1151 = smul.addr %s1148, 4
        %s1152 = sadd.s32 %s1150, %s1151
        %s1153 = smul.addr %s1152, 8
        %s1154 = scalar_lea.vmem %s6, %s1153
      $region68: #{_lambda_.5} parent=59 // pred_fallthru
        _
    $region60: #{_lambda_.5} parent=5 // pred_fallthru
      _
  $region6: #{_lambda_.5} parent=0 // loop_footer
    %s17 = sadd.s32 1, %s13
  $region7: #{_lambda_.5} parent=0 // loop_footer_branch
    %12 = sbr.rel target = $region3
  $region8: #{_lambda_.5} parent=0 // loop_exit
    _

</llo_original>
